<compile_context>
chip_gen: v6e
topology: v6e:2x2x1
jax: 0.10.0
libtpu: 0.0.40
codegen_flags: <defaults>
</compile_context>

<pallas_src>
import functools
import math

import numpy as np
import jax
import jax.numpy as jnp
from jax import lax
from jax.experimental import pallas as pl
from jax.experimental.pallas import tpu as pltpu


_OFFSETS = tuple((dy, dx) for dy in (-1, 0, 1) for dx in (-1, 0, 1))    # tap k = (dy+1)*3+(dx+1)


# ----------------------- host-side constant builders (static sizes, cached) -----------------------
@functools.lru_cache(maxsize=None)
def tap_shifts(W):
    return tuple(dy * W + dx for dy, dx in _OFFSETS)


@functools.lru_cache(maxsize=None)
def make_tap_masks(H, W, N):
    """(9, N*H*W) f32: mask[k, n*P + y*W + x] = 1 iff tap (dy,dx) of k lies inside the image."""
    P = H * W
    m = np.zeros((9, P), np.float32)
    for k, (dy, dx) in enumerate(_OFFSETS):
        for p in range(P):
            y, x = divmod(p, W)
            if 0 <= y + dy < H and 0 <= x + dx < W:
                m[k, p] = 1.0
    return jnp.asarray(np.tile(m, (1, N)), jnp.float32)


@functools.lru_cache(maxsize=None)
def make_shift_mats(H, W, N):
    """(9, NP, NP) bf16 with (chunk @ S[k])[c, p] = chunk[c, p + shift_k] (0 if out of bounds).

    Only used for tiny stages whose lane axis (NP) is not a multiple of 128."""
    P = H * W
    NP = N * P
    m = np.zeros((9, NP, NP), np.float32)
    for k, (dy, dx) in enumerate(_OFFSETS):
        s = dy * W + dx
        for n in range(N):
            for p in range(P):
                y, x = divmod(p, W)
                if 0 <= y + dy < H and 0 <= x + dx < W:
                    m[k, n * P + p + s, n * P + p] = 1.0
    return jnp.asarray(m, jnp.bfloat16)


@functools.lru_cache(maxsize=None)
def make_pool_mat(H, W, N):
    """(N*H*W, N*H*W/4) bf16 block-diagonal 2x2 / stride-2 average pooling (applied on the right)."""
    Ho, Wo = H // 2, W // 2
    P, Po = H * W, Ho * Wo
    m = np.zeros((N * P, N * Po), np.float32)
    for n in range(N):
        for o in range(Po):
            i, j = divmod(o, Wo)
            for a in range(2):
                for b in range(2):
                    m[n * P + (2 * i + a) * W + (2 * j + b), n * Po + o] = 0.25
    return jnp.asarray(m, jnp.bfloat16)


@functools.lru_cache(maxsize=None)
def _roll_sign():
    """pltpu.roll should match jnp.roll (out[i] = x[i - shift]); probe once to be robust."""
    try:
        def kern(x_ref, o_ref):
            o_ref[...] = pltpu.roll(x_ref[...], 1, axis=1)
        x = jnp.arange(128, dtype=jnp.float32).reshape(1, 128)
        y = pl.pallas_call(kern, out_shape=jax.ShapeDtypeStruct((1, 128), jnp.float32))(x)
        return 1 if int(np.asarray(jax.block_until_ready(y))[0, 0]) == 127 else -1
    except Exception:
        return 1


def _lrelu(x):
    return jnp.where(x >= 0.0, x, 0.2 * x)


# --------------------------------- parameters (WS scale folded in) --------------------------------
def init_discriminator_params(key, in_chan, channel_factors, img_chan=3):
    """Weights stored as HWIO f32 with the WSConv scale sqrt(2 / fan_in) already folded in."""
    n_blocks = len(channel_factors) - 1
    keys = iter(jax.random.split(key, 8 * n_blocks + 32))

    def nrm(shape, std=1.0):
        return std * jax.random.normal(next(keys), shape, dtype=jnp.float32)

    def ws(cin, cout, k):
        scale = math.sqrt(2.0 / (cin * k * k))
        return {"w": nrm((k, k, cin, cout)) * scale, "b": nrm((cout,), 0.02)}

    blocks, rgbs = [], []
    for idx in range(n_blocks, 0, -1):
        cin = int(in_chan * channel_factors[idx])
        cout = int(in_chan * channel_factors[idx - 1])
        blocks.append({"conv1": ws(cin, cout, 3), "conv2": ws(cout, cout, 3)})
        rgbs.append(ws(img_chan, cin, 1))
    rgbs.append(ws(img_chan, in_chan, 1))                               # init_rgb_layer
    final = {"conv1": ws(in_chan + 1, in_chan, 3),
             "conv2": ws(in_chan, in_chan, 4),
             "conv3": ws(in_chan, 1, 1)}
    return {"blocks": blocks, "rgb": rgbs, "final": final}


def _prep_conv1x1(p):
    w = jnp.transpose(p["w"][0, 0]).astype(jnp.bfloat16)                # (Cout, Cin)
    return w, p["b"].reshape(-1, 1).astype(jnp.float32)


def _prep_conv3x3(p):
    _, _, cin, cout = p["w"].shape
    w = jnp.transpose(p["w"].reshape(9, cin, cout), (0, 2, 1)).reshape(9 * cout, cin)
    return w.astype(jnp.bfloat16), p["b"].reshape(-1, 1).astype(jnp.float32)


# ----------------------------------- fused forward (one pallas_call) ------------------------------
def discriminator_forward(params, feat, alpha, num_steps):
    """feat: (N, H, W, img_chan) NHWC with H = W = 4 * 2**num_steps. Returns (N, 1) logits."""
    N, H, W, Cimg = feat.shape
    n_blocks = len(params["blocks"])
    if not 0 <= num_steps <= n_blocks:
        raise ValueError("num_steps out of range")
    init_step = n_blocks - num_steps
    roll_sign = _roll_sign()

    # lane-dense layout: channels on sublanes, flattened batch*spatial on lanes
    img = jnp.transpose(feat, (3, 0, 1, 2)).reshape(Cimg, N * H * W).astype(jnp.bfloat16)
    alpha_arr = jnp.full((1, 1), alpha, dtype=jnp.float32)

    inputs = [alpha_arr, img]
    in_specs = [pl.BlockSpec(memory_space=pltpu.MemorySpace.SMEM),
                pl.BlockSpec(memory_space=pltpu.MemorySpace.VMEM)]

    def add(arr):
        inputs.append(arr)
        in_specs.append(pl.BlockSpec(memory_space=pltpu.MemorySpace.VMEM))
        return len(inputs) - 1

    curH, curW = H, W
    stages = []
    entry_idx = None
    rgb0_idx = None

    if num_steps == 0:
        w, b = _prep_conv1x1(params["rgb"][n_blocks])
        rgb0_idx = (add(w), add(b))
        fin_c = int(b.shape[0])
    else:
        wa, ba = _prep_conv1x1(params["rgb"][init_step])
        wb, bb = _prep_conv1x1(params["rgb"][init_step + 1])
        entry_idx = (add(wa), add(ba), add(wb), add(bb))
        for step in range(init_step, n_blocks):
            blk = params["blocks"][step]
            w1, b1 = _prep_conv3x3(blk["conv1"])
            w2, b2 = _prep_conv3x3(blk["conv2"])
            NP = N * curH * curW
            use_roll = NP % 128 == 0
            gconst = make_tap_masks(curH, curW, N) if use_roll else make_shift_mats(curH, curW, N)
            stages.append(dict(
                NP=NP, use_roll=use_roll, shifts=tap_shifts(curW),
                cout1=int(b1.shape[0]), cout2=int(b2.shape[0]),
                i_w1=add(w1), i_b1=add(b1), i_w2=add(w2), i_b2=add(b2),
                i_g=add(gconst), i_pool=add(make_pool_mat(curH, curW, N))))
            curH //= 2
            curW //= 2
        fin_c = stages[-1]["cout2"]

    assert curH == 4 and curW == 4, "Discriminator expects input resolution 4 * 2**num_steps"
    Pf = curH * curW                                                    # 16
    NPf = N * Pf
    C = fin_c
    fin = params["final"]
    w1f, b1f = _prep_conv3x3({"w": fin["conv1"]["w"][:, :, :C, :], "b": fin["conv1"]["b"]})
    w1sT = jnp.transpose(fin["conv1"]["w"][:, :, C, :].reshape(9, C)).astype(jnp.float32)   # (C, 9)
    w2b = jnp.transpose(fin["conv2"]["w"].reshape(Pf, C, C), (2, 1, 0)).astype(jnp.float32) # (C, C, Pf)
    b2f = fin["conv2"]["b"].reshape(C, 1).astype(jnp.float32)
    w3 = jnp.transpose(fin["conv3"]["w"][0, 0]).astype(jnp.float32)     # (1, C)
    b3 = fin["conv3"]["b"].reshape(1, 1).astype(jnp.float32)

    use_roll_f = NPf % 128 == 0
    fin_mask = make_tap_masks(curH, curW, N)
    fin_g = fin_mask if use_roll_f else make_shift_mats(curH, curW, N)
    fstage = dict(NP=NPf, use_roll=use_roll_f, shifts=tap_shifts(curW), i_g=add(fin_g))
    i_mask, i_w1f, i_w1sT, i_b1 = add(fin_mask), add(w1f), add(w1sT), add(b1f)
    i_w2b, i_b2, i_w3, i_b3 = add(w2b), add(b2f), add(w3), add(b3)
    i_eye = add(jnp.eye(N, dtype=jnp.float32))

    n_in = len(inputs)

    def kernel(*refs):
        out_ref = refs[n_in]

        def tap_gather(chunk, k, st):
            s = st["shifts"][k]
            if st["use_roll"]:
                rolled = chunk if s == 0 else pltpu.roll(chunk, (roll_sign * -s) % st["NP"], axis=1)
                if k == 4:                                   # centre tap is always in bounds
                    return rolled
                return refs[st["i_g"]][k:k + 1, :] * rolled
            return jnp.dot(chunk.astype(jnp.bfloat16), refs[st["i_g"]][k],
                           preferred_element_type=jnp.float32)

        def conv3x3(xin, i_w, i_b, cout, st):
            """Exact 3x3 / pad-1 conv: one wide MXU matmul + 9 rolled & masked tap adds."""
            y = jnp.dot(refs[i_w][...], xin.astype(jnp.bfloat16),
                        preferred_element_type=jnp.float32)             # (9*cout, NP)
            acc = None
            for k in range(9):
                t = tap_gather(y[k * cout:(k + 1) * cout, :], k, st)
                acc = t if acc is None else acc + t
            return _lrelu(acc + refs[i_b][...])

        img_v = refs[1][...]                                            # (Cimg, N*H*W) bf16

        if num_steps == 0:
            iw, ib = rgb0_idx
            x = _lrelu(jnp.dot(refs[iw][...], img_v, preferred_element_type=jnp.float32)
                       + refs[ib][...])
        else:
            iaw, iab, ibw, ibb = entry_idx
            cur = _lrelu(jnp.dot(refs[iaw][...], img_v, preferred_element_type=jnp.float32)
                         + refs[iab][...])
            for si, st in enumerate(stages):
                h = conv3x3(cur, st["i_w1"], st["i_b1"], st["cout1"], st)
                h = conv3x3(h, st["i_w2"], st["i_b2"], st["cout2"], st)
                pooled = jnp.dot(h.astype(jnp.bfloat16), refs[st["i_pool"]][...],
                                 preferred_element_type=jnp.float32)
                if si == 0:
                    img_dn = jnp.dot(img_v, refs[st["i_pool"]][...],
                                     preferred_element_type=jnp.float32)
                    skip = _lrelu(jnp.dot(refs[ibw][...], img_dn.astype(jnp.bfloat16),
                                          preferred_element_type=jnp.float32) + refs[ibb][...])
                    a = refs[0][0, 0]                                   # alpha (SMEM scalar)
                    cur = a * pooled + (1.0 - a) * skip
                else:
                    cur = pooled
            x = cur                                                     # (C, N*Pf) f32

        # ---------------- minibatch std (torch.std over batch, unbiased) ----------------
        chunks = [x[:, n * Pf:(n + 1) * Pf] for n in range(N)]
        mean = chunks[0]
        for cchunk in chunks[1:]:
            mean = mean + cchunk
        mean = mean * (1.0 / N)
        var = None
        for cchunk in chunks:
            d = cchunk - mean
            var = d * d if var is None else var + d * d
        var = var * (1.0 / max(N - 1, 1))          # guard N == 1 (torch would return NaN)
        std_scalar = jnp.mean(jnp.sqrt(var), keepdims=True)             # (1, 1)

        # ------------- final 3x3 conv (+ spatially constant std channel) + lrelu -------------
        yf = jnp.dot(refs[i_w1f][...], x.astype(jnp.bfloat16),
                     preferred_element_type=jnp.float32)                # (9C, NPf)
        acc = None
        for k in range(9):
            t = tap_gather(yf[k * C:(k + 1) * C, :], k, fstage)
            acc = t if acc is None else acc + t
        std_contrib = std_scalar * jnp.dot(refs[i_w1sT][...], refs[i_mask][...],
                                           preferred_element_type=jnp.float32)
        h1 = _lrelu(acc + std_contrib + refs[i_b1][...])                # (C, NPf)

        # ---------------- 4x4 valid conv (full per-sample reduce) + lrelu ----------------
        w2b_v = refs[i_w2b][...]                                        # (C, C, Pf) f32
        eye = refs[i_eye][...]                                          # (N, N) f32
        h2 = None
        for n in range(N):
            h1n = h1[:, n * Pf:(n + 1) * Pf]                            # (C, Pf)
            red = jnp.sum(jnp.sum(w2b_v * h1n[None, :, :], axis=2), axis=1, keepdims=True)
            col = red * eye[n:n + 1, :]                                 # place into column n
            h2 = col if h2 is None else h2 + col
        h2 = _lrelu(h2 + refs[i_b2][...])                               # (C, N)

        # ---------------- final 1x1 conv C -> 1 ----------------
        logit = jnp.dot(refs[i_w3][...], h2, preferred_element_type=jnp.float32) + refs[i_b3][...]
        out_ref[...] = logit                                            # (1, N)

    out = pl.pallas_call(
        kernel,
        out_shape=jax.ShapeDtypeStruct((1, N), jnp.float32),
        in_specs=in_specs,
        out_specs=pl.BlockSpec(memory_space=pltpu.MemorySpace.VMEM),
    )(*inputs)
    return out.reshape(N, 1)


# ----------------------------- pure-JAX f32 reference (same parameters) ---------------------------
def _ref_conv(x, p, padding):
    cout = p["w"].shape[3]
    y = lax.conv_general_dilated(x, p["w"], (1, 1), padding,
                                 dimension_numbers=("NHWC", "HWIO", "NHWC"))
    return y + p["b"].reshape(1, 1, 1, cout)


def reference_forward(params, feat, alpha, num_steps):
    feat = feat.astype(jnp.float32)
    n_blocks = len(params["blocks"])
    init_step = n_blocks - num_steps

    def rgb(x, p):
        return _lrelu(_ref_conv(x, p, "VALID"))

    def block(x, p):
        x = _lrelu(_ref_conv(x, p["conv1"], "SAME"))
        return _lrelu(_ref_conv(x, p["conv2"], "SAME"))

    def pool(x):
        n, h, w, c = x.shape
        return x.reshape(n, h // 2, 2, w // 2, 2, c).mean(axis=(2, 4))

    curr = rgb(feat, params["rgb"][init_step])
    if num_steps:
        down = rgb(pool(feat), params["rgb"][init_step + 1])
        curr = pool(block(curr, params["blocks"][init_step]))
        curr = alpha * curr + (1.0 - alpha) * down
        for step in range(init_step + 1, n_blocks):
            curr = pool(block(curr, params["blocks"][step]))

    n, h, w, c = curr.shape
    std = jnp.sqrt(jnp.sum((curr - curr.mean(axis=0, keepdims=True)) ** 2, axis=0)
                   / max(n - 1, 1)).mean()
    curr = jnp.concatenate([curr, jnp.full((n, h, w, 1), std, jnp.float32)], axis=-1)
    fin = params["final"]
    out = _lrelu(_ref_conv(curr, fin["conv1"], "SAME"))
    out = _lrelu(_ref_conv(out, fin["conv2"], "VALID"))
    out = _ref_conv(out, fin["conv3"], "VALID")
    return out.reshape(n, -1)


# --------------------------------------------------------------------------------------------------
if __name__ == "__main__":
    key = jax.random.PRNGKey(0)
    pkey, xkey = jax.random.split(key)

    in_chan = 16
    channel_factors = [1.0, 1.0, 0.5]          # two down-sample blocks
    img_chan = 3
    batch = 2
    num_steps = 2                              # input resolution 4 * 2**2 = 16x16
    alpha = 0.7

    params = init_discriminator_params(pkey, in_chan, channel_factors, img_chan)
    res = 4 * 2 ** num_steps
    feat = jax.random.normal(xkey, (batch, res, res, img_chan), dtype=jnp.float32)   # NHWC

    fwd = jax.jit(discriminator_forward, static_argnums=(3,))
    out = jax.block_until_ready(fwd(params, feat, alpha, num_steps))

    assert out.shape == (batch, 1), out.shape
    assert bool(jnp.all(jnp.isfinite(out)))

    ref = jax.block_until_ready(reference_forward(params, feat, alpha, num_steps))
    np.testing.assert_allclose(np.asarray(out), np.asarray(ref), rtol=1e-1, atol=1e-1)

    print("KERNEL_OK")
</pallas_src>

<mosaic_0001>
module attributes {stable_mosaic.version = 11 : i64} {
  func.func @kernel(%arg0: memref<1x1xf32, #tpu.memory_space<smem>>, %arg1: memref<3x512xbf16, #tpu.memory_space<vmem>>, %arg2: memref<8x3xbf16, #tpu.memory_space<vmem>>, %arg3: memref<8x1xf32, #tpu.memory_space<vmem>>, %arg4: memref<16x3xbf16, #tpu.memory_space<vmem>>, %arg5: memref<16x1xf32, #tpu.memory_space<vmem>>, %arg6: memref<144x8xbf16, #tpu.memory_space<vmem>>, %arg7: memref<16x1xf32, #tpu.memory_space<vmem>>, %arg8: memref<144x16xbf16, #tpu.memory_space<vmem>>, %arg9: memref<16x1xf32, #tpu.memory_space<vmem>>, %arg10: memref<9x512xf32, #tpu.memory_space<vmem>>, %arg11: memref<512x128xbf16, #tpu.memory_space<vmem>>, %arg12: memref<144x16xbf16, #tpu.memory_space<vmem>>, %arg13: memref<16x1xf32, #tpu.memory_space<vmem>>, %arg14: memref<144x16xbf16, #tpu.memory_space<vmem>>, %arg15: memref<16x1xf32, #tpu.memory_space<vmem>>, %arg16: memref<9x128xf32, #tpu.memory_space<vmem>>, %arg17: memref<128x32xbf16, #tpu.memory_space<vmem>>, %arg18: memref<9x32x32xbf16, #tpu.memory_space<vmem>>, %arg19: memref<9x32xf32, #tpu.memory_space<vmem>>, %arg20: memref<144x16xbf16, #tpu.memory_space<vmem>>, %arg21: memref<16x9xf32, #tpu.memory_space<vmem>>, %arg22: memref<16x1xf32, #tpu.memory_space<vmem>>, %arg23: memref<16x16x16xf32, #tpu.memory_space<vmem>>, %arg24: memref<16x1xf32, #tpu.memory_space<vmem>>, %arg25: memref<1x16xf32, #tpu.memory_space<vmem>>, %arg26: memref<1x1xf32, #tpu.memory_space<vmem>>, %arg27: memref<2x2xf32, #tpu.memory_space<vmem>>, %arg28: memref<1x2xf32, #tpu.memory_space<vmem>>) attributes {dimension_semantics = [], scalar_prefetch = 0 : i64, scratch_operands = 0 : i64, tpu.core_type = #tpu.core_type<tc>} {
    %c0 = arith.constant 0 : index
    %c0_0 = arith.constant 0 : index
    %0 = vector.load %arg1[%c0, %c0_0] : memref<3x512xbf16, #tpu.memory_space<vmem>>, vector<3x512xbf16>
    %c0_1 = arith.constant 0 : index
    %c0_2 = arith.constant 0 : index
    %1 = vector.load %arg2[%c0_1, %c0_2] : memref<8x3xbf16, #tpu.memory_space<vmem>>, vector<8x3xbf16>
    %cst = arith.constant dense<0.000000e+00> : vector<8x512xf32>
    %2 = tpu.matmul %1, %0, %cst {dimension_numbers = #tpu.dot_dimension_numbers<[1], [0], [0], [1], [0, 0, 1, 1], [], []>} : vector<8x3xbf16>, vector<3x512xbf16>, vector<8x512xf32> -> vector<8x512xf32>
    %c0_3 = arith.constant 0 : index
    %c0_4 = arith.constant 0 : index
    %3 = vector.load %arg3[%c0_3, %c0_4] : memref<8x1xf32, #tpu.memory_space<vmem>>, vector<8x1xf32>
    %4 = vector.broadcast %3 : vector<8x1xf32> to vector<8x512xf32>
    %5 = arith.addf %2, %4 : vector<8x512xf32>
    %cst_5 = arith.constant 0.000000e+00 : f32
    %6 = vector.broadcast %cst_5 : f32 to vector<8x512xf32>
    %7 = arith.cmpf oge, %5, %6 : vector<8x512xf32>
    %cst_6 = arith.constant 2.000000e-01 : f32
    %8 = vector.broadcast %cst_6 : f32 to vector<8x512xf32>
    %9 = arith.mulf %8, %5 : vector<8x512xf32>
    %10 = arith.select %7, %5, %9 : vector<8x512xi1>, vector<8x512xf32>
    %c0_7 = arith.constant 0 : index
    %c0_8 = arith.constant 0 : index
    %11 = vector.load %arg6[%c0_7, %c0_8] : memref<144x8xbf16, #tpu.memory_space<vmem>>, vector<144x8xbf16>
    %12 = arith.truncf %10 : vector<8x512xf32> to vector<8x512xbf16>
    %cst_9 = arith.constant dense<0.000000e+00> : vector<144x512xf32>
    %13 = tpu.matmul %11, %12, %cst_9 {dimension_numbers = #tpu.dot_dimension_numbers<[1], [0], [0], [1], [0, 0, 1, 1], [], []>} : vector<144x8xbf16>, vector<8x512xbf16>, vector<144x512xf32> -> vector<144x512xf32>
    %14 = vector.extract_strided_slice %13 {offsets = [0, 0], sizes = [16, 512], strides = [1, 1]} : vector<144x512xf32> to vector<16x512xf32>
    %c17_i32 = arith.constant 17 : i32
    %15 = tpu.dynamic_rotate %14 by %c17_i32 dim 1 : vector<16x512xf32>, i32 -> vector<16x512xf32>
    %c0_10 = arith.constant 0 : index
    %c0_11 = arith.constant 0 : index
    %16 = vector.load %arg10[%c0_10, %c0_11] : memref<9x512xf32, #tpu.memory_space<vmem>>, vector<1x512xf32>
    %17 = vector.broadcast %16 : vector<1x512xf32> to vector<16x512xf32>
    %18 = arith.mulf %17, %15 : vector<16x512xf32>
    %19 = vector.extract_strided_slice %13 {offsets = [16, 0], sizes = [16, 512], strides = [1, 1]} : vector<144x512xf32> to vector<16x512xf32>
    %c16_i32 = arith.constant 16 : i32
    %20 = tpu.dynamic_rotate %19 by %c16_i32 dim 1 : vector<16x512xf32>, i32 -> vector<16x512xf32>
    %c1 = arith.constant 1 : index
    %c0_12 = arith.constant 0 : index
    %21 = vector.load %arg10[%c1, %c0_12] : memref<9x512xf32, #tpu.memory_space<vmem>>, vector<1x512xf32>
    %22 = vector.broadcast %21 : vector<1x512xf32> to vector<16x512xf32>
    %23 = arith.mulf %22, %20 : vector<16x512xf32>
    %24 = arith.addf %18, %23 : vector<16x512xf32>
    %25 = vector.extract_strided_slice %13 {offsets = [32, 0], sizes = [16, 512], strides = [1, 1]} : vector<144x512xf32> to vector<16x512xf32>
    %c15_i32 = arith.constant 15 : i32
    %26 = tpu.dynamic_rotate %25 by %c15_i32 dim 1 : vector<16x512xf32>, i32 -> vector<16x512xf32>
    %c2 = arith.constant 2 : index
    %c0_13 = arith.constant 0 : index
    %27 = vector.load %arg10[%c2, %c0_13] : memref<9x512xf32, #tpu.memory_space<vmem>>, vector<1x512xf32>
    %28 = vector.broadcast %27 : vector<1x512xf32> to vector<16x512xf32>
    %29 = arith.mulf %28, %26 : vector<16x512xf32>
    %30 = arith.addf %24, %29 : vector<16x512xf32>
    %31 = vector.extract_strided_slice %13 {offsets = [48, 0], sizes = [16, 512], strides = [1, 1]} : vector<144x512xf32> to vector<16x512xf32>
    %c1_i32 = arith.constant 1 : i32
    %32 = tpu.dynamic_rotate %31 by %c1_i32 dim 1 : vector<16x512xf32>, i32 -> vector<16x512xf32>
    %c3 = arith.constant 3 : index
    %c0_14 = arith.constant 0 : index
    %33 = vector.load %arg10[%c3, %c0_14] : memref<9x512xf32, #tpu.memory_space<vmem>>, vector<1x512xf32>
    %34 = vector.broadcast %33 : vector<1x512xf32> to vector<16x512xf32>
    %35 = arith.mulf %34, %32 : vector<16x512xf32>
    %36 = arith.addf %30, %35 : vector<16x512xf32>
    %37 = vector.extract_strided_slice %13 {offsets = [64, 0], sizes = [16, 512], strides = [1, 1]} : vector<144x512xf32> to vector<16x512xf32>
    %38 = arith.addf %36, %37 : vector<16x512xf32>
    %39 = vector.extract_strided_slice %13 {offsets = [80, 0], sizes = [16, 512], strides = [1, 1]} : vector<144x512xf32> to vector<16x512xf32>
    %c511_i32 = arith.constant 511 : i32
    %40 = tpu.dynamic_rotate %39 by %c511_i32 dim 1 : vector<16x512xf32>, i32 -> vector<16x512xf32>
    %c5 = arith.constant 5 : index
    %c0_15 = arith.constant 0 : index
    %41 = vector.load %arg10[%c5, %c0_15] : memref<9x512xf32, #tpu.memory_space<vmem>>, vector<1x512xf32>
    %42 = vector.broadcast %41 : vector<1x512xf32> to vector<16x512xf32>
    %43 = arith.mulf %42, %40 : vector<16x512xf32>
    %44 = arith.addf %38, %43 : vector<16x512xf32>
    %45 = vector.extract_strided_slice %13 {offsets = [96, 0], sizes = [16, 512], strides = [1, 1]} : vector<144x512xf32> to vector<16x512xf32>
    %c497_i32 = arith.constant 497 : i32
    %46 = tpu.dynamic_rotate %45 by %c497_i32 dim 1 : vector<16x512xf32>, i32 -> vector<16x512xf32>
    %c6 = arith.constant 6 : index
    %c0_16 = arith.constant 0 : index
    %47 = vector.load %arg10[%c6, %c0_16] : memref<9x512xf32, #tpu.memory_space<vmem>>, vector<1x512xf32>
    %48 = vector.broadcast %47 : vector<1x512xf32> to vector<16x512xf32>
    %49 = arith.mulf %48, %46 : vector<16x512xf32>
    %50 = arith.addf %44, %49 : vector<16x512xf32>
    %51 = vector.extract_strided_slice %13 {offsets = [112, 0], sizes = [16, 512], strides = [1, 1]} : vector<144x512xf32> to vector<16x512xf32>
    %c496_i32 = arith.constant 496 : i32
    %52 = tpu.dynamic_rotate %51 by %c496_i32 dim 1 : vector<16x512xf32>, i32 -> vector<16x512xf32>
    %c7 = arith.constant 7 : index
    %c0_17 = arith.constant 0 : index
    %53 = vector.load %arg10[%c7, %c0_17] : memref<9x512xf32, #tpu.memory_space<vmem>>, vector<1x512xf32>
    %54 = vector.broadcast %53 : vector<1x512xf32> to vector<16x512xf32>
    %55 = arith.mulf %54, %52 : vector<16x512xf32>
    %56 = arith.addf %50, %55 : vector<16x512xf32>
    %57 = vector.extract_strided_slice %13 {offsets = [128, 0], sizes = [16, 512], strides = [1, 1]} : vector<144x512xf32> to vector<16x512xf32>
    %c495_i32 = arith.constant 495 : i32
    %58 = tpu.dynamic_rotate %57 by %c495_i32 dim 1 : vector<16x512xf32>, i32 -> vector<16x512xf32>
    %c8 = arith.constant 8 : index
    %c0_18 = arith.constant 0 : index
    %59 = vector.load %arg10[%c8, %c0_18] : memref<9x512xf32, #tpu.memory_space<vmem>>, vector<1x512xf32>
    %60 = vector.broadcast %59 : vector<1x512xf32> to vector<16x512xf32>
    %61 = arith.mulf %60, %58 : vector<16x512xf32>
    %62 = arith.addf %56, %61 : vector<16x512xf32>
    %c0_19 = arith.constant 0 : index
    %c0_20 = arith.constant 0 : index
    %63 = vector.load %arg7[%c0_19, %c0_20] : memref<16x1xf32, #tpu.memory_space<vmem>>, vector<16x1xf32>
    %64 = vector.broadcast %63 : vector<16x1xf32> to vector<16x512xf32>
    %65 = arith.addf %62, %64 : vector<16x512xf32>
    %cst_21 = arith.constant 0.000000e+00 : f32
    %66 = vector.broadcast %cst_21 : f32 to vector<16x512xf32>
    %67 = arith.cmpf oge, %65, %66 : vector<16x512xf32>
    %cst_22 = arith.constant 2.000000e-01 : f32
    %68 = vector.broadcast %cst_22 : f32 to vector<16x512xf32>
    %69 = arith.mulf %68, %65 : vector<16x512xf32>
    %70 = arith.select %67, %65, %69 : vector<16x512xi1>, vector<16x512xf32>
    %c0_23 = arith.constant 0 : index
    %c0_24 = arith.constant 0 : index
    %71 = vector.load %arg8[%c0_23, %c0_24] : memref<144x16xbf16, #tpu.memory_space<vmem>>, vector<144x16xbf16>
    %72 = arith.truncf %70 : vector<16x512xf32> to vector<16x512xbf16>
    %cst_25 = arith.constant dense<0.000000e+00> : vector<144x512xf32>
    %73 = tpu.matmul %71, %72, %cst_25 {dimension_numbers = #tpu.dot_dimension_numbers<[1], [0], [0], [1], [0, 0, 1, 1], [], []>} : vector<144x16xbf16>, vector<16x512xbf16>, vector<144x512xf32> -> vector<144x512xf32>
    %74 = vector.extract_strided_slice %73 {offsets = [0, 0], sizes = [16, 512], strides = [1, 1]} : vector<144x512xf32> to vector<16x512xf32>
    %c17_i32_26 = arith.constant 17 : i32
    %75 = tpu.dynamic_rotate %74 by %c17_i32_26 dim 1 : vector<16x512xf32>, i32 -> vector<16x512xf32>
    %c0_27 = arith.constant 0 : index
    %c0_28 = arith.constant 0 : index
    %76 = vector.load %arg10[%c0_27, %c0_28] : memref<9x512xf32, #tpu.memory_space<vmem>>, vector<1x512xf32>
    %77 = vector.broadcast %76 : vector<1x512xf32> to vector<16x512xf32>
    %78 = arith.mulf %77, %75 : vector<16x512xf32>
    %79 = vector.extract_strided_slice %73 {offsets = [16, 0], sizes = [16, 512], strides = [1, 1]} : vector<144x512xf32> to vector<16x512xf32>
    %c16_i32_29 = arith.constant 16 : i32
    %80 = tpu.dynamic_rotate %79 by %c16_i32_29 dim 1 : vector<16x512xf32>, i32 -> vector<16x512xf32>
    %c1_30 = arith.constant 1 : index
    %c0_31 = arith.constant 0 : index
    %81 = vector.load %arg10[%c1_30, %c0_31] : memref<9x512xf32, #tpu.memory_space<vmem>>, vector<1x512xf32>
    %82 = vector.broadcast %81 : vector<1x512xf32> to vector<16x512xf32>
    %83 = arith.mulf %82, %80 : vector<16x512xf32>
    %84 = arith.addf %78, %83 : vector<16x512xf32>
    %85 = vector.extract_strided_slice %73 {offsets = [32, 0], sizes = [16, 512], strides = [1, 1]} : vector<144x512xf32> to vector<16x512xf32>
    %c15_i32_32 = arith.constant 15 : i32
    %86 = tpu.dynamic_rotate %85 by %c15_i32_32 dim 1 : vector<16x512xf32>, i32 -> vector<16x512xf32>
    %c2_33 = arith.constant 2 : index
    %c0_34 = arith.constant 0 : index
    %87 = vector.load %arg10[%c2_33, %c0_34] : memref<9x512xf32, #tpu.memory_space<vmem>>, vector<1x512xf32>
    %88 = vector.broadcast %87 : vector<1x512xf32> to vector<16x512xf32>
    %89 = arith.mulf %88, %86 : vector<16x512xf32>
    %90 = arith.addf %84, %89 : vector<16x512xf32>
    %91 = vector.extract_strided_slice %73 {offsets = [48, 0], sizes = [16, 512], strides = [1, 1]} : vector<144x512xf32> to vector<16x512xf32>
    %c1_i32_35 = arith.constant 1 : i32
    %92 = tpu.dynamic_rotate %91 by %c1_i32_35 dim 1 : vector<16x512xf32>, i32 -> vector<16x512xf32>
    %c3_36 = arith.constant 3 : index
    %c0_37 = arith.constant 0 : index
    %93 = vector.load %arg10[%c3_36, %c0_37] : memref<9x512xf32, #tpu.memory_space<vmem>>, vector<1x512xf32>
    %94 = vector.broadcast %93 : vector<1x512xf32> to vector<16x512xf32>
    %95 = arith.mulf %94, %92 : vector<16x512xf32>
    %96 = arith.addf %90, %95 : vector<16x512xf32>
    %97 = vector.extract_strided_slice %73 {offsets = [64, 0], sizes = [16, 512], strides = [1, 1]} : vector<144x512xf32> to vector<16x512xf32>
    %98 = arith.addf %96, %97 : vector<16x512xf32>
    %99 = vector.extract_strided_slice %73 {offsets = [80, 0], sizes = [16, 512], strides = [1, 1]} : vector<144x512xf32> to vector<16x512xf32>
    %c511_i32_38 = arith.constant 511 : i32
    %100 = tpu.dynamic_rotate %99 by %c511_i32_38 dim 1 : vector<16x512xf32>, i32 -> vector<16x512xf32>
    %c5_39 = arith.constant 5 : index
    %c0_40 = arith.constant 0 : index
    %101 = vector.load %arg10[%c5_39, %c0_40] : memref<9x512xf32, #tpu.memory_space<vmem>>, vector<1x512xf32>
    %102 = vector.broadcast %101 : vector<1x512xf32> to vector<16x512xf32>
    %103 = arith.mulf %102, %100 : vector<16x512xf32>
    %104 = arith.addf %98, %103 : vector<16x512xf32>
    %105 = vector.extract_strided_slice %73 {offsets = [96, 0], sizes = [16, 512], strides = [1, 1]} : vector<144x512xf32> to vector<16x512xf32>
    %c497_i32_41 = arith.constant 497 : i32
    %106 = tpu.dynamic_rotate %105 by %c497_i32_41 dim 1 : vector<16x512xf32>, i32 -> vector<16x512xf32>
    %c6_42 = arith.constant 6 : index
    %c0_43 = arith.constant 0 : index
    %107 = vector.load %arg10[%c6_42, %c0_43] : memref<9x512xf32, #tpu.memory_space<vmem>>, vector<1x512xf32>
    %108 = vector.broadcast %107 : vector<1x512xf32> to vector<16x512xf32>
    %109 = arith.mulf %108, %106 : vector<16x512xf32>
    %110 = arith.addf %104, %109 : vector<16x512xf32>
    %111 = vector.extract_strided_slice %73 {offsets = [112, 0], sizes = [16, 512], strides = [1, 1]} : vector<144x512xf32> to vector<16x512xf32>
    %c496_i32_44 = arith.constant 496 : i32
    %112 = tpu.dynamic_rotate %111 by %c496_i32_44 dim 1 : vector<16x512xf32>, i32 -> vector<16x512xf32>
    %c7_45 = arith.constant 7 : index
    %c0_46 = arith.constant 0 : index
    %113 = vector.load %arg10[%c7_45, %c0_46] : memref<9x512xf32, #tpu.memory_space<vmem>>, vector<1x512xf32>
    %114 = vector.broadcast %113 : vector<1x512xf32> to vector<16x512xf32>
    %115 = arith.mulf %114, %112 : vector<16x512xf32>
    %116 = arith.addf %110, %115 : vector<16x512xf32>
    %117 = vector.extract_strided_slice %73 {offsets = [128, 0], sizes = [16, 512], strides = [1, 1]} : vector<144x512xf32> to vector<16x512xf32>
    %c495_i32_47 = arith.constant 495 : i32
    %118 = tpu.dynamic_rotate %117 by %c495_i32_47 dim 1 : vector<16x512xf32>, i32 -> vector<16x512xf32>
    %c8_48 = arith.constant 8 : index
    %c0_49 = arith.constant 0 : index
    %119 = vector.load %arg10[%c8_48, %c0_49] : memref<9x512xf32, #tpu.memory_space<vmem>>, vector<1x512xf32>
    %120 = vector.broadcast %119 : vector<1x512xf32> to vector<16x512xf32>
    %121 = arith.mulf %120, %118 : vector<16x512xf32>
    %122 = arith.addf %116, %121 : vector<16x512xf32>
    %c0_50 = arith.constant 0 : index
    %c0_51 = arith.constant 0 : index
    %123 = vector.load %arg9[%c0_50, %c0_51] : memref<16x1xf32, #tpu.memory_space<vmem>>, vector<16x1xf32>
    %124 = vector.broadcast %123 : vector<16x1xf32> to vector<16x512xf32>
    %125 = arith.addf %122, %124 : vector<16x512xf32>
    %cst_52 = arith.constant 0.000000e+00 : f32
    %126 = vector.broadcast %cst_52 : f32 to vector<16x512xf32>
    %127 = arith.cmpf oge, %125, %126 : vector<16x512xf32>
    %cst_53 = arith.constant 2.000000e-01 : f32
    %128 = vector.broadcast %cst_53 : f32 to vector<16x512xf32>
    %129 = arith.mulf %128, %125 : vector<16x512xf32>
    %130 = arith.select %127, %125, %129 : vector<16x512xi1>, vector<16x512xf32>
    %131 = arith.truncf %130 : vector<16x512xf32> to vector<16x512xbf16>
    %c0_54 = arith.constant 0 : index
    %c0_55 = arith.constant 0 : index
    %132 = vector.load %arg11[%c0_54, %c0_55] : memref<512x128xbf16, #tpu.memory_space<vmem>>, vector<512x128xbf16>
    %cst_56 = arith.constant dense<0.000000e+00> : vector<16x128xf32>
    %133 = tpu.matmul %131, %132, %cst_56 {dimension_numbers = #tpu.dot_dimension_numbers<[1], [0], [0], [1], [0, 0, 1, 1], [], []>} : vector<16x512xbf16>, vector<512x128xbf16>, vector<16x128xf32> -> vector<16x128xf32>
    %c0_57 = arith.constant 0 : index
    %c0_58 = arith.constant 0 : index
    %134 = vector.load %arg11[%c0_57, %c0_58] : memref<512x128xbf16, #tpu.memory_space<vmem>>, vector<512x128xbf16>
    %cst_59 = arith.constant dense<0.000000e+00> : vector<3x128xf32>
    %135 = tpu.matmul %0, %134, %cst_59 {dimension_numbers = #tpu.dot_dimension_numbers<[1], [0], [0], [1], [0, 0, 1, 1], [], []>} : vector<3x512xbf16>, vector<512x128xbf16>, vector<3x128xf32> -> vector<3x128xf32>
    %c0_60 = arith.constant 0 : index
    %c0_61 = arith.constant 0 : index
    %136 = vector.load %arg4[%c0_60, %c0_61] : memref<16x3xbf16, #tpu.memory_space<vmem>>, vector<16x3xbf16>
    %137 = arith.truncf %135 : vector<3x128xf32> to vector<3x128xbf16>
    %cst_62 = arith.constant dense<0.000000e+00> : vector<16x128xf32>
    %138 = tpu.matmul %136, %137, %cst_62 {dimension_numbers = #tpu.dot_dimension_numbers<[1], [0], [0], [1], [0, 0, 1, 1], [], []>} : vector<16x3xbf16>, vector<3x128xbf16>, vector<16x128xf32> -> vector<16x128xf32>
    %c0_63 = arith.constant 0 : index
    %c0_64 = arith.constant 0 : index
    %139 = vector.load %arg5[%c0_63, %c0_64] : memref<16x1xf32, #tpu.memory_space<vmem>>, vector<16x1xf32>
    %140 = vector.broadcast %139 : vector<16x1xf32> to vector<16x128xf32>
    %141 = arith.addf %138, %140 : vector<16x128xf32>
    %cst_65 = arith.constant 0.000000e+00 : f32
    %142 = vector.broadcast %cst_65 : f32 to vector<16x128xf32>
    %143 = arith.cmpf oge, %141, %142 : vector<16x128xf32>
    %cst_66 = arith.constant 2.000000e-01 : f32
    %144 = vector.broadcast %cst_66 : f32 to vector<16x128xf32>
    %145 = arith.mulf %144, %141 : vector<16x128xf32>
    %146 = arith.select %143, %141, %145 : vector<16x128xi1>, vector<16x128xf32>
    %c0_67 = arith.constant 0 : index
    %c0_68 = arith.constant 0 : index
    %147 = memref.load %arg0[%c0_67, %c0_68] : memref<1x1xf32, #tpu.memory_space<smem>>
    %148 = vector.broadcast %147 : f32 to vector<16x128xf32>
    %149 = arith.mulf %148, %133 : vector<16x128xf32>
    %cst_69 = arith.constant 1.000000e+00 : f32
    %150 = arith.subf %cst_69, %147 : f32
    %151 = vector.broadcast %150 : f32 to vector<16x128xf32>
    %152 = arith.mulf %151, %146 : vector<16x128xf32>
    %153 = arith.addf %149, %152 : vector<16x128xf32>
    %c0_70 = arith.constant 0 : index
    %c0_71 = arith.constant 0 : index
    %154 = vector.load %arg12[%c0_70, %c0_71] : memref<144x16xbf16, #tpu.memory_space<vmem>>, vector<144x16xbf16>
    %155 = arith.truncf %153 : vector<16x128xf32> to vector<16x128xbf16>
    %cst_72 = arith.constant dense<0.000000e+00> : vector<144x128xf32>
    %156 = tpu.matmul %154, %155, %cst_72 {dimension_numbers = #tpu.dot_dimension_numbers<[1], [0], [0], [1], [0, 0, 1, 1], [], []>} : vector<144x16xbf16>, vector<16x128xbf16>, vector<144x128xf32> -> vector<144x128xf32>
    %157 = vector.extract_strided_slice %156 {offsets = [0, 0], sizes = [16, 128], strides = [1, 1]} : vector<144x128xf32> to vector<16x128xf32>
    %c9_i32 = arith.constant 9 : i32
    %158 = tpu.dynamic_rotate %157 by %c9_i32 dim 1 : vector<16x128xf32>, i32 -> vector<16x128xf32>
    %c0_73 = arith.constant 0 : index
    %c0_74 = arith.constant 0 : index
    %159 = vector.load %arg16[%c0_73, %c0_74] : memref<9x128xf32, #tpu.memory_space<vmem>>, vector<1x128xf32>
    %160 = vector.broadcast %159 : vector<1x128xf32> to vector<16x128xf32>
    %161 = arith.mulf %160, %158 : vector<16x128xf32>
    %162 = vector.extract_strided_slice %156 {offsets = [16, 0], sizes = [16, 128], strides = [1, 1]} : vector<144x128xf32> to vector<16x128xf32>
    %c8_i32 = arith.constant 8 : i32
    %163 = tpu.dynamic_rotate %162 by %c8_i32 dim 1 : vector<16x128xf32>, i32 -> vector<16x128xf32>
    %c1_75 = arith.constant 1 : index
    %c0_76 = arith.constant 0 : index
    %164 = vector.load %arg16[%c1_75, %c0_76] : memref<9x128xf32, #tpu.memory_space<vmem>>, vector<1x128xf32>
    %165 = vector.broadcast %164 : vector<1x128xf32> to vector<16x128xf32>
    %166 = arith.mulf %165, %163 : vector<16x128xf32>
    %167 = arith.addf %161, %166 : vector<16x128xf32>
    %168 = vector.extract_strided_slice %156 {offsets = [32, 0], sizes = [16, 128], strides = [1, 1]} : vector<144x128xf32> to vector<16x128xf32>
    %c7_i32 = arith.constant 7 : i32
    %169 = tpu.dynamic_rotate %168 by %c7_i32 dim 1 : vector<16x128xf32>, i32 -> vector<16x128xf32>
    %c2_77 = arith.constant 2 : index
    %c0_78 = arith.constant 0 : index
    %170 = vector.load %arg16[%c2_77, %c0_78] : memref<9x128xf32, #tpu.memory_space<vmem>>, vector<1x128xf32>
    %171 = vector.broadcast %170 : vector<1x128xf32> to vector<16x128xf32>
    %172 = arith.mulf %171, %169 : vector<16x128xf32>
    %173 = arith.addf %167, %172 : vector<16x128xf32>
    %174 = vector.extract_strided_slice %156 {offsets = [48, 0], sizes = [16, 128], strides = [1, 1]} : vector<144x128xf32> to vector<16x128xf32>
    %c1_i32_79 = arith.constant 1 : i32
    %175 = tpu.dynamic_rotate %174 by %c1_i32_79 dim 1 : vector<16x128xf32>, i32 -> vector<16x128xf32>
    %c3_80 = arith.constant 3 : index
    %c0_81 = arith.constant 0 : index
    %176 = vector.load %arg16[%c3_80, %c0_81] : memref<9x128xf32, #tpu.memory_space<vmem>>, vector<1x128xf32>
    %177 = vector.broadcast %176 : vector<1x128xf32> to vector<16x128xf32>
    %178 = arith.mulf %177, %175 : vector<16x128xf32>
    %179 = arith.addf %173, %178 : vector<16x128xf32>
    %180 = vector.extract_strided_slice %156 {offsets = [64, 0], sizes = [16, 128], strides = [1, 1]} : vector<144x128xf32> to vector<16x128xf32>
    %181 = arith.addf %179, %180 : vector<16x128xf32>
    %182 = vector.extract_strided_slice %156 {offsets = [80, 0], sizes = [16, 128], strides = [1, 1]} : vector<144x128xf32> to vector<16x128xf32>
    %c127_i32 = arith.constant 127 : i32
    %183 = tpu.dynamic_rotate %182 by %c127_i32 dim 1 : vector<16x128xf32>, i32 -> vector<16x128xf32>
    %c5_82 = arith.constant 5 : index
    %c0_83 = arith.constant 0 : index
    %184 = vector.load %arg16[%c5_82, %c0_83] : memref<9x128xf32, #tpu.memory_space<vmem>>, vector<1x128xf32>
    %185 = vector.broadcast %184 : vector<1x128xf32> to vector<16x128xf32>
    %186 = arith.mulf %185, %183 : vector<16x128xf32>
    %187 = arith.addf %181, %186 : vector<16x128xf32>
    %188 = vector.extract_strided_slice %156 {offsets = [96, 0], sizes = [16, 128], strides = [1, 1]} : vector<144x128xf32> to vector<16x128xf32>
    %c121_i32 = arith.constant 121 : i32
    %189 = tpu.dynamic_rotate %188 by %c121_i32 dim 1 : vector<16x128xf32>, i32 -> vector<16x128xf32>
    %c6_84 = arith.constant 6 : index
    %c0_85 = arith.constant 0 : index
    %190 = vector.load %arg16[%c6_84, %c0_85] : memref<9x128xf32, #tpu.memory_space<vmem>>, vector<1x128xf32>
    %191 = vector.broadcast %190 : vector<1x128xf32> to vector<16x128xf32>
    %192 = arith.mulf %191, %189 : vector<16x128xf32>
    %193 = arith.addf %187, %192 : vector<16x128xf32>
    %194 = vector.extract_strided_slice %156 {offsets = [112, 0], sizes = [16, 128], strides = [1, 1]} : vector<144x128xf32> to vector<16x128xf32>
    %c120_i32 = arith.constant 120 : i32
    %195 = tpu.dynamic_rotate %194 by %c120_i32 dim 1 : vector<16x128xf32>, i32 -> vector<16x128xf32>
    %c7_86 = arith.constant 7 : index
    %c0_87 = arith.constant 0 : index
    %196 = vector.load %arg16[%c7_86, %c0_87] : memref<9x128xf32, #tpu.memory_space<vmem>>, vector<1x128xf32>
    %197 = vector.broadcast %196 : vector<1x128xf32> to vector<16x128xf32>
    %198 = arith.mulf %197, %195 : vector<16x128xf32>
    %199 = arith.addf %193, %198 : vector<16x128xf32>
    %200 = vector.extract_strided_slice %156 {offsets = [128, 0], sizes = [16, 128], strides = [1, 1]} : vector<144x128xf32> to vector<16x128xf32>
    %c119_i32 = arith.constant 119 : i32
    %201 = tpu.dynamic_rotate %200 by %c119_i32 dim 1 : vector<16x128xf32>, i32 -> vector<16x128xf32>
    %c8_88 = arith.constant 8 : index
    %c0_89 = arith.constant 0 : index
    %202 = vector.load %arg16[%c8_88, %c0_89] : memref<9x128xf32, #tpu.memory_space<vmem>>, vector<1x128xf32>
    %203 = vector.broadcast %202 : vector<1x128xf32> to vector<16x128xf32>
    %204 = arith.mulf %203, %201 : vector<16x128xf32>
    %205 = arith.addf %199, %204 : vector<16x128xf32>
    %c0_90 = arith.constant 0 : index
    %c0_91 = arith.constant 0 : index
    %206 = vector.load %arg13[%c0_90, %c0_91] : memref<16x1xf32, #tpu.memory_space<vmem>>, vector<16x1xf32>
    %207 = vector.broadcast %206 : vector<16x1xf32> to vector<16x128xf32>
    %208 = arith.addf %205, %207 : vector<16x128xf32>
    %cst_92 = arith.constant 0.000000e+00 : f32
    %209 = vector.broadcast %cst_92 : f32 to vector<16x128xf32>
    %210 = arith.cmpf oge, %208, %209 : vector<16x128xf32>
    %cst_93 = arith.constant 2.000000e-01 : f32
    %211 = vector.broadcast %cst_93 : f32 to vector<16x128xf32>
    %212 = arith.mulf %211, %208 : vector<16x128xf32>
    %213 = arith.select %210, %208, %212 : vector<16x128xi1>, vector<16x128xf32>
    %c0_94 = arith.constant 0 : index
    %c0_95 = arith.constant 0 : index
    %214 = vector.load %arg14[%c0_94, %c0_95] : memref<144x16xbf16, #tpu.memory_space<vmem>>, vector<144x16xbf16>
    %215 = arith.truncf %213 : vector<16x128xf32> to vector<16x128xbf16>
    %cst_96 = arith.constant dense<0.000000e+00> : vector<144x128xf32>
    %216 = tpu.matmul %214, %215, %cst_96 {dimension_numbers = #tpu.dot_dimension_numbers<[1], [0], [0], [1], [0, 0, 1, 1], [], []>} : vector<144x16xbf16>, vector<16x128xbf16>, vector<144x128xf32> -> vector<144x128xf32>
    %217 = vector.extract_strided_slice %216 {offsets = [0, 0], sizes = [16, 128], strides = [1, 1]} : vector<144x128xf32> to vector<16x128xf32>
    %c9_i32_97 = arith.constant 9 : i32
    %218 = tpu.dynamic_rotate %217 by %c9_i32_97 dim 1 : vector<16x128xf32>, i32 -> vector<16x128xf32>
    %c0_98 = arith.constant 0 : index
    %c0_99 = arith.constant 0 : index
    %219 = vector.load %arg16[%c0_98, %c0_99] : memref<9x128xf32, #tpu.memory_space<vmem>>, vector<1x128xf32>
    %220 = vector.broadcast %219 : vector<1x128xf32> to vector<16x128xf32>
    %221 = arith.mulf %220, %218 : vector<16x128xf32>
    %222 = vector.extract_strided_slice %216 {offsets = [16, 0], sizes = [16, 128], strides = [1, 1]} : vector<144x128xf32> to vector<16x128xf32>
    %c8_i32_100 = arith.constant 8 : i32
    %223 = tpu.dynamic_rotate %222 by %c8_i32_100 dim 1 : vector<16x128xf32>, i32 -> vector<16x128xf32>
    %c1_101 = arith.constant 1 : index
    %c0_102 = arith.constant 0 : index
    %224 = vector.load %arg16[%c1_101, %c0_102] : memref<9x128xf32, #tpu.memory_space<vmem>>, vector<1x128xf32>
    %225 = vector.broadcast %224 : vector<1x128xf32> to vector<16x128xf32>
    %226 = arith.mulf %225, %223 : vector<16x128xf32>
    %227 = arith.addf %221, %226 : vector<16x128xf32>
    %228 = vector.extract_strided_slice %216 {offsets = [32, 0], sizes = [16, 128], strides = [1, 1]} : vector<144x128xf32> to vector<16x128xf32>
    %c7_i32_103 = arith.constant 7 : i32
    %229 = tpu.dynamic_rotate %228 by %c7_i32_103 dim 1 : vector<16x128xf32>, i32 -> vector<16x128xf32>
    %c2_104 = arith.constant 2 : index
    %c0_105 = arith.constant 0 : index
    %230 = vector.load %arg16[%c2_104, %c0_105] : memref<9x128xf32, #tpu.memory_space<vmem>>, vector<1x128xf32>
    %231 = vector.broadcast %230 : vector<1x128xf32> to vector<16x128xf32>
    %232 = arith.mulf %231, %229 : vector<16x128xf32>
    %233 = arith.addf %227, %232 : vector<16x128xf32>
    %234 = vector.extract_strided_slice %216 {offsets = [48, 0], sizes = [16, 128], strides = [1, 1]} : vector<144x128xf32> to vector<16x128xf32>
    %c1_i32_106 = arith.constant 1 : i32
    %235 = tpu.dynamic_rotate %234 by %c1_i32_106 dim 1 : vector<16x128xf32>, i32 -> vector<16x128xf32>
    %c3_107 = arith.constant 3 : index
    %c0_108 = arith.constant 0 : index
    %236 = vector.load %arg16[%c3_107, %c0_108] : memref<9x128xf32, #tpu.memory_space<vmem>>, vector<1x128xf32>
    %237 = vector.broadcast %236 : vector<1x128xf32> to vector<16x128xf32>
    %238 = arith.mulf %237, %235 : vector<16x128xf32>
    %239 = arith.addf %233, %238 : vector<16x128xf32>
    %240 = vector.extract_strided_slice %216 {offsets = [64, 0], sizes = [16, 128], strides = [1, 1]} : vector<144x128xf32> to vector<16x128xf32>
    %241 = arith.addf %239, %240 : vector<16x128xf32>
    %242 = vector.extract_strided_slice %216 {offsets = [80, 0], sizes = [16, 128], strides = [1, 1]} : vector<144x128xf32> to vector<16x128xf32>
    %c127_i32_109 = arith.constant 127 : i32
    %243 = tpu.dynamic_rotate %242 by %c127_i32_109 dim 1 : vector<16x128xf32>, i32 -> vector<16x128xf32>
    %c5_110 = arith.constant 5 : index
    %c0_111 = arith.constant 0 : index
    %244 = vector.load %arg16[%c5_110, %c0_111] : memref<9x128xf32, #tpu.memory_space<vmem>>, vector<1x128xf32>
    %245 = vector.broadcast %244 : vector<1x128xf32> to vector<16x128xf32>
    %246 = arith.mulf %245, %243 : vector<16x128xf32>
    %247 = arith.addf %241, %246 : vector<16x128xf32>
    %248 = vector.extract_strided_slice %216 {offsets = [96, 0], sizes = [16, 128], strides = [1, 1]} : vector<144x128xf32> to vector<16x128xf32>
    %c121_i32_112 = arith.constant 121 : i32
    %249 = tpu.dynamic_rotate %248 by %c121_i32_112 dim 1 : vector<16x128xf32>, i32 -> vector<16x128xf32>
    %c6_113 = arith.constant 6 : index
    %c0_114 = arith.constant 0 : index
    %250 = vector.load %arg16[%c6_113, %c0_114] : memref<9x128xf32, #tpu.memory_space<vmem>>, vector<1x128xf32>
    %251 = vector.broadcast %250 : vector<1x128xf32> to vector<16x128xf32>
    %252 = arith.mulf %251, %249 : vector<16x128xf32>
    %253 = arith.addf %247, %252 : vector<16x128xf32>
    %254 = vector.extract_strided_slice %216 {offsets = [112, 0], sizes = [16, 128], strides = [1, 1]} : vector<144x128xf32> to vector<16x128xf32>
    %c120_i32_115 = arith.constant 120 : i32
    %255 = tpu.dynamic_rotate %254 by %c120_i32_115 dim 1 : vector<16x128xf32>, i32 -> vector<16x128xf32>
    %c7_116 = arith.constant 7 : index
    %c0_117 = arith.constant 0 : index
    %256 = vector.load %arg16[%c7_116, %c0_117] : memref<9x128xf32, #tpu.memory_space<vmem>>, vector<1x128xf32>
    %257 = vector.broadcast %256 : vector<1x128xf32> to vector<16x128xf32>
    %258 = arith.mulf %257, %255 : vector<16x128xf32>
    %259 = arith.addf %253, %258 : vector<16x128xf32>
    %260 = vector.extract_strided_slice %216 {offsets = [128, 0], sizes = [16, 128], strides = [1, 1]} : vector<144x128xf32> to vector<16x128xf32>
    %c119_i32_118 = arith.constant 119 : i32
    %261 = tpu.dynamic_rotate %260 by %c119_i32_118 dim 1 : vector<16x128xf32>, i32 -> vector<16x128xf32>
    %c8_119 = arith.constant 8 : index
    %c0_120 = arith.constant 0 : index
    %262 = vector.load %arg16[%c8_119, %c0_120] : memref<9x128xf32, #tpu.memory_space<vmem>>, vector<1x128xf32>
    %263 = vector.broadcast %262 : vector<1x128xf32> to vector<16x128xf32>
    %264 = arith.mulf %263, %261 : vector<16x128xf32>
    %265 = arith.addf %259, %264 : vector<16x128xf32>
    %c0_121 = arith.constant 0 : index
    %c0_122 = arith.constant 0 : index
    %266 = vector.load %arg15[%c0_121, %c0_122] : memref<16x1xf32, #tpu.memory_space<vmem>>, vector<16x1xf32>
    %267 = vector.broadcast %266 : vector<16x1xf32> to vector<16x128xf32>
    %268 = arith.addf %265, %267 : vector<16x128xf32>
    %cst_123 = arith.constant 0.000000e+00 : f32
    %269 = vector.broadcast %cst_123 : f32 to vector<16x128xf32>
    %270 = arith.cmpf oge, %268, %269 : vector<16x128xf32>
    %cst_124 = arith.constant 2.000000e-01 : f32
    %271 = vector.broadcast %cst_124 : f32 to vector<16x128xf32>
    %272 = arith.mulf %271, %268 : vector<16x128xf32>
    %273 = arith.select %270, %268, %272 : vector<16x128xi1>, vector<16x128xf32>
    %274 = arith.truncf %273 : vector<16x128xf32> to vector<16x128xbf16>
    %c0_125 = arith.constant 0 : index
    %c0_126 = arith.constant 0 : index
    %275 = vector.load %arg17[%c0_125, %c0_126] : memref<128x32xbf16, #tpu.memory_space<vmem>>, vector<128x32xbf16>
    %cst_127 = arith.constant dense<0.000000e+00> : vector<16x32xf32>
    %276 = tpu.matmul %274, %275, %cst_127 {dimension_numbers = #tpu.dot_dimension_numbers<[1], [0], [0], [1], [0, 0, 1, 1], [], []>} : vector<16x128xbf16>, vector<128x32xbf16>, vector<16x32xf32> -> vector<16x32xf32>
    %277 = vector.extract_strided_slice %276 {offsets = [0, 0], sizes = [16, 16], strides = [1, 1]} : vector<16x32xf32> to vector<16x16xf32>
    %278 = vector.extract_strided_slice %276 {offsets = [0, 16], sizes = [16, 16], strides = [1, 1]} : vector<16x32xf32> to vector<16x16xf32>
    %279 = arith.addf %277, %278 : vector<16x16xf32>
    %cst_128 = arith.constant 5.000000e-01 : f32
    %280 = vector.broadcast %cst_128 : f32 to vector<16x16xf32>
    %281 = arith.mulf %279, %280 : vector<16x16xf32>
    %282 = arith.subf %277, %281 : vector<16x16xf32>
    %283 = arith.mulf %282, %282 : vector<16x16xf32>
    %284 = arith.subf %278, %281 : vector<16x16xf32>
    %285 = arith.mulf %284, %284 : vector<16x16xf32>
    %286 = arith.addf %283, %285 : vector<16x16xf32>
    %cst_129 = arith.constant 1.000000e+00 : f32
    %287 = vector.broadcast %cst_129 : f32 to vector<16x16xf32>
    %288 = arith.mulf %286, %287 : vector<16x16xf32>
    %289 = math.sqrt %288 : vector<16x16xf32>
    %290 = vector.shape_cast %289 : vector<16x16xf32> to vector<1x16x16xf32>
    %cst_130 = arith.constant dense<0.000000e+00> : vector<1xf32>
    %291 = vector.multi_reduction <add>, %290, %cst_130 [1, 2] : vector<1x16x16xf32> to vector<1xf32>
    %292 = vector.shape_cast %291 : vector<1xf32> to vector<1x1x1xf32>
    %293 = vector.extract %292[0, 0, 0] : f32 from vector<1x1x1xf32>
    %294 = vector.broadcast %293 : f32 to vector<1x1xf32>
    %cst_131 = arith.constant 2.560000e+02 : f32
    %295 = vector.broadcast %cst_131 : f32 to vector<1x1xf32>
    %296 = arith.divf %294, %295 : vector<1x1xf32>
    %c0_132 = arith.constant 0 : index
    %c0_133 = arith.constant 0 : index
    %297 = vector.load %arg20[%c0_132, %c0_133] : memref<144x16xbf16, #tpu.memory_space<vmem>>, vector<144x16xbf16>
    %298 = arith.truncf %276 : vector<16x32xf32> to vector<16x32xbf16>
    %cst_134 = arith.constant dense<0.000000e+00> : vector<144x32xf32>
    %299 = tpu.matmul %297, %298, %cst_134 {dimension_numbers = #tpu.dot_dimension_numbers<[1], [0], [0], [1], [0, 0, 1, 1], [], []>} : vector<144x16xbf16>, vector<16x32xbf16>, vector<144x32xf32> -> vector<144x32xf32>
    %300 = vector.extract_strided_slice %299 {offsets = [0, 0], sizes = [16, 32], strides = [1, 1]} : vector<144x32xf32> to vector<16x32xf32>
    %301 = arith.truncf %300 : vector<16x32xf32> to vector<16x32xbf16>
    %c0_135 = arith.constant 0 : index
    %c0_136 = arith.constant 0 : index
    %c0_137 = arith.constant 0 : index
    %302 = vector.load %arg18[%c0_135, %c0_136, %c0_137] : memref<9x32x32xbf16, #tpu.memory_space<vmem>>, vector<1x32x32xbf16>
    %303 = vector.shape_cast %302 : vector<1x32x32xbf16> to vector<32x32xbf16>
    %cst_138 = arith.constant dense<0.000000e+00> : vector<16x32xf32>
    %304 = tpu.matmul %301, %303, %cst_138 {dimension_numbers = #tpu.dot_dimension_numbers<[1], [0], [0], [1], [0, 0, 1, 1], [], []>} : vector<16x32xbf16>, vector<32x32xbf16>, vector<16x32xf32> -> vector<16x32xf32>
    %305 = vector.extract_strided_slice %299 {offsets = [16, 0], sizes = [16, 32], strides = [1, 1]} : vector<144x32xf32> to vector<16x32xf32>
    %306 = arith.truncf %305 : vector<16x32xf32> to vector<16x32xbf16>
    %c1_139 = arith.constant 1 : index
    %c0_140 = arith.constant 0 : index
    %c0_141 = arith.constant 0 : index
    %307 = vector.load %arg18[%c1_139, %c0_140, %c0_141] : memref<9x32x32xbf16, #tpu.memory_space<vmem>>, vector<1x32x32xbf16>
    %308 = vector.shape_cast %307 : vector<1x32x32xbf16> to vector<32x32xbf16>
    %cst_142 = arith.constant dense<0.000000e+00> : vector<16x32xf32>
    %309 = tpu.matmul %306, %308, %cst_142 {dimension_numbers = #tpu.dot_dimension_numbers<[1], [0], [0], [1], [0, 0, 1, 1], [], []>} : vector<16x32xbf16>, vector<32x32xbf16>, vector<16x32xf32> -> vector<16x32xf32>
    %310 = arith.addf %304, %309 : vector<16x32xf32>
    %311 = vector.extract_strided_slice %299 {offsets = [32, 0], sizes = [16, 32], strides = [1, 1]} : vector<144x32xf32> to vector<16x32xf32>
    %312 = arith.truncf %311 : vector<16x32xf32> to vector<16x32xbf16>
    %c2_143 = arith.constant 2 : index
    %c0_144 = arith.constant 0 : index
    %c0_145 = arith.constant 0 : index
    %313 = vector.load %arg18[%c2_143, %c0_144, %c0_145] : memref<9x32x32xbf16, #tpu.memory_space<vmem>>, vector<1x32x32xbf16>
    %314 = vector.shape_cast %313 : vector<1x32x32xbf16> to vector<32x32xbf16>
    %cst_146 = arith.constant dense<0.000000e+00> : vector<16x32xf32>
    %315 = tpu.matmul %312, %314, %cst_146 {dimension_numbers = #tpu.dot_dimension_numbers<[1], [0], [0], [1], [0, 0, 1, 1], [], []>} : vector<16x32xbf16>, vector<32x32xbf16>, vector<16x32xf32> -> vector<16x32xf32>
    %316 = arith.addf %310, %315 : vector<16x32xf32>
    %317 = vector.extract_strided_slice %299 {offsets = [48, 0], sizes = [16, 32], strides = [1, 1]} : vector<144x32xf32> to vector<16x32xf32>
    %318 = arith.truncf %317 : vector<16x32xf32> to vector<16x32xbf16>
    %c3_147 = arith.constant 3 : index
    %c0_148 = arith.constant 0 : index
    %c0_149 = arith.constant 0 : index
    %319 = vector.load %arg18[%c3_147, %c0_148, %c0_149] : memref<9x32x32xbf16, #tpu.memory_space<vmem>>, vector<1x32x32xbf16>
    %320 = vector.shape_cast %319 : vector<1x32x32xbf16> to vector<32x32xbf16>
    %cst_150 = arith.constant dense<0.000000e+00> : vector<16x32xf32>
    %321 = tpu.matmul %318, %320, %cst_150 {dimension_numbers = #tpu.dot_dimension_numbers<[1], [0], [0], [1], [0, 0, 1, 1], [], []>} : vector<16x32xbf16>, vector<32x32xbf16>, vector<16x32xf32> -> vector<16x32xf32>
    %322 = arith.addf %316, %321 : vector<16x32xf32>
    %323 = vector.extract_strided_slice %299 {offsets = [64, 0], sizes = [16, 32], strides = [1, 1]} : vector<144x32xf32> to vector<16x32xf32>
    %324 = arith.truncf %323 : vector<16x32xf32> to vector<16x32xbf16>
    %c4 = arith.constant 4 : index
    %c0_151 = arith.constant 0 : index
    %c0_152 = arith.constant 0 : index
    %325 = vector.load %arg18[%c4, %c0_151, %c0_152] : memref<9x32x32xbf16, #tpu.memory_space<vmem>>, vector<1x32x32xbf16>
    %326 = vector.shape_cast %325 : vector<1x32x32xbf16> to vector<32x32xbf16>
    %cst_153 = arith.constant dense<0.000000e+00> : vector<16x32xf32>
    %327 = tpu.matmul %324, %326, %cst_153 {dimension_numbers = #tpu.dot_dimension_numbers<[1], [0], [0], [1], [0, 0, 1, 1], [], []>} : vector<16x32xbf16>, vector<32x32xbf16>, vector<16x32xf32> -> vector<16x32xf32>
    %328 = arith.addf %322, %327 : vector<16x32xf32>
    %329 = vector.extract_strided_slice %299 {offsets = [80, 0], sizes = [16, 32], strides = [1, 1]} : vector<144x32xf32> to vector<16x32xf32>
    %330 = arith.truncf %329 : vector<16x32xf32> to vector<16x32xbf16>
    %c5_154 = arith.constant 5 : index
    %c0_155 = arith.constant 0 : index
    %c0_156 = arith.constant 0 : index
    %331 = vector.load %arg18[%c5_154, %c0_155, %c0_156] : memref<9x32x32xbf16, #tpu.memory_space<vmem>>, vector<1x32x32xbf16>
    %332 = vector.shape_cast %331 : vector<1x32x32xbf16> to vector<32x32xbf16>
    %cst_157 = arith.constant dense<0.000000e+00> : vector<16x32xf32>
    %333 = tpu.matmul %330, %332, %cst_157 {dimension_numbers = #tpu.dot_dimension_numbers<[1], [0], [0], [1], [0, 0, 1, 1], [], []>} : vector<16x32xbf16>, vector<32x32xbf16>, vector<16x32xf32> -> vector<16x32xf32>
    %334 = arith.addf %328, %333 : vector<16x32xf32>
    %335 = vector.extract_strided_slice %299 {offsets = [96, 0], sizes = [16, 32], strides = [1, 1]} : vector<144x32xf32> to vector<16x32xf32>
    %336 = arith.truncf %335 : vector<16x32xf32> to vector<16x32xbf16>
    %c6_158 = arith.constant 6 : index
    %c0_159 = arith.constant 0 : index
    %c0_160 = arith.constant 0 : index
    %337 = vector.load %arg18[%c6_158, %c0_159, %c0_160] : memref<9x32x32xbf16, #tpu.memory_space<vmem>>, vector<1x32x32xbf16>
    %338 = vector.shape_cast %337 : vector<1x32x32xbf16> to vector<32x32xbf16>
    %cst_161 = arith.constant dense<0.000000e+00> : vector<16x32xf32>
    %339 = tpu.matmul %336, %338, %cst_161 {dimension_numbers = #tpu.dot_dimension_numbers<[1], [0], [0], [1], [0, 0, 1, 1], [], []>} : vector<16x32xbf16>, vector<32x32xbf16>, vector<16x32xf32> -> vector<16x32xf32>
    %340 = arith.addf %334, %339 : vector<16x32xf32>
    %341 = vector.extract_strided_slice %299 {offsets = [112, 0], sizes = [16, 32], strides = [1, 1]} : vector<144x32xf32> to vector<16x32xf32>
    %342 = arith.truncf %341 : vector<16x32xf32> to vector<16x32xbf16>
    %c7_162 = arith.constant 7 : index
    %c0_163 = arith.constant 0 : index
    %c0_164 = arith.constant 0 : index
    %343 = vector.load %arg18[%c7_162, %c0_163, %c0_164] : memref<9x32x32xbf16, #tpu.memory_space<vmem>>, vector<1x32x32xbf16>
    %344 = vector.shape_cast %343 : vector<1x32x32xbf16> to vector<32x32xbf16>
    %cst_165 = arith.constant dense<0.000000e+00> : vector<16x32xf32>
    %345 = tpu.matmul %342, %344, %cst_165 {dimension_numbers = #tpu.dot_dimension_numbers<[1], [0], [0], [1], [0, 0, 1, 1], [], []>} : vector<16x32xbf16>, vector<32x32xbf16>, vector<16x32xf32> -> vector<16x32xf32>
    %346 = arith.addf %340, %345 : vector<16x32xf32>
    %347 = vector.extract_strided_slice %299 {offsets = [128, 0], sizes = [16, 32], strides = [1, 1]} : vector<144x32xf32> to vector<16x32xf32>
    %348 = arith.truncf %347 : vector<16x32xf32> to vector<16x32xbf16>
    %c8_166 = arith.constant 8 : index
    %c0_167 = arith.constant 0 : index
    %c0_168 = arith.constant 0 : index
    %349 = vector.load %arg18[%c8_166, %c0_167, %c0_168] : memref<9x32x32xbf16, #tpu.memory_space<vmem>>, vector<1x32x32xbf16>
    %350 = vector.shape_cast %349 : vector<1x32x32xbf16> to vector<32x32xbf16>
    %cst_169 = arith.constant dense<0.000000e+00> : vector<16x32xf32>
    %351 = tpu.matmul %348, %350, %cst_169 {dimension_numbers = #tpu.dot_dimension_numbers<[1], [0], [0], [1], [0, 0, 1, 1], [], []>} : vector<16x32xbf16>, vector<32x32xbf16>, vector<16x32xf32> -> vector<16x32xf32>
    %352 = arith.addf %346, %351 : vector<16x32xf32>
    %c0_170 = arith.constant 0 : index
    %c0_171 = arith.constant 0 : index
    %353 = vector.load %arg21[%c0_170, %c0_171] : memref<16x9xf32, #tpu.memory_space<vmem>>, vector<16x9xf32>
    %c0_172 = arith.constant 0 : index
    %c0_173 = arith.constant 0 : index
    %354 = vector.load %arg19[%c0_172, %c0_173] : memref<9x32xf32, #tpu.memory_space<vmem>>, vector<9x32xf32>
    %cst_174 = arith.constant dense<0.000000e+00> : vector<16x32xf32>
    %355 = tpu.matmul %353, %354, %cst_174 {dimension_numbers = #tpu.dot_dimension_numbers<[1], [0], [0], [1], [0, 0, 1, 1], [], []>} : vector<16x9xf32>, vector<9x32xf32>, vector<16x32xf32> -> vector<16x32xf32>
    %356 = vector.broadcast %296 : vector<1x1xf32> to vector<16x32xf32>
    %357 = arith.mulf %356, %355 : vector<16x32xf32>
    %358 = arith.addf %352, %357 : vector<16x32xf32>
    %c0_175 = arith.constant 0 : index
    %c0_176 = arith.constant 0 : index
    %359 = vector.load %arg22[%c0_175, %c0_176] : memref<16x1xf32, #tpu.memory_space<vmem>>, vector<16x1xf32>
    %360 = vector.broadcast %359 : vector<16x1xf32> to vector<16x32xf32>
    %361 = arith.addf %358, %360 : vector<16x32xf32>
    %cst_177 = arith.constant 0.000000e+00 : f32
    %362 = vector.broadcast %cst_177 : f32 to vector<16x32xf32>
    %363 = arith.cmpf oge, %361, %362 : vector<16x32xf32>
    %cst_178 = arith.constant 2.000000e-01 : f32
    %364 = vector.broadcast %cst_178 : f32 to vector<16x32xf32>
    %365 = arith.mulf %364, %361 : vector<16x32xf32>
    %366 = arith.select %363, %361, %365 : vector<16x32xi1>, vector<16x32xf32>
    %c0_179 = arith.constant 0 : index
    %c0_180 = arith.constant 0 : index
    %c0_181 = arith.constant 0 : index
    %367 = vector.load %arg23[%c0_179, %c0_180, %c0_181] : memref<16x16x16xf32, #tpu.memory_space<vmem>>, vector<16x16x16xf32>
    %c0_182 = arith.constant 0 : index
    %c0_183 = arith.constant 0 : index
    %368 = vector.load %arg27[%c0_182, %c0_183] : memref<2x2xf32, #tpu.memory_space<vmem>>, vector<2x2xf32>
    %369 = vector.extract_strided_slice %366 {offsets = [0, 0], sizes = [16, 16], strides = [1, 1]} : vector<16x32xf32> to vector<16x16xf32>
    %370 = vector.shape_cast %369 : vector<16x16xf32> to vector<1x16x16xf32>
    %371 = vector.broadcast %370 : vector<1x16x16xf32> to vector<16x16x16xf32>
    %372 = arith.mulf %367, %371 : vector<16x16x16xf32>
    %cst_184 = arith.constant dense<0.000000e+00> : vector<16x16xf32>
    %373 = vector.multi_reduction <add>, %372, %cst_184 [2] : vector<16x16x16xf32> to vector<16x16xf32>
    %cst_185 = arith.constant dense<0.000000e+00> : vector<16xf32>
    %374 = vector.multi_reduction <add>, %373, %cst_185 [1] : vector<16x16xf32> to vector<16xf32>
    %375 = vector.shape_cast %374 : vector<16xf32> to vector<16x1xf32>
    %376 = vector.extract_strided_slice %368 {offsets = [0, 0], sizes = [1, 2], strides = [1, 1]} : vector<2x2xf32> to vector<1x2xf32>
    %377 = vector.broadcast %375 : vector<16x1xf32> to vector<16x2xf32>
    %378 = vector.broadcast %376 : vector<1x2xf32> to vector<16x2xf32>
    %379 = arith.mulf %377, %378 : vector<16x2xf32>
    %380 = vector.extract_strided_slice %366 {offsets = [0, 16], sizes = [16, 16], strides = [1, 1]} : vector<16x32xf32> to vector<16x16xf32>
    %381 = vector.shape_cast %380 : vector<16x16xf32> to vector<1x16x16xf32>
    %382 = vector.broadcast %381 : vector<1x16x16xf32> to vector<16x16x16xf32>
    %383 = arith.mulf %367, %382 : vector<16x16x16xf32>
    %cst_186 = arith.constant dense<0.000000e+00> : vector<16x16xf32>
    %384 = vector.multi_reduction <add>, %383, %cst_186 [2] : vector<16x16x16xf32> to vector<16x16xf32>
    %cst_187 = arith.constant dense<0.000000e+00> : vector<16xf32>
    %385 = vector.multi_reduction <add>, %384, %cst_187 [1] : vector<16x16xf32> to vector<16xf32>
    %386 = vector.shape_cast %385 : vector<16xf32> to vector<16x1xf32>
    %387 = vector.extract_strided_slice %368 {offsets = [1, 0], sizes = [1, 2], strides = [1, 1]} : vector<2x2xf32> to vector<1x2xf32>
    %388 = vector.broadcast %386 : vector<16x1xf32> to vector<16x2xf32>
    %389 = vector.broadcast %387 : vector<1x2xf32> to vector<16x2xf32>
    %390 = arith.mulf %388, %389 : vector<16x2xf32>
    %391 = arith.addf %379, %390 : vector<16x2xf32>
    %c0_188 = arith.constant 0 : index
    %c0_189 = arith.constant 0 : index
    %392 = vector.load %arg24[%c0_188, %c0_189] : memref<16x1xf32, #tpu.memory_space<vmem>>, vector<16x1xf32>
    %393 = vector.broadcast %392 : vector<16x1xf32> to vector<16x2xf32>
    %394 = arith.addf %391, %393 : vector<16x2xf32>
    %cst_190 = arith.constant 0.000000e+00 : f32
    %395 = vector.broadcast %cst_190 : f32 to vector<16x2xf32>
    %396 = arith.cmpf oge, %394, %395 : vector<16x2xf32>
    %cst_191 = arith.constant 2.000000e-01 : f32
    %397 = vector.broadcast %cst_191 : f32 to vector<16x2xf32>
    %398 = arith.mulf %397, %394 : vector<16x2xf32>
    %399 = arith.select %396, %394, %398 : vector<16x2xi1>, vector<16x2xf32>
    %c0_192 = arith.constant 0 : index
    %c0_193 = arith.constant 0 : index
    %400 = vector.load %arg25[%c0_192, %c0_193] : memref<1x16xf32, #tpu.memory_space<vmem>>, vector<1x16xf32>
    %cst_194 = arith.constant dense<0.000000e+00> : vector<1x2xf32>
    %401 = tpu.matmul %400, %399, %cst_194 {dimension_numbers = #tpu.dot_dimension_numbers<[1], [0], [0], [1], [0, 0, 1, 1], [], []>} : vector<1x16xf32>, vector<16x2xf32>, vector<1x2xf32> -> vector<1x2xf32>
    %c0_195 = arith.constant 0 : index
    %c0_196 = arith.constant 0 : index
    %402 = vector.load %arg26[%c0_195, %c0_196] : memref<1x1xf32, #tpu.memory_space<vmem>>, vector<1x1xf32>
    %403 = vector.broadcast %402 : vector<1x1xf32> to vector<1x2xf32>
    %404 = arith.addf %401, %403 : vector<1x2xf32>
    %c0_197 = arith.constant 0 : index
    %c0_198 = arith.constant 0 : index
    %405 = vector.load %arg28[%c0_197, %c0_198] : memref<1x2xf32, #tpu.memory_space<vmem>>, vector<1x2xf32>
    tpu.vector_store %arg28[%c0_197, %c0_198], %404 {strides = array<i32>} : memref<1x2xf32, #tpu.memory_space<vmem>>, vector<1x2xf32>,
    return
  }
}

</mosaic_0001>

<llo_original>
// kernel: squeeze.6
$region0: #{squeeze.6}
  %s0 = inlined_call_operand.vmem [shape: f32[3,3,16], index: 0, kind: input, shape index: {}]
  %s1 = inlined_call_operand.vmem [shape: f32[9,16], index: 1, kind: output, shape index: {}]
  $region1: #{squeeze.6} parent=0
    #allocation0 [shape = 'u8[12288]{0}', space=vmem, size = 0x3000, scoped, tag = 'scoped mem for input reshape']
    %s3 = sshll.u32 1, 4
    %s4 = ssub.s32 %s3, 1
    %s5 = smul.addr 4, 2
    %s6 = scalar_lea.vmem %s0, %s5
    %v7 = vld [vmem:[%s6] sm:%s4]
    %s8 = scalar_lea.vmem [#allocation0], 16
    %9 = vst [vmem:[%s8] sm:%s4] %v7
    %s10 = scalar_lea.vmem %s0, 4
    %v11 = vld [vmem:[%s10] sm:%s4]
    %s12 = scalar_lea.vmem [#allocation0], 8
    %13 = vst [vmem:[%s12] sm:%s4] %v11
    %v14 = vld [vmem:[%s0] sm:%s4]
    %15 = vst [vmem:[#allocation0] sm:%s4] %v14
    %v16 = vld [vmem:[#allocation0] sm:$0x7]
    %vm17 = vcmask 130048
    %18 = vst.msk [vmem:[%s1] sm:$0x7] %vm17, %v16
    %s19 = scalar_lea.vmem [#allocation0], 8
    %v20 = vld [vmem:[%s19] sm:$0x7]
    %vm21 = vcmask 130048
    %s22 = scalar_lea.vmem %s1, 3
    %23 = vst.msk [vmem:[%s22] sm:$0x7] %vm21, %v20
    %s24 = scalar_lea.vmem [#allocation0], 16
    %v25 = vld [vmem:[%s24] sm:$0x7]
    %vm26 = vcmask 130048
    %s27 = scalar_lea.vmem %s1, 6
    %28 = vst.msk [vmem:[%s27] sm:$0x7] %vm26, %v25

// kernel: discriminator_forward.1
$region0: #{discriminator_forward.1}
  #allocation0 [shape = 'u32[]', space=smem, size = 0x4, offset = 0x4, fixed_abs, tag = 'smem constant byte address 0x4 - core index']
  #allocation1 [shape = 'u32[144,128]{1,0:T(1,128)}', space=vmem, size = 0x12000, scoped, tag = 'internal scratch']
  #allocation2 [shape = 'f32[1,1]{1,0:T(1,128)S(6)}', space=smem, size = 0x200, scoped, tag = 'scoped memory for discriminator_forward.1']
  #allocation3 [shape = 'f32[1,1]{1,0:T(1,128)S(1)}', space=vmem, size = 0x200, scoped, tag = 'scoped memory for discriminator_forward.1']
  %s0 = inlined_call_operand.<no memory space> [shape: f32[1,1], index: 0, kind: input, shape index: {}]
  %s1 = inlined_call_operand.vmem [shape: bf16[3,512], index: 1, kind: input, shape index: {}]
  %s2 = inlined_call_operand.vmem [shape: bf16[8,3], index: 2, kind: input, shape index: {}]
  %s3 = inlined_call_operand.vmem [shape: f32[8,1], index: 3, kind: input, shape index: {}]
  %s4 = inlined_call_operand.vmem [shape: bf16[16,3], index: 4, kind: input, shape index: {}]
  %s5 = inlined_call_operand.vmem [shape: f32[16,1], index: 5, kind: input, shape index: {}]
  %s6 = inlined_call_operand.vmem [shape: bf16[144,8], index: 6, kind: input, shape index: {}]
  %s7 = inlined_call_operand.vmem [shape: f32[16,1], index: 7, kind: input, shape index: {}]
  %s8 = inlined_call_operand.vmem [shape: bf16[144,16], index: 8, kind: input, shape index: {}]
  %s9 = inlined_call_operand.vmem [shape: f32[16,1], index: 9, kind: input, shape index: {}]
  %s10 = inlined_call_operand.vmem [shape: f32[9,512], index: 10, kind: input, shape index: {}]
  %s11 = inlined_call_operand.vmem [shape: bf16[512,128], index: 11, kind: input, shape index: {}]
  %s12 = inlined_call_operand.vmem [shape: bf16[144,16], index: 12, kind: input, shape index: {}]
  %s13 = inlined_call_operand.vmem [shape: f32[16,1], index: 13, kind: input, shape index: {}]
  %s14 = inlined_call_operand.vmem [shape: bf16[144,16], index: 14, kind: input, shape index: {}]
  %s15 = inlined_call_operand.vmem [shape: f32[16,1], index: 15, kind: input, shape index: {}]
  %s16 = inlined_call_operand.vmem [shape: f32[9,128], index: 16, kind: input, shape index: {}]
  %s17 = inlined_call_operand.vmem [shape: bf16[128,32], index: 17, kind: input, shape index: {}]
  %s18 = inlined_call_operand.vmem [shape: bf16[9,32,32], index: 18, kind: input, shape index: {}]
  %s19 = inlined_call_operand.vmem [shape: f32[9,32], index: 19, kind: input, shape index: {}]
  %s20 = inlined_call_operand.vmem [shape: bf16[144,16], index: 20, kind: input, shape index: {}]
  %s21 = inlined_call_operand.vmem [shape: f32[16,9], index: 21, kind: input, shape index: {}]
  %s22 = inlined_call_operand.vmem [shape: f32[16,1], index: 22, kind: input, shape index: {}]
  %s23 = inlined_call_operand.vmem [shape: f32[16,16,16], index: 23, kind: input, shape index: {}]
  %s24 = inlined_call_operand.vmem [shape: f32[16,1], index: 24, kind: input, shape index: {}]
  %s25 = inlined_call_operand.vmem [shape: f32[1,16], index: 25, kind: input, shape index: {}]
  %s26 = inlined_call_operand.<no memory space> [shape: f32[1,1], index: 26, kind: input, shape index: {}]
  %s27 = inlined_call_operand.vmem [shape: f32[2,2], index: 27, kind: input, shape index: {}]
  %s28 = inlined_call_operand.hbm [shape: f32[1,2], index: 28, kind: output, shape index: {}]
  %s29 = sld [smem:[#allocation0]]
  $region122: #{discriminator_forward.1} parent=0
    _
  %s31 = ssub.s32 1, %s29
  %s32 = scalar_select 0, %s31, %s29
  %33 = sst [smem:[#allocation2]] %s0
  %v34 = vstv %s26
  %35 = vst [vmem:[#allocation3] sm:$0x1] %v34
  $region1: #{discriminator_forward.1} parent=0
    #allocation4 [shape = 'u8[512]{0}', space=vmem, size = 0x400, scoped, tag = 'output window, operand 0, single buffered']
    #allocation5 [shape = 's32[1]{0}', space=sflag, size = 0x4, scoped, tag = 'scoped memory for discriminator_forward.1']
    %36 = vsyncpa [#allocation5], 0
    // Predicated region
    $region2: #{discriminator_forward.1} parent=1 // pred_check
      _
    $region3: #{discriminator_forward.1} parent=1 // pred_check_branch
      %38 = sbr.rel (0) target = $region5
    $region4: #{discriminator_forward.1} parent=1 // pred_region
      _
    $region5: #{discriminator_forward.1} parent=1 // pred_fallthru
      _
    // Predicated region
    $region6: #{discriminator_forward.1} parent=1 // pred_check
      _
    $region7: #{discriminator_forward.1} parent=1 // pred_check_branch
      %40 = sbr.rel (0) target = $region9
    $region8: #{discriminator_forward.1} parent=1 // pred_region
      _
    $region9: #{discriminator_forward.1} parent=1 // pred_fallthru
      _
    // Predicated region
    $region10: #{discriminator_forward.1} parent=1 // pred_check
      _
    $region11: #{discriminator_forward.1} parent=1 // pred_check_branch
      %42 = sbr.rel (0) target = $region13
    $region12: #{discriminator_forward.1} parent=1 // pred_region
      _
    $region13: #{discriminator_forward.1} parent=1 // pred_fallthru
      _
    // Predicated region
    $region14: #{discriminator_forward.1} parent=1 // pred_check
      _
    $region15: #{discriminator_forward.1} parent=1 // pred_check_branch
      %44 = sbr.rel (0) target = $region17
    $region16: #{discriminator_forward.1} parent=1 // pred_region
      _
    $region17: #{discriminator_forward.1} parent=1 // pred_fallthru
      _
    // Predicated region
    $region18: #{discriminator_forward.1} parent=1 // pred_check
      _
    $region19: #{discriminator_forward.1} parent=1 // pred_check_branch
      %46 = sbr.rel (0) target = $region21
    $region20: #{discriminator_forward.1} parent=1 // pred_region
      _
    $region21: #{discriminator_forward.1} parent=1 // pred_fallthru
      _
    // Predicated region
    $region22: #{discriminator_forward.1} parent=1 // pred_check
      _
    $region23: #{discriminator_forward.1} parent=1 // pred_check_branch
      %48 = sbr.rel (0) target = $region25
    $region24: #{discriminator_forward.1} parent=1 // pred_region
      _
    $region25: #{discriminator_forward.1} parent=1 // pred_fallthru
      _
    // Predicated region
    $region26: #{discriminator_forward.1} parent=1 // pred_check
      _
    $region27: #{discriminator_forward.1} parent=1 // pred_check_branch
      %50 = sbr.rel (0) target = $region29
    $region28: #{discriminator_forward.1} parent=1 // pred_region
      _
    $region29: #{discriminator_forward.1} parent=1 // pred_fallthru
      _
    // Predicated region
    $region30: #{discriminator_forward.1} parent=1 // pred_check
      _
    $region31: #{discriminator_forward.1} parent=1 // pred_check_branch
      %52 = sbr.rel (0) target = $region33
    $region32: #{discriminator_forward.1} parent=1 // pred_region
      _
    $region33: #{discriminator_forward.1} parent=1 // pred_fallthru
      _
    // Predicated region
    $region34: #{discriminator_forward.1} parent=1 // pred_check
      _
    $region35: #{discriminator_forward.1} parent=1 // pred_check_branch
      %54 = sbr.rel (0) target = $region37
    $region36: #{discriminator_forward.1} parent=1 // pred_region
      _
    $region37: #{discriminator_forward.1} parent=1 // pred_fallthru
      _
    // Predicated region
    $region38: #{discriminator_forward.1} parent=1 // pred_check
      _
    $region39: #{discriminator_forward.1} parent=1 // pred_check_branch
      %56 = sbr.rel (0) target = $region41
    $region40: #{discriminator_forward.1} parent=1 // pred_region
      _
    $region41: #{discriminator_forward.1} parent=1 // pred_fallthru
      _
    // Predicated region
    $region42: #{discriminator_forward.1} parent=1 // pred_check
      _
    $region43: #{discriminator_forward.1} parent=1 // pred_check_branch
      %58 = sbr.rel (0) target = $region45
    $region44: #{discriminator_forward.1} parent=1 // pred_region
      _
    $region45: #{discriminator_forward.1} parent=1 // pred_fallthru
      _
    // Predicated region
    $region46: #{discriminator_forward.1} parent=1 // pred_check
      _
    $region47: #{discriminator_forward.1} parent=1 // pred_check_branch
      %60 = sbr.rel (0) target = $region49
    $region48: #{discriminator_forward.1} parent=1 // pred_region
      _
    $region49: #{discriminator_forward.1} parent=1 // pred_fallthru
      _
    // Predicated region
    $region50: #{discriminator_forward.1} parent=1 // pred_check
      _
    $region51: #{discriminator_forward.1} parent=1 // pred_check_branch
      %62 = sbr.rel (0) target = $region53
    $region52: #{discriminator_forward.1} parent=1 // pred_region
      _
    $region53: #{discriminator_forward.1} parent=1 // pred_fallthru
      _
    // Predicated region
    $region54: #{discriminator_forward.1} parent=1 // pred_check
      _
    $region55: #{discriminator_forward.1} parent=1 // pred_check_branch
      %64 = sbr.rel (0) target = $region57
    $region56: #{discriminator_forward.1} parent=1 // pred_region
      _
    $region57: #{discriminator_forward.1} parent=1 // pred_fallthru
      _
    // Predicated region
    $region58: #{discriminator_forward.1} parent=1 // pred_check
      _
    $region59: #{discriminator_forward.1} parent=1 // pred_check_branch
      %66 = sbr.rel (0) target = $region61
    $region60: #{discriminator_forward.1} parent=1 // pred_region
      _
    $region61: #{discriminator_forward.1} parent=1 // pred_fallthru
      _
    // Predicated region
    $region62: #{discriminator_forward.1} parent=1 // pred_check
      _
    $region63: #{discriminator_forward.1} parent=1 // pred_check_branch
      %68 = sbr.rel (0) target = $region65
    $region64: #{discriminator_forward.1} parent=1 // pred_region
      _
    $region65: #{discriminator_forward.1} parent=1 // pred_fallthru
      _
    // Predicated region
    $region66: #{discriminator_forward.1} parent=1 // pred_check
      _
    $region67: #{discriminator_forward.1} parent=1 // pred_check_branch
      %70 = sbr.rel (0) target = $region69
    $region68: #{discriminator_forward.1} parent=1 // pred_region
      _
    $region69: #{discriminator_forward.1} parent=1 // pred_fallthru
      _
    // Predicated region
    $region70: #{discriminator_forward.1} parent=1 // pred_check
      _
    $region71: #{discriminator_forward.1} parent=1 // pred_check_branch
      %72 = sbr.rel (0) target = $region73
    $region72: #{discriminator_forward.1} parent=1 // pred_region
      _
    $region73: #{discriminator_forward.1} parent=1 // pred_fallthru
      _
    // Predicated region
    $region74: #{discriminator_forward.1} parent=1 // pred_check
      _
    $region75: #{discriminator_forward.1} parent=1 // pred_check_branch
      %74 = sbr.rel (0) target = $region77
    $region76: #{discriminator_forward.1} parent=1 // pred_region
      _
    $region77: #{discriminator_forward.1} parent=1 // pred_fallthru
      _
    // Predicated region
    $region78: #{discriminator_forward.1} parent=1 // pred_check
      _
    $region79: #{discriminator_forward.1} parent=1 // pred_check_branch
      %76 = sbr.rel (0) target = $region81
    $region80: #{discriminator_forward.1} parent=1 // pred_region
      _
    $region81: #{discriminator_forward.1} parent=1 // pred_fallthru
      _
    // Predicated region
    $region82: #{discriminator_forward.1} parent=1 // pred_check
      _
    $region83: #{discriminator_forward.1} parent=1 // pred_check_branch
      %78 = sbr.rel (0) target = $region85
    $region84: #{discriminator_forward.1} parent=1 // pred_region
      _
    $region85: #{discriminator_forward.1} parent=1 // pred_fallthru
      _
    // Predicated region
    $region86: #{discriminator_forward.1} parent=1 // pred_check
      _
    $region87: #{discriminator_forward.1} parent=1 // pred_check_branch
      %80 = sbr.rel (0) target = $region89
    $region88: #{discriminator_forward.1} parent=1 // pred_region
      _
    $region89: #{discriminator_forward.1} parent=1 // pred_fallthru
      _
    // Predicated region
    $region90: #{discriminator_forward.1} parent=1 // pred_check
      _
    $region91: #{discriminator_forward.1} parent=1 // pred_check_branch
      %82 = sbr.rel (0) target = $region93
    $region92: #{discriminator_forward.1} parent=1 // pred_region
      _
    $region93: #{discriminator_forward.1} parent=1 // pred_fallthru
      _
    // Predicated region
    $region94: #{discriminator_forward.1} parent=1 // pred_check
      _
    $region95: #{discriminator_forward.1} parent=1 // pred_check_branch
      %84 = sbr.rel (0) target = $region97
    $region96: #{discriminator_forward.1} parent=1 // pred_region
      _
    $region97: #{discriminator_forward.1} parent=1 // pred_fallthru
      _
    // Predicated region
    $region98: #{discriminator_forward.1} parent=1 // pred_check
      _
    $region99: #{discriminator_forward.1} parent=1 // pred_check_branch
      %86 = sbr.rel (0) target = $region101
    $region100: #{discriminator_forward.1} parent=1 // pred_region
      _
    $region101: #{discriminator_forward.1} parent=1 // pred_fallthru
      _
    // Predicated region
    $region102: #{discriminator_forward.1} parent=1 // pred_check
      _
    $region103: #{discriminator_forward.1} parent=1 // pred_check_branch
      %88 = sbr.rel (0) target = $region105
    $region104: #{discriminator_forward.1} parent=1 // pred_region
      _
    $region105: #{discriminator_forward.1} parent=1 // pred_fallthru
      _
    // Predicated region
    $region106: #{discriminator_forward.1} parent=1 // pred_check
      _
    $region107: #{discriminator_forward.1} parent=1 // pred_check_branch
      %90 = sbr.rel (0) target = $region109
    $region108: #{discriminator_forward.1} parent=1 // pred_region
      _
    $region109: #{discriminator_forward.1} parent=1 // pred_fallthru
      _
    // Predicated region
    $region110: #{discriminator_forward.1} parent=1 // pred_check
      _
    $region111: #{discriminator_forward.1} parent=1 // pred_check_branch
      %92 = sbr.rel (0) target = $region113
    $region112: #{discriminator_forward.1} parent=1 // pred_region
      _
    $region113: #{discriminator_forward.1} parent=1 // pred_fallthru
      _
    %v94 = vld [vmem:[%s1] sm:$0xff]
    %v95 = vld [vmem:[%s2] sm:$0xf]
    %v96 = vld [vmem:[%s3] sm:$0xff]
    %98 = vset.pattern.permute.xlu0 0
    %99 = vperm.xlu0 %98, %v96
    %v100 = vpop.permute.xlu0 %99
    %v103 = vcombine.high %v94, %v94
    %v105 = vunpack.c.l.s4 1983009808
    %v106 = vunpack.c.0.s8 %v105
    %v107 = vlaneseq
    %v108 = vshrl.u32 %v107, 7
    %v109 = vsub.s32 %v106, %v108
    %v110 = vrot.slane %v94, %v109
    %v112 = vunpack.c.l.s4 1983009808
    %v113 = vunpack.c.0.s8 %v112
    %v114 = vlaneseq
    %v115 = vshrl.u32 %v114, 7
    %v116 = vsub.s32 %v113, %v115
    %v117 = vrot.slane %v103, %v116
    %v118 = vcombine.high %v110, %v110
    %v119 = vcombine.high %v117, %v117
    %vm120 = vcmask 23552
    %v122 = vsel %vm120, %v95, 0
    %vm124 = vcmask 1040384
    %vm125 = vcmask 1041408
    %v126 = vsel %vm124, 4294967295, 65535
    %v127 = vsel %vm125, %v126, 0
    %v129 = vand.u32 %v110, %v127
    %v132 = vand.u32 %v118, %v127
    %v135 = vand.u32 %v117, %v127
    %v138 = vand.u32 %v119, %v127
    %140 = vmatprep.subr.bf16.mxu0 0
    %141 = vmatpush1.bf16.msra.mxu0 0
    %142 = vmatprep.subr.bf16.mxu0 0
    %143 = vmatpush1.bf16.msra.mxu0 0
    %144 = vmatprep.subr.bf16.mxu0 0
    %145 = vmatpush1.bf16.msra.mxu0 0
    %146 = vmatprep.subr.bf16.mxu0 0
    %147 = vmatpush1.bf16.msra.mxu0 0
    %148 = vmatprep.subr.bf16.mxu0 0
    %149 = vmatpush1.bf16.msra.mxu0 0
    %150 = vmatprep.subr.bf16.mxu0 0
    %151 = vmatpush1.bf16.msra.mxu0 0
    %152 = vmatprep.subr.bf16.mxu0 0
    %153 = vmatpush1.bf16.msra.mxu0 0
    %154 = vmatprep.subr.bf16.mxu0 %v132
    %155 = vmatpush1.bf16.msra.mxu0 %v129
    %156 = vmatprep.subr.bf16.mxu0 0
    %157 = vmatpush2.bf16.msra.mxu0 0
    %158 = vmatprep.subr.bf16.mxu0 0
    %159 = vmatpush2.bf16.msra.mxu0 0
    %160 = vmatprep.subr.bf16.mxu0 0
    %161 = vmatpush2.bf16.msra.mxu0 0
    %162 = vmatprep.subr.bf16.mxu0 0
    %163 = vmatpush2.bf16.msra.mxu0 0
    %164 = vmatprep.subr.bf16.mxu0 0
    %165 = vmatpush2.bf16.msra.mxu0 0
    %166 = vmatprep.subr.bf16.mxu0 0
    %167 = vmatpush2.bf16.msra.mxu0 0
    %168 = vmatprep.subr.bf16.mxu0 0
    %169 = vmatpush2.bf16.msra.mxu0 0
    %170 = vmatprep.subr.bf16.mxu0 0
    %171 = vmatpush2.bf16.msra.mxu0 0
    %172 = vmatprep.mubr.bf16.mxu0 0
    %173 = vmatmul.mubr.bf16.gmra.mxu0 %v122
    %v174 = vpop.f32.mrf.mxu0
    %v175 = vadd.f32 %v100, %v174
    %v176 = vpop.f32.mrf.mxu0
    %v177 = vadd.f32 %v100, %v176
    %v178 = vpop.f32.mrf.mxu0
    %v179 = vpop.f32.mrf.mxu0
    %180 = vdwg.mxu0
    %181 = vmatprep.subr.bf16.mxu0 0
    %182 = vmatpush1.bf16.msra.mxu0 0
    %183 = vmatprep.subr.bf16.mxu0 0
    %184 = vmatpush1.bf16.msra.mxu0 0
    %185 = vmatprep.subr.bf16.mxu0 0
    %186 = vmatpush1.bf16.msra.mxu0 0
    %187 = vmatprep.subr.bf16.mxu0 0
    %188 = vmatpush1.bf16.msra.mxu0 0
    %189 = vmatprep.subr.bf16.mxu0 0
    %190 = vmatpush1.bf16.msra.mxu0 0
    %191 = vmatprep.subr.bf16.mxu0 0
    %192 = vmatpush1.bf16.msra.mxu0 0
    %193 = vmatprep.subr.bf16.mxu0 0
    %194 = vmatpush1.bf16.msra.mxu0 0
    %195 = vmatprep.subr.bf16.mxu0 %v138
    %196 = vmatpush1.bf16.msra.mxu0 %v135
    %197 = vmatprep.subr.bf16.mxu0 0
    %198 = vmatpush2.bf16.msra.mxu0 0
    %199 = vmatprep.subr.bf16.mxu0 0
    %200 = vmatpush2.bf16.msra.mxu0 0
    %201 = vmatprep.subr.bf16.mxu0 0
    %202 = vmatpush2.bf16.msra.mxu0 0
    %203 = vmatprep.subr.bf16.mxu0 0
    %204 = vmatpush2.bf16.msra.mxu0 0
    %205 = vmatprep.subr.bf16.mxu0 0
    %206 = vmatpush2.bf16.msra.mxu0 0
    %207 = vmatprep.subr.bf16.mxu0 0
    %208 = vmatpush2.bf16.msra.mxu0 0
    %209 = vmatprep.subr.bf16.mxu0 0
    %210 = vmatpush2.bf16.msra.mxu0 0
    %211 = vmatprep.subr.bf16.mxu0 0
    %212 = vmatpush2.bf16.msra.mxu0 0
    %213 = vmatprep.mubr.bf16.mxu0 0
    %214 = vmatmul.mubr.bf16.gmra.mxu0 %v122
    %v215 = vpop.f32.mrf.mxu0
    %v216 = vadd.f32 %v100, %v215
    %v217 = vpop.f32.mrf.mxu0
    %v218 = vadd.f32 %v100, %v217
    %v219 = vpop.f32.mrf.mxu0
    %v220 = vpop.f32.mrf.mxu0
    %221 = vdwg.mxu0
    %vm222 = vcmp.ge.f32.partialorder %v175, 0.0
    %vm223 = vcmp.ge.f32.partialorder %v177, 0.0
    %vm224 = vcmp.ge.f32.partialorder %v216, 0.0
    %vm225 = vcmp.ge.f32.partialorder %v218, 0.0
    %v226 = vmul.f32 %v175, 0.2
    %v227 = vmul.f32 %v177, 0.2
    %v228 = vmul.f32 %v216, 0.2
    %v229 = vmul.f32 %v218, 0.2
    %v230 = vsel %vm222, %v175, %v226
    %v231 = vsel %vm223, %v177, %v227
    %v232 = vsel %vm224, %v216, %v228
    %v233 = vsel %vm225, %v218, %v229
    %v234 = vld [vmem:[%s6] sm:$0xf]
    %v235 = vld [vmem:[%s6 + $0x4] sm:$0xf]
    %v236 = vld [vmem:[%s6 + $0x8] sm:$0xf]
    %v237 = vld [vmem:[%s6 + $0xc] sm:$0xf]
    %v238 = vld [vmem:[%s6 + $0x10] sm:$0xf]
    %v239 = vld [vmem:[%s6 + $0x14] sm:$0xf]
    %v240 = vld [vmem:[%s6 + $0x18] sm:$0xf]
    %v241 = vld [vmem:[%s6 + $0x1c] sm:$0xf]
    %v242 = vld [vmem:[%s6 + $0x20] sm:$0xf]
    %v243 = vld [vmem:[%s6 + $0x24] sm:$0xf]
    %v244 = vld [vmem:[%s6 + $0x28] sm:$0xf]
    %v245 = vld [vmem:[%s6 + $0x2c] sm:$0xf]
    %v246 = vld [vmem:[%s6 + $0x30] sm:$0xf]
    %v247 = vld [vmem:[%s6 + $0x34] sm:$0xf]
    %v248 = vld [vmem:[%s6 + $0x38] sm:$0xf]
    %v249 = vld [vmem:[%s6 + $0x3c] sm:$0xf]
    %v250 = vld [vmem:[%s6 + $0x40] sm:$0xf]
    %v251 = vld [vmem:[%s6 + $0x44] sm:$0xf]
    %v252 = vpack.c.bf16 %v230, %v230
    %v253 = vpack.c.bf16 %v231, %v231
    %v254 = vpack.c.bf16 %v232, %v232
    %v255 = vpack.c.bf16 %v233, %v233
    %v274 = vunpack.c.l.b16 %v234
    %v275 = vunpack.c.l.b16 %v235
    %v276 = vunpack.c.l.b16 %v236
    %v277 = vunpack.c.l.b16 %v237
    %v278 = vunpack.c.l.b16 %v238
    %v279 = vunpack.c.l.b16 %v239
    %v280 = vunpack.c.l.b16 %v240
    %v281 = vunpack.c.l.b16 %v241
    %v282 = vunpack.c.l.b16 %v242
    %v283 = vunpack.c.l.b16 %v243
    %v284 = vunpack.c.l.b16 %v244
    %v285 = vunpack.c.l.b16 %v245
    %v286 = vunpack.c.l.b16 %v246
    %v287 = vunpack.c.l.b16 %v247
    %v288 = vunpack.c.l.b16 %v248
    %v289 = vunpack.c.l.b16 %v249
    %v290 = vunpack.c.l.b16 %v250
    %v291 = vunpack.c.l.b16 %v251
    %v292 = vpack.c.b16 %v275, %v274
    %v293 = vpack.c.b16 %v277, %v276
    %v294 = vpack.c.b16 %v279, %v278
    %v295 = vpack.c.b16 %v281, %v280
    %v296 = vpack.c.b16 %v283, %v282
    %v297 = vpack.c.b16 %v285, %v284
    %v298 = vpack.c.b16 %v287, %v286
    %v299 = vpack.c.b16 %v289, %v288
    %v300 = vpack.c.b16 %v291, %v290
    %vm301 = vcmask 64512
    %v303 = vsel %vm301, %v292, 0
    %v306 = vsel %vm301, %v293, 0
    %v309 = vsel %vm301, %v294, 0
    %v312 = vsel %vm301, %v295, 0
    %v315 = vsel %vm301, %v296, 0
    %v318 = vsel %vm301, %v297, 0
    %v321 = vsel %vm301, %v298, 0
    %v324 = vsel %vm301, %v299, 0
    %v327 = vsel %vm301, %v300, 0
    %vm329 = vcmask 1043456
    %v331 = vsel %vm329, %v252, 0
    %v334 = vsel %vm329, %v253, 0
    %v337 = vsel %vm329, %v254, 0
    %v340 = vsel %vm329, %v255, 0
    %342 = vmatprep.subr.bf16.mxu0 0
    %343 = vmatpush1.bf16.msra.mxu0 0
    %344 = vmatprep.subr.bf16.mxu0 0
    %345 = vmatpush1.bf16.msra.mxu0 0
    %346 = vmatprep.subr.bf16.mxu0 0
    %347 = vmatpush1.bf16.msra.mxu0 0
    %348 = vmatprep.subr.bf16.mxu0 0
    %349 = vmatpush1.bf16.msra.mxu0 0
    %350 = vmatprep.subr.bf16.mxu0 0
    %351 = vmatpush1.bf16.msra.mxu0 0
    %352 = vmatprep.subr.bf16.mxu0 0
    %353 = vmatpush1.bf16.msra.mxu0 0
    %354 = vmatprep.subr.bf16.mxu0 0
    %355 = vmatpush1.bf16.msra.mxu0 0
    %356 = vmatprep.subr.bf16.mxu0 %v334
    %357 = vmatpush1.bf16.msra.mxu0 %v331
    %358 = vmatprep.subr.bf16.mxu0 0
    %359 = vmatpush2.bf16.msra.mxu0 0
    %360 = vmatprep.subr.bf16.mxu0 0
    %361 = vmatpush2.bf16.msra.mxu0 0
    %362 = vmatprep.subr.bf16.mxu0 0
    %363 = vmatpush2.bf16.msra.mxu0 0
    %364 = vmatprep.subr.bf16.mxu0 0
    %365 = vmatpush2.bf16.msra.mxu0 0
    %366 = vmatprep.subr.bf16.mxu0 0
    %367 = vmatpush2.bf16.msra.mxu0 0
    %368 = vmatprep.subr.bf16.mxu0 0
    %369 = vmatpush2.bf16.msra.mxu0 0
    %370 = vmatprep.subr.bf16.mxu0 0
    %371 = vmatpush2.bf16.msra.mxu0 0
    %372 = vmatprep.subr.bf16.mxu0 0
    %373 = vmatpush2.bf16.msra.mxu0 0
    %374 = vmatprep.mubr.bf16.mxu0 0
    %375 = vmatmul.mubr.bf16.gmra.mxu0 %v303
    %v376 = vpop.f32.mrf.mxu0
    %v377 = vadd.f32 0.0, %v376
    %v378 = vpop.f32.mrf.mxu0
    %v379 = vadd.f32 0.0, %v378
    %v380 = vpop.f32.mrf.mxu0
    %v381 = vadd.f32 0.0, %v380
    %v382 = vpop.f32.mrf.mxu0
    %v383 = vadd.f32 0.0, %v382
    %384 = vmatprep.mubr.bf16.mxu0 0
    %385 = vmatmul.mubr.bf16.gmra.mxu0 %v306
    %v386 = vpop.f32.mrf.mxu0
    %v387 = vadd.f32 0.0, %v386
    %v388 = vpop.f32.mrf.mxu0
    %v389 = vadd.f32 0.0, %v388
    %v390 = vpop.f32.mrf.mxu0
    %v391 = vadd.f32 0.0, %v390
    %v392 = vpop.f32.mrf.mxu0
    %v393 = vadd.f32 0.0, %v392
    %394 = vmatprep.mubr.bf16.mxu0 0
    %395 = vmatmul.mubr.bf16.gmra.mxu0 %v309
    %v396 = vpop.f32.mrf.mxu0
    %v397 = vadd.f32 0.0, %v396
    %v398 = vpop.f32.mrf.mxu0
    %v399 = vadd.f32 0.0, %v398
    %v400 = vpop.f32.mrf.mxu0
    %v401 = vadd.f32 0.0, %v400
    %v402 = vpop.f32.mrf.mxu0
    %v403 = vadd.f32 0.0, %v402
    %404 = vmatprep.mubr.bf16.mxu0 0
    %405 = vmatmul.mubr.bf16.gmra.mxu0 %v312
    %v406 = vpop.f32.mrf.mxu0
    %v407 = vadd.f32 0.0, %v406
    %v408 = vpop.f32.mrf.mxu0
    %v409 = vadd.f32 0.0, %v408
    %v410 = vpop.f32.mrf.mxu0
    %v411 = vadd.f32 0.0, %v410
    %v412 = vpop.f32.mrf.mxu0
    %v413 = vadd.f32 0.0, %v412
    %414 = vmatprep.mubr.bf16.mxu0 0
    %415 = vmatmul.mubr.bf16.gmra.mxu0 %v315
    %v416 = vpop.f32.mrf.mxu0
    %v417 = vadd.f32 0.0, %v416
    %v418 = vpop.f32.mrf.mxu0
    %v419 = vadd.f32 0.0, %v418
    %v420 = vpop.f32.mrf.mxu0
    %v421 = vadd.f32 0.0, %v420
    %v422 = vpop.f32.mrf.mxu0
    %v423 = vadd.f32 0.0, %v422
    %424 = vmatprep.mubr.bf16.mxu0 0
    %425 = vmatmul.mubr.bf16.gmra.mxu0 %v318
    %v426 = vpop.f32.mrf.mxu0
    %v427 = vadd.f32 0.0, %v426
    %v428 = vpop.f32.mrf.mxu0
    %v429 = vadd.f32 0.0, %v428
    %v430 = vpop.f32.mrf.mxu0
    %v431 = vadd.f32 0.0, %v430
    %v432 = vpop.f32.mrf.mxu0
    %v433 = vadd.f32 0.0, %v432
    %434 = vmatprep.mubr.bf16.mxu0 0
    %435 = vmatmul.mubr.bf16.gmra.mxu0 %v321
    %v436 = vpop.f32.mrf.mxu0
    %v437 = vadd.f32 0.0, %v436
    %v438 = vpop.f32.mrf.mxu0
    %v439 = vadd.f32 0.0, %v438
    %v440 = vpop.f32.mrf.mxu0
    %v441 = vadd.f32 0.0, %v440
    %v442 = vpop.f32.mrf.mxu0
    %v443 = vadd.f32 0.0, %v442
    %444 = vmatprep.mubr.bf16.mxu0 0
    %445 = vmatmul.mubr.bf16.gmra.mxu0 %v324
    %v446 = vpop.f32.mrf.mxu0
    %v447 = vadd.f32 0.0, %v446
    %v448 = vpop.f32.mrf.mxu0
    %v449 = vadd.f32 0.0, %v448
    %v450 = vpop.f32.mrf.mxu0
    %v451 = vadd.f32 0.0, %v450
    %v452 = vpop.f32.mrf.mxu0
    %v453 = vadd.f32 0.0, %v452
    %454 = vmatprep.mubr.bf16.mxu0 0
    %455 = vmatmul.mubr.bf16.gmra.mxu0 %v327
    %v456 = vpop.f32.mrf.mxu0
    %v457 = vadd.f32 0.0, %v456
    %v458 = vpop.f32.mrf.mxu0
    %v459 = vadd.f32 0.0, %v458
    %v460 = vpop.f32.mrf.mxu0
    %v461 = vadd.f32 0.0, %v460
    %v462 = vpop.f32.mrf.mxu0
    %v463 = vadd.f32 0.0, %v462
    %464 = vdwg.mxu0
    %465 = vmatprep.subr.bf16.mxu0 0
    %466 = vmatpush1.bf16.msra.mxu0 0
    %467 = vmatprep.subr.bf16.mxu0 0
    %468 = vmatpush1.bf16.msra.mxu0 0
    %469 = vmatprep.subr.bf16.mxu0 0
    %470 = vmatpush1.bf16.msra.mxu0 0
    %471 = vmatprep.subr.bf16.mxu0 0
    %472 = vmatpush1.bf16.msra.mxu0 0
    %473 = vmatprep.subr.bf16.mxu0 0
    %474 = vmatpush1.bf16.msra.mxu0 0
    %475 = vmatprep.subr.bf16.mxu0 0
    %476 = vmatpush1.bf16.msra.mxu0 0
    %477 = vmatprep.subr.bf16.mxu0 0
    %478 = vmatpush1.bf16.msra.mxu0 0
    %479 = vmatprep.subr.bf16.mxu0 %v340
    %480 = vmatpush1.bf16.msra.mxu0 %v337
    %481 = vmatprep.subr.bf16.mxu0 0
    %482 = vmatpush2.bf16.msra.mxu0 0
    %483 = vmatprep.subr.bf16.mxu0 0
    %484 = vmatpush2.bf16.msra.mxu0 0
    %485 = vmatprep.subr.bf16.mxu0 0
    %486 = vmatpush2.bf16.msra.mxu0 0
    %487 = vmatprep.subr.bf16.mxu0 0
    %488 = vmatpush2.bf16.msra.mxu0 0
    %489 = vmatprep.subr.bf16.mxu0 0
    %490 = vmatpush2.bf16.msra.mxu0 0
    %491 = vmatprep.subr.bf16.mxu0 0
    %492 = vmatpush2.bf16.msra.mxu0 0
    %493 = vmatprep.subr.bf16.mxu0 0
    %494 = vmatpush2.bf16.msra.mxu0 0
    %495 = vmatprep.subr.bf16.mxu0 0
    %496 = vmatpush2.bf16.msra.mxu0 0
    %497 = vmatprep.mubr.bf16.mxu0 0
    %498 = vmatmul.mubr.bf16.gmra.mxu0 %v303
    %v499 = vpop.f32.mrf.mxu0
    %v500 = vadd.f32 0.0, %v499
    %v501 = vpop.f32.mrf.mxu0
    %v502 = vadd.f32 0.0, %v501
    %v503 = vpop.f32.mrf.mxu0
    %v504 = vadd.f32 0.0, %v503
    %v505 = vpop.f32.mrf.mxu0
    %v506 = vadd.f32 0.0, %v505
    %507 = vmatprep.mubr.bf16.mxu0 0
    %508 = vmatmul.mubr.bf16.gmra.mxu0 %v306
    %v509 = vpop.f32.mrf.mxu0
    %v510 = vadd.f32 0.0, %v509
    %v511 = vpop.f32.mrf.mxu0
    %v512 = vadd.f32 0.0, %v511
    %v513 = vpop.f32.mrf.mxu0
    %v514 = vadd.f32 0.0, %v513
    %v515 = vpop.f32.mrf.mxu0
    %v516 = vadd.f32 0.0, %v515
    %517 = vmatprep.mubr.bf16.mxu0 0
    %518 = vmatmul.mubr.bf16.gmra.mxu0 %v309
    %v519 = vpop.f32.mrf.mxu0
    %v520 = vadd.f32 0.0, %v519
    %v521 = vpop.f32.mrf.mxu0
    %v522 = vadd.f32 0.0, %v521
    %v523 = vpop.f32.mrf.mxu0
    %v524 = vadd.f32 0.0, %v523
    %v525 = vpop.f32.mrf.mxu0
    %v526 = vadd.f32 0.0, %v525
    %527 = vmatprep.mubr.bf16.mxu0 0
    %528 = vmatmul.mubr.bf16.gmra.mxu0 %v312
    %v529 = vpop.f32.mrf.mxu0
    %v530 = vadd.f32 0.0, %v529
    %v531 = vpop.f32.mrf.mxu0
    %v532 = vadd.f32 0.0, %v531
    %v533 = vpop.f32.mrf.mxu0
    %v534 = vadd.f32 0.0, %v533
    %v535 = vpop.f32.mrf.mxu0
    %v536 = vadd.f32 0.0, %v535
    %537 = vmatprep.mubr.bf16.mxu0 0
    %538 = vmatmul.mubr.bf16.gmra.mxu0 %v315
    %v539 = vpop.f32.mrf.mxu0
    %v540 = vadd.f32 0.0, %v539
    %v541 = vpop.f32.mrf.mxu0
    %v542 = vadd.f32 0.0, %v541
    %v543 = vpop.f32.mrf.mxu0
    %v544 = vadd.f32 0.0, %v543
    %v545 = vpop.f32.mrf.mxu0
    %v546 = vadd.f32 0.0, %v545
    %547 = vmatprep.mubr.bf16.mxu0 0
    %548 = vmatmul.mubr.bf16.gmra.mxu0 %v318
    %v549 = vpop.f32.mrf.mxu0
    %v550 = vadd.f32 0.0, %v549
    %v551 = vpop.f32.mrf.mxu0
    %v552 = vadd.f32 0.0, %v551
    %v553 = vpop.f32.mrf.mxu0
    %v554 = vadd.f32 0.0, %v553
    %v555 = vpop.f32.mrf.mxu0
    %v556 = vadd.f32 0.0, %v555
    %557 = vmatprep.mubr.bf16.mxu0 0
    %558 = vmatmul.mubr.bf16.gmra.mxu0 %v321
    %v559 = vpop.f32.mrf.mxu0
    %v560 = vadd.f32 0.0, %v559
    %v561 = vpop.f32.mrf.mxu0
    %v562 = vadd.f32 0.0, %v561
    %v563 = vpop.f32.mrf.mxu0
    %v564 = vadd.f32 0.0, %v563
    %v565 = vpop.f32.mrf.mxu0
    %v566 = vadd.f32 0.0, %v565
    %567 = vmatprep.mubr.bf16.mxu0 0
    %568 = vmatmul.mubr.bf16.gmra.mxu0 %v324
    %v569 = vpop.f32.mrf.mxu0
    %v570 = vadd.f32 0.0, %v569
    %v571 = vpop.f32.mrf.mxu0
    %v572 = vadd.f32 0.0, %v571
    %v573 = vpop.f32.mrf.mxu0
    %v574 = vadd.f32 0.0, %v573
    %v575 = vpop.f32.mrf.mxu0
    %v576 = vadd.f32 0.0, %v575
    %577 = vmatprep.mubr.bf16.mxu0 0
    %578 = vmatmul.mubr.bf16.gmra.mxu0 %v327
    %v579 = vpop.f32.mrf.mxu0
    %v580 = vadd.f32 0.0, %v579
    %v581 = vpop.f32.mrf.mxu0
    %v582 = vadd.f32 0.0, %v581
    %v583 = vpop.f32.mrf.mxu0
    %v584 = vadd.f32 0.0, %v583
    %v585 = vpop.f32.mrf.mxu0
    %v586 = vadd.f32 0.0, %v585
    %587 = vdwg.mxu0
    %588 = vrot.lane.b32.xlu0 %v377, 17
    %v589 = vpop.permute.xlu0 %588
    %590 = vrot.lane.b32.xlu0 %v381, 17
    %v591 = vpop.permute.xlu0 %590
    %592 = vrot.lane.b32.xlu0 %v379, 17
    %v593 = vpop.permute.xlu0 %592
    %594 = vrot.lane.b32.xlu0 %v383, 17
    %v595 = vpop.permute.xlu0 %594
    %596 = vrot.lane.b32.xlu0 %v500, 17
    %v597 = vpop.permute.xlu0 %596
    %598 = vrot.lane.b32.xlu0 %v504, 17
    %v599 = vpop.permute.xlu0 %598
    %600 = vrot.lane.b32.xlu0 %v502, 17
    %v601 = vpop.permute.xlu0 %600
    %602 = vrot.lane.b32.xlu0 %v506, 17
    %v603 = vpop.permute.xlu0 %602
    %v604 = vlaneseq
    %v605 = vand.u32 %v604, 127
    %vm606 = vcmp.lt.s32.totalorder %v605, 17
    %v607 = vsel %vm606, %v597, %v601
    %v608 = vsel %vm606, %v599, %v603
    %v609 = vsel %vm606, %v593, %v597
    %v610 = vsel %vm606, %v595, %v599
    %v611 = vsel %vm606, %v589, %v593
    %v612 = vsel %vm606, %v591, %v595
    %v613 = vsel %vm606, %v601, %v589
    %v614 = vsel %vm606, %v603, %v591
    %v615 = vld [vmem:[%s10] ss:$8 sm:$0xf]
    %v617 = vlaneseq
    %v618 = vshrl.u32 %v617, 7
    %v619 = vsub.s32 0, %v618
    %v620 = vrot.slane %v615, %v619
    %v621 = vlaneseq
    %v622 = vshrl.u32 %v621, 7
    %v623 = vsub.s32 1, %v622
    %v624 = vrot.slane %v615, %v623
    %v625 = vlaneseq
    %v626 = vshrl.u32 %v625, 7
    %v627 = vsub.s32 2, %v626
    %v628 = vrot.slane %v615, %v627
    %v629 = vlaneseq
    %v630 = vshrl.u32 %v629, 7
    %v631 = vsub.s32 3, %v630
    %v632 = vrot.slane %v615, %v631
    %v637 = vmul.f32 %v620, %v613
    %v638 = vmul.f32 %v624, %v611
    %v639 = vmul.f32 %v628, %v609
    %v640 = vmul.f32 %v632, %v607
    %v641 = vmul.f32 %v620, %v614
    %v642 = vmul.f32 %v624, %v612
    %v643 = vmul.f32 %v628, %v610
    %v644 = vmul.f32 %v632, %v608
    %645 = vrot.lane.b32.xlu0 %v387, 16
    %v646 = vpop.permute.xlu0 %645
    %647 = vrot.lane.b32.xlu0 %v391, 16
    %v648 = vpop.permute.xlu0 %647
    %649 = vrot.lane.b32.xlu0 %v389, 16
    %v650 = vpop.permute.xlu0 %649
    %651 = vrot.lane.b32.xlu0 %v393, 16
    %v652 = vpop.permute.xlu0 %651
    %653 = vrot.lane.b32.xlu0 %v510, 16
    %v654 = vpop.permute.xlu0 %653
    %655 = vrot.lane.b32.xlu0 %v514, 16
    %v656 = vpop.permute.xlu0 %655
    %657 = vrot.lane.b32.xlu0 %v512, 16
    %v658 = vpop.permute.xlu0 %657
    %659 = vrot.lane.b32.xlu0 %v516, 16
    %v660 = vpop.permute.xlu0 %659
    %vm661 = vcmp.lt.s32.totalorder %v605, 16
    %v662 = vsel %vm661, %v654, %v658
    %v663 = vsel %vm661, %v656, %v660
    %v664 = vsel %vm661, %v650, %v654
    %v665 = vsel %vm661, %v652, %v656
    %v666 = vsel %vm661, %v646, %v650
    %v667 = vsel %vm661, %v648, %v652
    %v668 = vsel %vm661, %v658, %v646
    %v669 = vsel %vm661, %v660, %v648
    %s670 = scalar_lea.vmem %s10, 1
    %v671 = vld [vmem:[%s670] ss:$8 sm:$0xf]
    %v673 = vlaneseq
    %v674 = vshrl.u32 %v673, 7
    %v675 = vsub.s32 0, %v674
    %v676 = vrot.slane %v671, %v675
    %v677 = vlaneseq
    %v678 = vshrl.u32 %v677, 7
    %v679 = vsub.s32 1, %v678
    %v680 = vrot.slane %v671, %v679
    %v681 = vlaneseq
    %v682 = vshrl.u32 %v681, 7
    %v683 = vsub.s32 2, %v682
    %v684 = vrot.slane %v671, %v683
    %v685 = vlaneseq
    %v686 = vshrl.u32 %v685, 7
    %v687 = vsub.s32 3, %v686
    %v688 = vrot.slane %v671, %v687
    %v693 = vmul.f32 %v676, %v668
    %v694 = vmul.f32 %v680, %v666
    %v695 = vmul.f32 %v684, %v664
    %v696 = vmul.f32 %v688, %v662
    %v697 = vmul.f32 %v676, %v669
    %v698 = vmul.f32 %v680, %v667
    %v699 = vmul.f32 %v684, %v665
    %v700 = vmul.f32 %v688, %v663
    %v701 = vadd.f32 %v637, %v693
    %v702 = vadd.f32 %v638, %v694
    %v703 = vadd.f32 %v639, %v695
    %v704 = vadd.f32 %v640, %v696
    %v705 = vadd.f32 %v641, %v697
    %v706 = vadd.f32 %v642, %v698
    %v707 = vadd.f32 %v643, %v699
    %v708 = vadd.f32 %v644, %v700
    %709 = vrot.lane.b32.xlu0 %v397, 15
    %v710 = vpop.permute.xlu0 %709
    %711 = vrot.lane.b32.xlu0 %v401, 15
    %v712 = vpop.permute.xlu0 %711
    %713 = vrot.lane.b32.xlu0 %v399, 15
    %v714 = vpop.permute.xlu0 %713
    %715 = vrot.lane.b32.xlu0 %v403, 15
    %v716 = vpop.permute.xlu0 %715
    %717 = vrot.lane.b32.xlu0 %v520, 15
    %v718 = vpop.permute.xlu0 %717
    %719 = vrot.lane.b32.xlu0 %v524, 15
    %v720 = vpop.permute.xlu0 %719
    %721 = vrot.lane.b32.xlu0 %v522, 15
    %v722 = vpop.permute.xlu0 %721
    %723 = vrot.lane.b32.xlu0 %v526, 15
    %v724 = vpop.permute.xlu0 %723
    %vm725 = vcmp.lt.s32.totalorder %v605, 15
    %v726 = vsel %vm725, %v718, %v722
    %v727 = vsel %vm725, %v720, %v724
    %v728 = vsel %vm725, %v714, %v718
    %v729 = vsel %vm725, %v716, %v720
    %v730 = vsel %vm725, %v710, %v714
    %v731 = vsel %vm725, %v712, %v716
    %v732 = vsel %vm725, %v722, %v710
    %v733 = vsel %vm725, %v724, %v712
    %s734 = scalar_lea.vmem %s10, 2
    %v735 = vld [vmem:[%s734] ss:$8 sm:$0xf]
    %v737 = vlaneseq
    %v738 = vshrl.u32 %v737, 7
    %v739 = vsub.s32 0, %v738
    %v740 = vrot.slane %v735, %v739
    %v741 = vlaneseq
    %v742 = vshrl.u32 %v741, 7
    %v743 = vsub.s32 1, %v742
    %v744 = vrot.slane %v735, %v743
    %v745 = vlaneseq
    %v746 = vshrl.u32 %v745, 7
    %v747 = vsub.s32 2, %v746
    %v748 = vrot.slane %v735, %v747
    %v749 = vlaneseq
    %v750 = vshrl.u32 %v749, 7
    %v751 = vsub.s32 3, %v750
    %v752 = vrot.slane %v735, %v751
    %v757 = vmul.f32 %v740, %v732
    %v758 = vmul.f32 %v744, %v730
    %v759 = vmul.f32 %v748, %v728
    %v760 = vmul.f32 %v752, %v726
    %v761 = vmul.f32 %v740, %v733
    %v762 = vmul.f32 %v744, %v731
    %v763 = vmul.f32 %v748, %v729
    %v764 = vmul.f32 %v752, %v727
    %v765 = vadd.f32 %v701, %v757
    %v766 = vadd.f32 %v702, %v758
    %v767 = vadd.f32 %v703, %v759
    %v768 = vadd.f32 %v704, %v760
    %v769 = vadd.f32 %v705, %v761
    %v770 = vadd.f32 %v706, %v762
    %v771 = vadd.f32 %v707, %v763
    %v772 = vadd.f32 %v708, %v764
    %773 = vrot.lane.b32.xlu0 %v407, 1
    %v774 = vpop.permute.xlu0 %773
    %775 = vrot.lane.b32.xlu0 %v411, 1
    %v776 = vpop.permute.xlu0 %775
    %777 = vrot.lane.b32.xlu0 %v409, 1
    %v778 = vpop.permute.xlu0 %777
    %779 = vrot.lane.b32.xlu0 %v413, 1
    %v780 = vpop.permute.xlu0 %779
    %781 = vrot.lane.b32.xlu0 %v530, 1
    %v782 = vpop.permute.xlu0 %781
    %783 = vrot.lane.b32.xlu0 %v534, 1
    %v784 = vpop.permute.xlu0 %783
    %785 = vrot.lane.b32.xlu0 %v532, 1
    %v786 = vpop.permute.xlu0 %785
    %787 = vrot.lane.b32.xlu0 %v536, 1
    %v788 = vpop.permute.xlu0 %787
    %vm789 = vcmp.lt.s32.totalorder %v605, 1
    %v790 = vsel %vm789, %v782, %v786
    %v791 = vsel %vm789, %v784, %v788
    %v792 = vsel %vm789, %v778, %v782
    %v793 = vsel %vm789, %v780, %v784
    %v794 = vsel %vm789, %v774, %v778
    %v795 = vsel %vm789, %v776, %v780
    %v796 = vsel %vm789, %v786, %v774
    %v797 = vsel %vm789, %v788, %v776
    %s798 = scalar_lea.vmem %s10, 3
    %v799 = vld [vmem:[%s798] ss:$8 sm:$0xf]
    %v801 = vlaneseq
    %v802 = vshrl.u32 %v801, 7
    %v803 = vsub.s32 0, %v802
    %v804 = vrot.slane %v799, %v803
    %v805 = vlaneseq
    %v806 = vshrl.u32 %v805, 7
    %v807 = vsub.s32 1, %v806
    %v808 = vrot.slane %v799, %v807
    %v809 = vlaneseq
    %v810 = vshrl.u32 %v809, 7
    %v811 = vsub.s32 2, %v810
    %v812 = vrot.slane %v799, %v811
    %v813 = vlaneseq
    %v814 = vshrl.u32 %v813, 7
    %v815 = vsub.s32 3, %v814
    %v816 = vrot.slane %v799, %v815
    %v821 = vmul.f32 %v804, %v796
    %v822 = vmul.f32 %v808, %v794
    %v823 = vmul.f32 %v812, %v792
    %v824 = vmul.f32 %v816, %v790
    %v825 = vmul.f32 %v804, %v797
    %v826 = vmul.f32 %v808, %v795
    %v827 = vmul.f32 %v812, %v793
    %v828 = vmul.f32 %v816, %v791
    %v829 = vadd.f32 %v765, %v821
    %v830 = vadd.f32 %v766, %v822
    %v831 = vadd.f32 %v767, %v823
    %v832 = vadd.f32 %v768, %v824
    %v833 = vadd.f32 %v769, %v825
    %v834 = vadd.f32 %v770, %v826
    %v835 = vadd.f32 %v771, %v827
    %v836 = vadd.f32 %v772, %v828
    %v837 = vadd.f32 %v829, %v417
    %v838 = vadd.f32 %v830, %v419
    %v839 = vadd.f32 %v831, %v540
    %v840 = vadd.f32 %v832, %v542
    %v841 = vadd.f32 %v833, %v421
    %v842 = vadd.f32 %v834, %v423
    %v843 = vadd.f32 %v835, %v544
    %v844 = vadd.f32 %v836, %v546
    %845 = vrot.lane.b32.xlu0 %v427, 127
    %v846 = vpop.permute.xlu0 %845
    %847 = vrot.lane.b32.xlu0 %v431, 127
    %v848 = vpop.permute.xlu0 %847
    %849 = vrot.lane.b32.xlu0 %v429, 127
    %v850 = vpop.permute.xlu0 %849
    %851 = vrot.lane.b32.xlu0 %v433, 127
    %v852 = vpop.permute.xlu0 %851
    %853 = vrot.lane.b32.xlu0 %v550, 127
    %v854 = vpop.permute.xlu0 %853
    %855 = vrot.lane.b32.xlu0 %v554, 127
    %v856 = vpop.permute.xlu0 %855
    %857 = vrot.lane.b32.xlu0 %v552, 127
    %v858 = vpop.permute.xlu0 %857
    %859 = vrot.lane.b32.xlu0 %v556, 127
    %v860 = vpop.permute.xlu0 %859
    %vm861 = vcmp.lt.s32.totalorder %v605, 127
    %v862 = vsel %vm861, %v854, %v858
    %v863 = vsel %vm861, %v856, %v860
    %v864 = vsel %vm861, %v850, %v854
    %v865 = vsel %vm861, %v852, %v856
    %v866 = vsel %vm861, %v846, %v850
    %v867 = vsel %vm861, %v848, %v852
    %v868 = vsel %vm861, %v858, %v846
    %v869 = vsel %vm861, %v860, %v848
    %s870 = scalar_lea.vmem %s10, 5
    %v871 = vld [vmem:[%s870] ss:$8 sm:$0xf]
    %v873 = vlaneseq
    %v874 = vshrl.u32 %v873, 7
    %v875 = vsub.s32 0, %v874
    %v876 = vrot.slane %v871, %v875
    %v877 = vlaneseq
    %v878 = vshrl.u32 %v877, 7
    %v879 = vsub.s32 1, %v878
    %v880 = vrot.slane %v871, %v879
    %v881 = vlaneseq
    %v882 = vshrl.u32 %v881, 7
    %v883 = vsub.s32 2, %v882
    %v884 = vrot.slane %v871, %v883
    %v885 = vlaneseq
    %v886 = vshrl.u32 %v885, 7
    %v887 = vsub.s32 3, %v886
    %v888 = vrot.slane %v871, %v887
    %v893 = vmul.f32 %v876, %v866
    %v894 = vmul.f32 %v880, %v864
    %v895 = vmul.f32 %v884, %v862
    %v896 = vmul.f32 %v888, %v868
    %v897 = vmul.f32 %v876, %v867
    %v898 = vmul.f32 %v880, %v865
    %v899 = vmul.f32 %v884, %v863
    %v900 = vmul.f32 %v888, %v869
    %v901 = vadd.f32 %v837, %v893
    %v902 = vadd.f32 %v838, %v894
    %v903 = vadd.f32 %v839, %v895
    %v904 = vadd.f32 %v840, %v896
    %v905 = vadd.f32 %v841, %v897
    %v906 = vadd.f32 %v842, %v898
    %v907 = vadd.f32 %v843, %v899
    %v908 = vadd.f32 %v844, %v900
    %909 = vrot.lane.b32.xlu0 %v437, 113
    %v910 = vpop.permute.xlu0 %909
    %911 = vrot.lane.b32.xlu0 %v441, 113
    %v912 = vpop.permute.xlu0 %911
    %913 = vrot.lane.b32.xlu0 %v439, 113
    %v914 = vpop.permute.xlu0 %913
    %915 = vrot.lane.b32.xlu0 %v443, 113
    %v916 = vpop.permute.xlu0 %915
    %917 = vrot.lane.b32.xlu0 %v560, 113
    %v918 = vpop.permute.xlu0 %917
    %919 = vrot.lane.b32.xlu0 %v564, 113
    %v920 = vpop.permute.xlu0 %919
    %921 = vrot.lane.b32.xlu0 %v562, 113
    %v922 = vpop.permute.xlu0 %921
    %923 = vrot.lane.b32.xlu0 %v566, 113
    %v924 = vpop.permute.xlu0 %923
    %vm925 = vcmp.lt.s32.totalorder %v605, 113
    %v926 = vsel %vm925, %v918, %v922
    %v927 = vsel %vm925, %v920, %v924
    %v928 = vsel %vm925, %v914, %v918
    %v929 = vsel %vm925, %v916, %v920
    %v930 = vsel %vm925, %v910, %v914
    %v931 = vsel %vm925, %v912, %v916
    %v932 = vsel %vm925, %v922, %v910
    %v933 = vsel %vm925, %v924, %v912
    %s934 = scalar_lea.vmem %s10, 6
    %v935 = vld [vmem:[%s934] ss:$8 sm:$0xf]
    %v937 = vlaneseq
    %v938 = vshrl.u32 %v937, 7
    %v939 = vsub.s32 0, %v938
    %v940 = vrot.slane %v935, %v939
    %v941 = vlaneseq
    %v942 = vshrl.u32 %v941, 7
    %v943 = vsub.s32 1, %v942
    %v944 = vrot.slane %v935, %v943
    %v945 = vlaneseq
    %v946 = vshrl.u32 %v945, 7
    %v947 = vsub.s32 2, %v946
    %v948 = vrot.slane %v935, %v947
    %v949 = vlaneseq
    %v950 = vshrl.u32 %v949, 7
    %v951 = vsub.s32 3, %v950
    %v952 = vrot.slane %v935, %v951
    %v957 = vmul.f32 %v940, %v930
    %v958 = vmul.f32 %v944, %v928
    %v959 = vmul.f32 %v948, %v926
    %v960 = vmul.f32 %v952, %v932
    %v961 = vmul.f32 %v940, %v931
    %v962 = vmul.f32 %v944, %v929
    %v963 = vmul.f32 %v948, %v927
    %v964 = vmul.f32 %v952, %v933
    %v965 = vadd.f32 %v901, %v957
    %v966 = vadd.f32 %v902, %v958
    %v967 = vadd.f32 %v903, %v959
    %v968 = vadd.f32 %v904, %v960
    %v969 = vadd.f32 %v905, %v961
    %v970 = vadd.f32 %v906, %v962
    %v971 = vadd.f32 %v907, %v963
    %v972 = vadd.f32 %v908, %v964
    %973 = vrot.lane.b32.xlu0 %v447, 112
    %v974 = vpop.permute.xlu0 %973
    %975 = vrot.lane.b32.xlu0 %v451, 112
    %v976 = vpop.permute.xlu0 %975
    %977 = vrot.lane.b32.xlu0 %v449, 112
    %v978 = vpop.permute.xlu0 %977
    %979 = vrot.lane.b32.xlu0 %v453, 112
    %v980 = vpop.permute.xlu0 %979
    %981 = vrot.lane.b32.xlu0 %v570, 112
    %v982 = vpop.permute.xlu0 %981
    %983 = vrot.lane.b32.xlu0 %v574, 112
    %v984 = vpop.permute.xlu0 %983
    %985 = vrot.lane.b32.xlu0 %v572, 112
    %v986 = vpop.permute.xlu0 %985
    %987 = vrot.lane.b32.xlu0 %v576, 112
    %v988 = vpop.permute.xlu0 %987
    %vm989 = vcmp.lt.s32.totalorder %v605, 112
    %v990 = vsel %vm989, %v982, %v986
    %v991 = vsel %vm989, %v984, %v988
    %v992 = vsel %vm989, %v978, %v982
    %v993 = vsel %vm989, %v980, %v984
    %v994 = vsel %vm989, %v974, %v978
    %v995 = vsel %vm989, %v976, %v980
    %v996 = vsel %vm989, %v986, %v974
    %v997 = vsel %vm989, %v988, %v976
    %s998 = scalar_lea.vmem %s10, 7
    %v999 = vld [vmem:[%s998] ss:$8 sm:$0xf]
    %v1001 = vlaneseq
    %v1002 = vshrl.u32 %v1001, 7
    %v1003 = vsub.s32 0, %v1002
    %v1004 = vrot.slane %v999, %v1003
    %v1005 = vlaneseq
    %v1006 = vshrl.u32 %v1005, 7
    %v1007 = vsub.s32 1, %v1006
    %v1008 = vrot.slane %v999, %v1007
    %v1009 = vlaneseq
    %v1010 = vshrl.u32 %v1009, 7
    %v1011 = vsub.s32 2, %v1010
    %v1012 = vrot.slane %v999, %v1011
    %v1013 = vlaneseq
    %v1014 = vshrl.u32 %v1013, 7
    %v1015 = vsub.s32 3, %v1014
    %v1016 = vrot.slane %v999, %v1015
    %v1021 = vmul.f32 %v1004, %v994
    %v1022 = vmul.f32 %v1008, %v992
    %v1023 = vmul.f32 %v1012, %v990
    %v1024 = vmul.f32 %v1016, %v996
    %v1025 = vmul.f32 %v1004, %v995
    %v1026 = vmul.f32 %v1008, %v993
    %v1027 = vmul.f32 %v1012, %v991
    %v1028 = vmul.f32 %v1016, %v997
    %v1029 = vadd.f32 %v965, %v1021
    %v1030 = vadd.f32 %v966, %v1022
    %v1031 = vadd.f32 %v967, %v1023
    %v1032 = vadd.f32 %v968, %v1024
    %v1033 = vadd.f32 %v969, %v1025
    %v1034 = vadd.f32 %v970, %v1026
    %v1035 = vadd.f32 %v971, %v1027
    %v1036 = vadd.f32 %v972, %v1028
    %1037 = vrot.lane.b32.xlu0 %v457, 111
    %v1038 = vpop.permute.xlu0 %1037
    %1039 = vrot.lane.b32.xlu0 %v461, 111
    %v1040 = vpop.permute.xlu0 %1039
    %1041 = vrot.lane.b32.xlu0 %v459, 111
    %v1042 = vpop.permute.xlu0 %1041
    %1043 = vrot.lane.b32.xlu0 %v463, 111
    %v1044 = vpop.permute.xlu0 %1043
    %1045 = vrot.lane.b32.xlu0 %v580, 111
    %v1046 = vpop.permute.xlu0 %1045
    %1047 = vrot.lane.b32.xlu0 %v584, 111
    %v1048 = vpop.permute.xlu0 %1047
    %1049 = vrot.lane.b32.xlu0 %v582, 111
    %v1050 = vpop.permute.xlu0 %1049
    %1051 = vrot.lane.b32.xlu0 %v586, 111
    %v1052 = vpop.permute.xlu0 %1051
    %vm1053 = vcmp.lt.s32.totalorder %v605, 111
    %v1054 = vsel %vm1053, %v1046, %v1050
    %v1055 = vsel %vm1053, %v1048, %v1052
    %v1056 = vsel %vm1053, %v1042, %v1046
    %v1057 = vsel %vm1053, %v1044, %v1048
    %v1058 = vsel %vm1053, %v1038, %v1042
    %v1059 = vsel %vm1053, %v1040, %v1044
    %v1060 = vsel %vm1053, %v1050, %v1038
    %v1061 = vsel %vm1053, %v1052, %v1040
    %s1062 = scalar_lea.vmem %s10, 32
    %v1063 = vld [vmem:[%s1062] ss:$8 sm:$0xf]
    %v1065 = vlaneseq
    %v1066 = vshrl.u32 %v1065, 7
    %v1067 = vsub.s32 0, %v1066
    %v1068 = vrot.slane %v1063, %v1067
    %v1069 = vlaneseq
    %v1070 = vshrl.u32 %v1069, 7
    %v1071 = vsub.s32 1, %v1070
    %v1072 = vrot.slane %v1063, %v1071
    %v1073 = vlaneseq
    %v1074 = vshrl.u32 %v1073, 7
    %v1075 = vsub.s32 2, %v1074
    %v1076 = vrot.slane %v1063, %v1075
    %v1077 = vlaneseq
    %v1078 = vshrl.u32 %v1077, 7
    %v1079 = vsub.s32 3, %v1078
    %v1080 = vrot.slane %v1063, %v1079
    %v1085 = vmul.f32 %v1068, %v1058
    %v1086 = vmul.f32 %v1072, %v1056
    %v1087 = vmul.f32 %v1076, %v1054
    %v1088 = vmul.f32 %v1080, %v1060
    %v1089 = vmul.f32 %v1068, %v1059
    %v1090 = vmul.f32 %v1072, %v1057
    %v1091 = vmul.f32 %v1076, %v1055
    %v1092 = vmul.f32 %v1080, %v1061
    %v1093 = vadd.f32 %v1029, %v1085
    %v1094 = vadd.f32 %v1030, %v1086
    %v1095 = vadd.f32 %v1031, %v1087
    %v1096 = vadd.f32 %v1032, %v1088
    %v1097 = vadd.f32 %v1033, %v1089
    %v1098 = vadd.f32 %v1034, %v1090
    %v1099 = vadd.f32 %v1035, %v1091
    %v1100 = vadd.f32 %v1036, %v1092
    %v1101 = vld [vmem:[%s7] sm:$0xff]
    %v1102 = vld [vmem:[%s7 + $0x8] sm:$0xff]
    %1104 = vset.pattern.permute.xlu0 0
    %1105 = vperm.xlu0 %1104, %v1101
    %v1106 = vpop.permute.xlu0 %1105
    %1109 = vset.pattern.permute.xlu0 0
    %1110 = vperm.xlu0 %1109, %v1102
    %v1111 = vpop.permute.xlu0 %1110
    %v1113 = vadd.f32 %v1093, %v1106
    %v1114 = vadd.f32 %v1094, %v1106
    %v1115 = vadd.f32 %v1095, %v1106
    %v1116 = vadd.f32 %v1096, %v1106
    %v1117 = vadd.f32 %v1097, %v1111
    %v1118 = vadd.f32 %v1098, %v1111
    %v1119 = vadd.f32 %v1099, %v1111
    %v1120 = vadd.f32 %v1100, %v1111
    %vm1121 = vcmp.ge.f32.partialorder %v1113, 0.0
    %vm1122 = vcmp.ge.f32.partialorder %v1114, 0.0
    %vm1123 = vcmp.ge.f32.partialorder %v1115, 0.0
    %vm1124 = vcmp.ge.f32.partialorder %v1116, 0.0
    %vm1125 = vcmp.ge.f32.partialorder %v1117, 0.0
    %vm1126 = vcmp.ge.f32.partialorder %v1118, 0.0
    %vm1127 = vcmp.ge.f32.partialorder %v1119, 0.0
    %vm1128 = vcmp.ge.f32.partialorder %v1120, 0.0
    %v1129 = vmul.f32 %v1113, 0.2
    %v1130 = vmul.f32 %v1114, 0.2
    %v1131 = vmul.f32 %v1115, 0.2
    %v1132 = vmul.f32 %v1116, 0.2
    %v1133 = vmul.f32 %v1117, 0.2
    %v1134 = vmul.f32 %v1118, 0.2
    %v1135 = vmul.f32 %v1119, 0.2
    %v1136 = vmul.f32 %v1120, 0.2
    %v1137 = vsel %vm1121, %v1113, %v1129
    %v1138 = vsel %vm1122, %v1114, %v1130
    %v1139 = vsel %vm1123, %v1115, %v1131
    %v1140 = vsel %vm1124, %v1116, %v1132
    %v1141 = vsel %vm1125, %v1117, %v1133
    %v1142 = vsel %vm1126, %v1118, %v1134
    %v1143 = vsel %vm1127, %v1119, %v1135
    %v1144 = vsel %vm1128, %v1120, %v1136
    %v1145 = vld [vmem:[%s8] sm:$0xf]
    %v1146 = vld [vmem:[%s8 + $0x4] sm:$0xf]
    %v1147 = vld [vmem:[%s8 + $0x8] sm:$0xf]
    %v1148 = vld [vmem:[%s8 + $0xc] sm:$0xf]
    %v1149 = vld [vmem:[%s8 + $0x10] sm:$0xf]
    %v1150 = vld [vmem:[%s8 + $0x14] sm:$0xf]
    %v1151 = vld [vmem:[%s8 + $0x18] sm:$0xf]
    %v1152 = vld [vmem:[%s8 + $0x1c] sm:$0xf]
    %v1153 = vld [vmem:[%s8 + $0x20] sm:$0xf]
    %v1154 = vld [vmem:[%s8 + $0x24] sm:$0xf]
    %v1155 = vld [vmem:[%s8 + $0x28] sm:$0xf]
    %v1156 = vld [vmem:[%s8 + $0x2c] sm:$0xf]
    %v1157 = vld [vmem:[%s8 + $0x30] sm:$0xf]
    %v1158 = vld [vmem:[%s8 + $0x34] sm:$0xf]
    %v1159 = vld [vmem:[%s8 + $0x38] sm:$0xf]
    %v1160 = vld [vmem:[%s8 + $0x3c] sm:$0xf]
    %v1161 = vld [vmem:[%s8 + $0x40] sm:$0xf]
    %v1162 = vld [vmem:[%s8 + $0x44] sm:$0xf]
    %v1163 = vpack.c.bf16 %v1141, %v1137
    %v1164 = vpack.c.bf16 %v1142, %v1138
    %v1165 = vpack.c.bf16 %v1143, %v1139
    %v1166 = vpack.c.bf16 %v1144, %v1140
    %v1185 = vunpack.c.l.b16 %v1145
    %v1186 = vunpack.c.l.b16 %v1146
    %v1187 = vunpack.c.l.b16 %v1147
    %v1188 = vunpack.c.l.b16 %v1148
    %v1189 = vunpack.c.l.b16 %v1149
    %v1190 = vunpack.c.l.b16 %v1150
    %v1191 = vunpack.c.l.b16 %v1151
    %v1192 = vunpack.c.l.b16 %v1152
    %v1193 = vunpack.c.l.b16 %v1153
    %v1194 = vunpack.c.l.b16 %v1154
    %v1195 = vunpack.c.l.b16 %v1155
    %v1196 = vunpack.c.l.b16 %v1156
    %v1197 = vunpack.c.l.b16 %v1157
    %v1198 = vunpack.c.l.b16 %v1158
    %v1199 = vunpack.c.l.b16 %v1159
    %v1200 = vunpack.c.l.b16 %v1160
    %v1201 = vunpack.c.l.b16 %v1161
    %v1202 = vunpack.c.l.b16 %v1162
    %v1203 = vpack.c.b16 %v1186, %v1185
    %v1204 = vpack.c.b16 %v1188, %v1187
    %v1205 = vpack.c.b16 %v1190, %v1189
    %v1206 = vpack.c.b16 %v1192, %v1191
    %v1207 = vpack.c.b16 %v1194, %v1193
    %v1208 = vpack.c.b16 %v1196, %v1195
    %v1209 = vpack.c.b16 %v1198, %v1197
    %v1210 = vpack.c.b16 %v1200, %v1199
    %v1211 = vpack.c.b16 %v1202, %v1201
    %vm1212 = vcmask 130048
    %v1214 = vsel %vm1212, %v1203, 0
    %v1217 = vsel %vm1212, %v1204, 0
    %v1220 = vsel %vm1212, %v1205, 0
    %v1223 = vsel %vm1212, %v1206, 0
    %v1226 = vsel %vm1212, %v1207, 0
    %v1229 = vsel %vm1212, %v1208, 0
    %v1232 = vsel %vm1212, %v1209, 0
    %v1235 = vsel %vm1212, %v1210, 0
    %v1238 = vsel %vm1212, %v1211, 0
    %1240 = vmatprep.subr.bf16.mxu0 0
    %1241 = vmatpush1.bf16.msra.mxu0 0
    %1242 = vmatprep.subr.bf16.mxu0 0
    %1243 = vmatpush1.bf16.msra.mxu0 0
    %1244 = vmatprep.subr.bf16.mxu0 0
    %1245 = vmatpush1.bf16.msra.mxu0 0
    %1246 = vmatprep.subr.bf16.mxu0 0
    %1247 = vmatpush1.bf16.msra.mxu0 0
    %1248 = vmatprep.subr.bf16.mxu0 0
    %1249 = vmatpush1.bf16.msra.mxu0 0
    %1250 = vmatprep.subr.bf16.mxu0 0
    %1251 = vmatpush1.bf16.msra.mxu0 0
    %1252 = vmatprep.subr.bf16.mxu0 0
    %1253 = vmatpush1.bf16.msra.mxu0 0
    %1254 = vmatprep.subr.bf16.mxu0 %v1164
    %1255 = vmatpush1.bf16.msra.mxu0 %v1163
    %1256 = vmatprep.subr.bf16.mxu0 0
    %1257 = vmatpush2.bf16.msra.mxu0 0
    %1258 = vmatprep.subr.bf16.mxu0 0
    %1259 = vmatpush2.bf16.msra.mxu0 0
    %1260 = vmatprep.subr.bf16.mxu0 0
    %1261 = vmatpush2.bf16.msra.mxu0 0
    %1262 = vmatprep.subr.bf16.mxu0 0
    %1263 = vmatpush2.bf16.msra.mxu0 0
    %1264 = vmatprep.subr.bf16.mxu0 0
    %1265 = vmatpush2.bf16.msra.mxu0 0
    %1266 = vmatprep.subr.bf16.mxu0 0
    %1267 = vmatpush2.bf16.msra.mxu0 0
    %1268 = vmatprep.subr.bf16.mxu0 0
    %1269 = vmatpush2.bf16.msra.mxu0 0
    %1270 = vmatprep.subr.bf16.mxu0 0
    %1271 = vmatpush2.bf16.msra.mxu0 0
    %1272 = vmatprep.mubr.bf16.mxu0 0
    %1273 = vmatmul.mubr.bf16.gmra.mxu0 %v1214
    %v1274 = vpop.f32.mrf.mxu0
    %v1275 = vadd.f32 0.0, %v1274
    %v1276 = vpop.f32.mrf.mxu0
    %v1277 = vadd.f32 0.0, %v1276
    %v1278 = vpop.f32.mrf.mxu0
    %v1279 = vadd.f32 0.0, %v1278
    %v1280 = vpop.f32.mrf.mxu0
    %v1281 = vadd.f32 0.0, %v1280
    %1282 = vmatprep.mubr.bf16.mxu0 0
    %1283 = vmatmul.mubr.bf16.gmra.mxu0 %v1217
    %v1284 = vpop.f32.mrf.mxu0
    %v1285 = vadd.f32 0.0, %v1284
    %v1286 = vpop.f32.mrf.mxu0
    %v1287 = vadd.f32 0.0, %v1286
    %v1288 = vpop.f32.mrf.mxu0
    %v1289 = vadd.f32 0.0, %v1288
    %v1290 = vpop.f32.mrf.mxu0
    %v1291 = vadd.f32 0.0, %v1290
    %1292 = vmatprep.mubr.bf16.mxu0 0
    %1293 = vmatmul.mubr.bf16.gmra.mxu0 %v1220
    %v1294 = vpop.f32.mrf.mxu0
    %v1295 = vadd.f32 0.0, %v1294
    %v1296 = vpop.f32.mrf.mxu0
    %v1297 = vadd.f32 0.0, %v1296
    %v1298 = vpop.f32.mrf.mxu0
    %v1299 = vadd.f32 0.0, %v1298
    %v1300 = vpop.f32.mrf.mxu0
    %v1301 = vadd.f32 0.0, %v1300
    %1302 = vmatprep.mubr.bf16.mxu0 0
    %1303 = vmatmul.mubr.bf16.gmra.mxu0 %v1223
    %v1304 = vpop.f32.mrf.mxu0
    %v1305 = vadd.f32 0.0, %v1304
    %v1306 = vpop.f32.mrf.mxu0
    %v1307 = vadd.f32 0.0, %v1306
    %v1308 = vpop.f32.mrf.mxu0
    %v1309 = vadd.f32 0.0, %v1308
    %v1310 = vpop.f32.mrf.mxu0
    %v1311 = vadd.f32 0.0, %v1310
    %1312 = vmatprep.mubr.bf16.mxu0 0
    %1313 = vmatmul.mubr.bf16.gmra.mxu0 %v1226
    %v1314 = vpop.f32.mrf.mxu0
    %v1315 = vadd.f32 0.0, %v1314
    %v1316 = vpop.f32.mrf.mxu0
    %v1317 = vadd.f32 0.0, %v1316
    %v1318 = vpop.f32.mrf.mxu0
    %v1319 = vadd.f32 0.0, %v1318
    %v1320 = vpop.f32.mrf.mxu0
    %v1321 = vadd.f32 0.0, %v1320
    %1322 = vmatprep.mubr.bf16.mxu0 0
    %1323 = vmatmul.mubr.bf16.gmra.mxu0 %v1229
    %v1324 = vpop.f32.mrf.mxu0
    %v1325 = vadd.f32 0.0, %v1324
    %v1326 = vpop.f32.mrf.mxu0
    %v1327 = vadd.f32 0.0, %v1326
    %v1328 = vpop.f32.mrf.mxu0
    %v1329 = vadd.f32 0.0, %v1328
    %v1330 = vpop.f32.mrf.mxu0
    %v1331 = vadd.f32 0.0, %v1330
    %1332 = vmatprep.mubr.bf16.mxu0 0
    %1333 = vmatmul.mubr.bf16.gmra.mxu0 %v1232
    %v1334 = vpop.f32.mrf.mxu0
    %v1335 = vadd.f32 0.0, %v1334
    %v1336 = vpop.f32.mrf.mxu0
    %v1337 = vadd.f32 0.0, %v1336
    %v1338 = vpop.f32.mrf.mxu0
    %v1339 = vadd.f32 0.0, %v1338
    %v1340 = vpop.f32.mrf.mxu0
    %v1341 = vadd.f32 0.0, %v1340
    %1342 = vmatprep.mubr.bf16.mxu0 0
    %1343 = vmatmul.mubr.bf16.gmra.mxu0 %v1235
    %v1344 = vpop.f32.mrf.mxu0
    %v1345 = vadd.f32 0.0, %v1344
    %v1346 = vpop.f32.mrf.mxu0
    %v1347 = vadd.f32 0.0, %v1346
    %v1348 = vpop.f32.mrf.mxu0
    %v1349 = vadd.f32 0.0, %v1348
    %v1350 = vpop.f32.mrf.mxu0
    %v1351 = vadd.f32 0.0, %v1350
    %1352 = vmatprep.mubr.bf16.mxu0 0
    %1353 = vmatmul.mubr.bf16.gmra.mxu0 %v1238
    %v1354 = vpop.f32.mrf.mxu0
    %v1355 = vadd.f32 0.0, %v1354
    %v1356 = vpop.f32.mrf.mxu0
    %v1357 = vadd.f32 0.0, %v1356
    %v1358 = vpop.f32.mrf.mxu0
    %v1359 = vadd.f32 0.0, %v1358
    %v1360 = vpop.f32.mrf.mxu0
    %v1361 = vadd.f32 0.0, %v1360
    %1362 = vdwg.mxu0
    %1363 = vmatprep.subr.bf16.mxu0 0
    %1364 = vmatpush1.bf16.msra.mxu0 0
    %1365 = vmatprep.subr.bf16.mxu0 0
    %1366 = vmatpush1.bf16.msra.mxu0 0
    %1367 = vmatprep.subr.bf16.mxu0 0
    %1368 = vmatpush1.bf16.msra.mxu0 0
    %1369 = vmatprep.subr.bf16.mxu0 0
    %1370 = vmatpush1.bf16.msra.mxu0 0
    %1371 = vmatprep.subr.bf16.mxu0 0
    %1372 = vmatpush1.bf16.msra.mxu0 0
    %1373 = vmatprep.subr.bf16.mxu0 0
    %1374 = vmatpush1.bf16.msra.mxu0 0
    %1375 = vmatprep.subr.bf16.mxu0 0
    %1376 = vmatpush1.bf16.msra.mxu0 0
    %1377 = vmatprep.subr.bf16.mxu0 %v1166
    %1378 = vmatpush1.bf16.msra.mxu0 %v1165
    %1379 = vmatprep.subr.bf16.mxu0 0
    %1380 = vmatpush2.bf16.msra.mxu0 0
    %1381 = vmatprep.subr.bf16.mxu0 0
    %1382 = vmatpush2.bf16.msra.mxu0 0
    %1383 = vmatprep.subr.bf16.mxu0 0
    %1384 = vmatpush2.bf16.msra.mxu0 0
    %1385 = vmatprep.subr.bf16.mxu0 0
    %1386 = vmatpush2.bf16.msra.mxu0 0
    %1387 = vmatprep.subr.bf16.mxu0 0
    %1388 = vmatpush2.bf16.msra.mxu0 0
    %1389 = vmatprep.subr.bf16.mxu0 0
    %1390 = vmatpush2.bf16.msra.mxu0 0
    %1391 = vmatprep.subr.bf16.mxu0 0
    %1392 = vmatpush2.bf16.msra.mxu0 0
    %1393 = vmatprep.subr.bf16.mxu0 0
    %1394 = vmatpush2.bf16.msra.mxu0 0
    %1395 = vmatprep.mubr.bf16.mxu0 0
    %1396 = vmatmul.mubr.bf16.gmra.mxu0 %v1214
    %v1397 = vpop.f32.mrf.mxu0
    %v1398 = vadd.f32 0.0, %v1397
    %v1399 = vpop.f32.mrf.mxu0
    %v1400 = vadd.f32 0.0, %v1399
    %v1401 = vpop.f32.mrf.mxu0
    %v1402 = vadd.f32 0.0, %v1401
    %v1403 = vpop.f32.mrf.mxu0
    %v1404 = vadd.f32 0.0, %v1403
    %1405 = vmatprep.mubr.bf16.mxu0 0
    %1406 = vmatmul.mubr.bf16.gmra.mxu0 %v1217
    %v1407 = vpop.f32.mrf.mxu0
    %v1408 = vadd.f32 0.0, %v1407
    %v1409 = vpop.f32.mrf.mxu0
    %v1410 = vadd.f32 0.0, %v1409
    %v1411 = vpop.f32.mrf.mxu0
    %v1412 = vadd.f32 0.0, %v1411
    %v1413 = vpop.f32.mrf.mxu0
    %v1414 = vadd.f32 0.0, %v1413
    %1415 = vmatprep.mubr.bf16.mxu0 0
    %1416 = vmatmul.mubr.bf16.gmra.mxu0 %v1220
    %v1417 = vpop.f32.mrf.mxu0
    %v1418 = vadd.f32 0.0, %v1417
    %v1419 = vpop.f32.mrf.mxu0
    %v1420 = vadd.f32 0.0, %v1419
    %v1421 = vpop.f32.mrf.mxu0
    %v1422 = vadd.f32 0.0, %v1421
    %v1423 = vpop.f32.mrf.mxu0
    %v1424 = vadd.f32 0.0, %v1423
    %1425 = vmatprep.mubr.bf16.mxu0 0
    %1426 = vmatmul.mubr.bf16.gmra.mxu0 %v1223
    %v1427 = vpop.f32.mrf.mxu0
    %v1428 = vadd.f32 0.0, %v1427
    %v1429 = vpop.f32.mrf.mxu0
    %v1430 = vadd.f32 0.0, %v1429
    %v1431 = vpop.f32.mrf.mxu0
    %v1432 = vadd.f32 0.0, %v1431
    %v1433 = vpop.f32.mrf.mxu0
    %v1434 = vadd.f32 0.0, %v1433
    %1435 = vmatprep.mubr.bf16.mxu0 0
    %1436 = vmatmul.mubr.bf16.gmra.mxu0 %v1226
    %v1437 = vpop.f32.mrf.mxu0
    %v1438 = vadd.f32 0.0, %v1437
    %v1439 = vpop.f32.mrf.mxu0
    %v1440 = vadd.f32 0.0, %v1439
    %v1441 = vpop.f32.mrf.mxu0
    %v1442 = vadd.f32 0.0, %v1441
    %v1443 = vpop.f32.mrf.mxu0
    %v1444 = vadd.f32 0.0, %v1443
    %1445 = vmatprep.mubr.bf16.mxu0 0
    %1446 = vmatmul.mubr.bf16.gmra.mxu0 %v1229
    %v1447 = vpop.f32.mrf.mxu0
    %v1448 = vadd.f32 0.0, %v1447
    %v1449 = vpop.f32.mrf.mxu0
    %v1450 = vadd.f32 0.0, %v1449
    %v1451 = vpop.f32.mrf.mxu0
    %v1452 = vadd.f32 0.0, %v1451
    %v1453 = vpop.f32.mrf.mxu0
    %v1454 = vadd.f32 0.0, %v1453
    %1455 = vmatprep.mubr.bf16.mxu0 0
    %1456 = vmatmul.mubr.bf16.gmra.mxu0 %v1232
    %v1457 = vpop.f32.mrf.mxu0
    %v1458 = vadd.f32 0.0, %v1457
    %v1459 = vpop.f32.mrf.mxu0
    %v1460 = vadd.f32 0.0, %v1459
    %v1461 = vpop.f32.mrf.mxu0
    %v1462 = vadd.f32 0.0, %v1461
    %v1463 = vpop.f32.mrf.mxu0
    %v1464 = vadd.f32 0.0, %v1463
    %1465 = vmatprep.mubr.bf16.mxu0 0
    %1466 = vmatmul.mubr.bf16.gmra.mxu0 %v1235
    %v1467 = vpop.f32.mrf.mxu0
    %v1468 = vadd.f32 0.0, %v1467
    %v1469 = vpop.f32.mrf.mxu0
    %v1470 = vadd.f32 0.0, %v1469
    %v1471 = vpop.f32.mrf.mxu0
    %v1472 = vadd.f32 0.0, %v1471
    %v1473 = vpop.f32.mrf.mxu0
    %v1474 = vadd.f32 0.0, %v1473
    %1475 = vmatprep.mubr.bf16.mxu0 0
    %1476 = vmatmul.mubr.bf16.gmra.mxu0 %v1238
    %v1477 = vpop.f32.mrf.mxu0
    %v1478 = vadd.f32 0.0, %v1477
    %v1479 = vpop.f32.mrf.mxu0
    %v1480 = vadd.f32 0.0, %v1479
    %v1481 = vpop.f32.mrf.mxu0
    %v1482 = vadd.f32 0.0, %v1481
    %v1483 = vpop.f32.mrf.mxu0
    %v1484 = vadd.f32 0.0, %v1483
    %1485 = vdwg.mxu0
    %1486 = vrot.lane.b32.xlu0 %v1275, 17
    %v1487 = vpop.permute.xlu0 %1486
    %1488 = vrot.lane.b32.xlu0 %v1279, 17
    %v1489 = vpop.permute.xlu0 %1488
    %1490 = vrot.lane.b32.xlu0 %v1277, 17
    %v1491 = vpop.permute.xlu0 %1490
    %1492 = vrot.lane.b32.xlu0 %v1281, 17
    %v1493 = vpop.permute.xlu0 %1492
    %1494 = vrot.lane.b32.xlu0 %v1398, 17
    %v1495 = vpop.permute.xlu0 %1494
    %1496 = vrot.lane.b32.xlu0 %v1402, 17
    %v1497 = vpop.permute.xlu0 %1496
    %1498 = vrot.lane.b32.xlu0 %v1400, 17
    %v1499 = vpop.permute.xlu0 %1498
    %1500 = vrot.lane.b32.xlu0 %v1404, 17
    %v1501 = vpop.permute.xlu0 %1500
    %v1502 = vsel %vm606, %v1495, %v1499
    %v1503 = vsel %vm606, %v1497, %v1501
    %v1504 = vsel %vm606, %v1491, %v1495
    %v1505 = vsel %vm606, %v1493, %v1497
    %v1506 = vsel %vm606, %v1487, %v1491
    %v1507 = vsel %vm606, %v1489, %v1493
    %v1508 = vsel %vm606, %v1499, %v1487
    %v1509 = vsel %vm606, %v1501, %v1489
    %v1510 = vmul.f32 %v620, %v1508
    %v1511 = vmul.f32 %v624, %v1506
    %v1512 = vmul.f32 %v628, %v1504
    %v1513 = vmul.f32 %v632, %v1502
    %v1514 = vmul.f32 %v620, %v1509
    %v1515 = vmul.f32 %v624, %v1507
    %v1516 = vmul.f32 %v628, %v1505
    %v1517 = vmul.f32 %v632, %v1503
    %1518 = vrot.lane.b32.xlu0 %v1285, 16
    %v1519 = vpop.permute.xlu0 %1518
    %1520 = vrot.lane.b32.xlu0 %v1289, 16
    %v1521 = vpop.permute.xlu0 %1520
    %1522 = vrot.lane.b32.xlu0 %v1287, 16
    %v1523 = vpop.permute.xlu0 %1522
    %1524 = vrot.lane.b32.xlu0 %v1291, 16
    %v1525 = vpop.permute.xlu0 %1524
    %1526 = vrot.lane.b32.xlu0 %v1408, 16
    %v1527 = vpop.permute.xlu0 %1526
    %1528 = vrot.lane.b32.xlu0 %v1412, 16
    %v1529 = vpop.permute.xlu0 %1528
    %1530 = vrot.lane.b32.xlu0 %v1410, 16
    %v1531 = vpop.permute.xlu0 %1530
    %1532 = vrot.lane.b32.xlu0 %v1414, 16
    %v1533 = vpop.permute.xlu0 %1532
    %v1534 = vsel %vm661, %v1527, %v1531
    %v1535 = vsel %vm661, %v1529, %v1533
    %v1536 = vsel %vm661, %v1523, %v1527
    %v1537 = vsel %vm661, %v1525, %v1529
    %v1538 = vsel %vm661, %v1519, %v1523
    %v1539 = vsel %vm661, %v1521, %v1525
    %v1540 = vsel %vm661, %v1531, %v1519
    %v1541 = vsel %vm661, %v1533, %v1521
    %v1542 = vmul.f32 %v676, %v1540
    %v1543 = vmul.f32 %v680, %v1538
    %v1544 = vmul.f32 %v684, %v1536
    %v1545 = vmul.f32 %v688, %v1534
    %v1546 = vmul.f32 %v676, %v1541
    %v1547 = vmul.f32 %v680, %v1539
    %v1548 = vmul.f32 %v684, %v1537
    %v1549 = vmul.f32 %v688, %v1535
    %v1550 = vadd.f32 %v1510, %v1542
    %v1551 = vadd.f32 %v1511, %v1543
    %v1552 = vadd.f32 %v1512, %v1544
    %v1553 = vadd.f32 %v1513, %v1545
    %v1554 = vadd.f32 %v1514, %v1546
    %v1555 = vadd.f32 %v1515, %v1547
    %v1556 = vadd.f32 %v1516, %v1548
    %v1557 = vadd.f32 %v1517, %v1549
    %1558 = vrot.lane.b32.xlu0 %v1295, 15
    %v1559 = vpop.permute.xlu0 %1558
    %1560 = vrot.lane.b32.xlu0 %v1299, 15
    %v1561 = vpop.permute.xlu0 %1560
    %1562 = vrot.lane.b32.xlu0 %v1297, 15
    %v1563 = vpop.permute.xlu0 %1562
    %1564 = vrot.lane.b32.xlu0 %v1301, 15
    %v1565 = vpop.permute.xlu0 %1564
    %1566 = vrot.lane.b32.xlu0 %v1418, 15
    %v1567 = vpop.permute.xlu0 %1566
    %1568 = vrot.lane.b32.xlu0 %v1422, 15
    %v1569 = vpop.permute.xlu0 %1568
    %1570 = vrot.lane.b32.xlu0 %v1420, 15
    %v1571 = vpop.permute.xlu0 %1570
    %1572 = vrot.lane.b32.xlu0 %v1424, 15
    %v1573 = vpop.permute.xlu0 %1572
    %v1574 = vsel %vm725, %v1567, %v1571
    %v1575 = vsel %vm725, %v1569, %v1573
    %v1576 = vsel %vm725, %v1563, %v1567
    %v1577 = vsel %vm725, %v1565, %v1569
    %v1578 = vsel %vm725, %v1559, %v1563
    %v1579 = vsel %vm725, %v1561, %v1565
    %v1580 = vsel %vm725, %v1571, %v1559
    %v1581 = vsel %vm725, %v1573, %v1561
    %v1582 = vmul.f32 %v740, %v1580
    %v1583 = vmul.f32 %v744, %v1578
    %v1584 = vmul.f32 %v748, %v1576
    %v1585 = vmul.f32 %v752, %v1574
    %v1586 = vmul.f32 %v740, %v1581
    %v1587 = vmul.f32 %v744, %v1579
    %v1588 = vmul.f32 %v748, %v1577
    %v1589 = vmul.f32 %v752, %v1575
    %v1590 = vadd.f32 %v1550, %v1582
    %v1591 = vadd.f32 %v1551, %v1583
    %v1592 = vadd.f32 %v1552, %v1584
    %v1593 = vadd.f32 %v1553, %v1585
    %v1594 = vadd.f32 %v1554, %v1586
    %v1595 = vadd.f32 %v1555, %v1587
    %v1596 = vadd.f32 %v1556, %v1588
    %v1597 = vadd.f32 %v1557, %v1589
    %1598 = vrot.lane.b32.xlu0 %v1305, 1
    %v1599 = vpop.permute.xlu0 %1598
    %1600 = vrot.lane.b32.xlu0 %v1309, 1
    %v1601 = vpop.permute.xlu0 %1600
    %1602 = vrot.lane.b32.xlu0 %v1307, 1
    %v1603 = vpop.permute.xlu0 %1602
    %1604 = vrot.lane.b32.xlu0 %v1311, 1
    %v1605 = vpop.permute.xlu0 %1604
    %1606 = vrot.lane.b32.xlu0 %v1428, 1
    %v1607 = vpop.permute.xlu0 %1606
    %1608 = vrot.lane.b32.xlu0 %v1432, 1
    %v1609 = vpop.permute.xlu0 %1608
    %1610 = vrot.lane.b32.xlu0 %v1430, 1
    %v1611 = vpop.permute.xlu0 %1610
    %1612 = vrot.lane.b32.xlu0 %v1434, 1
    %v1613 = vpop.permute.xlu0 %1612
    %v1614 = vsel %vm789, %v1607, %v1611
    %v1615 = vsel %vm789, %v1609, %v1613
    %v1616 = vsel %vm789, %v1603, %v1607
    %v1617 = vsel %vm789, %v1605, %v1609
    %v1618 = vsel %vm789, %v1599, %v1603
    %v1619 = vsel %vm789, %v1601, %v1605
    %v1620 = vsel %vm789, %v1611, %v1599
    %v1621 = vsel %vm789, %v1613, %v1601
    %v1622 = vmul.f32 %v804, %v1620
    %v1623 = vmul.f32 %v808, %v1618
    %v1624 = vmul.f32 %v812, %v1616
    %v1625 = vmul.f32 %v816, %v1614
    %v1626 = vmul.f32 %v804, %v1621
    %v1627 = vmul.f32 %v808, %v1619
    %v1628 = vmul.f32 %v812, %v1617
    %v1629 = vmul.f32 %v816, %v1615
    %v1630 = vadd.f32 %v1590, %v1622
    %v1631 = vadd.f32 %v1591, %v1623
    %v1632 = vadd.f32 %v1592, %v1624
    %v1633 = vadd.f32 %v1593, %v1625
    %v1634 = vadd.f32 %v1594, %v1626
    %v1635 = vadd.f32 %v1595, %v1627
    %v1636 = vadd.f32 %v1596, %v1628
    %v1637 = vadd.f32 %v1597, %v1629
    %v1638 = vadd.f32 %v1630, %v1315
    %v1639 = vadd.f32 %v1631, %v1317
    %v1640 = vadd.f32 %v1632, %v1438
    %v1641 = vadd.f32 %v1633, %v1440
    %v1642 = vadd.f32 %v1634, %v1319
    %v1643 = vadd.f32 %v1635, %v1321
    %v1644 = vadd.f32 %v1636, %v1442
    %v1645 = vadd.f32 %v1637, %v1444
    %1646 = vrot.lane.b32.xlu0 %v1325, 127
    %v1647 = vpop.permute.xlu0 %1646
    %1648 = vrot.lane.b32.xlu0 %v1329, 127
    %v1649 = vpop.permute.xlu0 %1648
    %1650 = vrot.lane.b32.xlu0 %v1327, 127
    %v1651 = vpop.permute.xlu0 %1650
    %1652 = vrot.lane.b32.xlu0 %v1331, 127
    %v1653 = vpop.permute.xlu0 %1652
    %1654 = vrot.lane.b32.xlu0 %v1448, 127
    %v1655 = vpop.permute.xlu0 %1654
    %1656 = vrot.lane.b32.xlu0 %v1452, 127
    %v1657 = vpop.permute.xlu0 %1656
    %1658 = vrot.lane.b32.xlu0 %v1450, 127
    %v1659 = vpop.permute.xlu0 %1658
    %1660 = vrot.lane.b32.xlu0 %v1454, 127
    %v1661 = vpop.permute.xlu0 %1660
    %v1662 = vsel %vm861, %v1655, %v1659
    %v1663 = vsel %vm861, %v1657, %v1661
    %v1664 = vsel %vm861, %v1651, %v1655
    %v1665 = vsel %vm861, %v1653, %v1657
    %v1666 = vsel %vm861, %v1647, %v1651
    %v1667 = vsel %vm861, %v1649, %v1653
    %v1668 = vsel %vm861, %v1659, %v1647
    %v1669 = vsel %vm861, %v1661, %v1649
    %v1670 = vmul.f32 %v876, %v1666
    %v1671 = vmul.f32 %v880, %v1664
    %v1672 = vmul.f32 %v884, %v1662
    %v1673 = vmul.f32 %v888, %v1668
    %v1674 = vmul.f32 %v876, %v1667
    %v1675 = vmul.f32 %v880, %v1665
    %v1676 = vmul.f32 %v884, %v1663
    %v1677 = vmul.f32 %v888, %v1669
    %v1678 = vadd.f32 %v1638, %v1670
    %v1679 = vadd.f32 %v1639, %v1671
    %v1680 = vadd.f32 %v1640, %v1672
    %v1681 = vadd.f32 %v1641, %v1673
    %v1682 = vadd.f32 %v1642, %v1674
    %v1683 = vadd.f32 %v1643, %v1675
    %v1684 = vadd.f32 %v1644, %v1676
    %v1685 = vadd.f32 %v1645, %v1677
    %1686 = vrot.lane.b32.xlu0 %v1335, 113
    %v1687 = vpop.permute.xlu0 %1686
    %1688 = vrot.lane.b32.xlu0 %v1339, 113
    %v1689 = vpop.permute.xlu0 %1688
    %1690 = vrot.lane.b32.xlu0 %v1337, 113
    %v1691 = vpop.permute.xlu0 %1690
    %1692 = vrot.lane.b32.xlu0 %v1341, 113
    %v1693 = vpop.permute.xlu0 %1692
    %1694 = vrot.lane.b32.xlu0 %v1458, 113
    %v1695 = vpop.permute.xlu0 %1694
    %1696 = vrot.lane.b32.xlu0 %v1462, 113
    %v1697 = vpop.permute.xlu0 %1696
    %1698 = vrot.lane.b32.xlu0 %v1460, 113
    %v1699 = vpop.permute.xlu0 %1698
    %1700 = vrot.lane.b32.xlu0 %v1464, 113
    %v1701 = vpop.permute.xlu0 %1700
    %v1702 = vsel %vm925, %v1695, %v1699
    %v1703 = vsel %vm925, %v1697, %v1701
    %v1704 = vsel %vm925, %v1691, %v1695
    %v1705 = vsel %vm925, %v1693, %v1697
    %v1706 = vsel %vm925, %v1687, %v1691
    %v1707 = vsel %vm925, %v1689, %v1693
    %v1708 = vsel %vm925, %v1699, %v1687
    %v1709 = vsel %vm925, %v1701, %v1689
    %v1710 = vmul.f32 %v940, %v1706
    %v1711 = vmul.f32 %v944, %v1704
    %v1712 = vmul.f32 %v948, %v1702
    %v1713 = vmul.f32 %v952, %v1708
    %v1714 = vmul.f32 %v940, %v1707
    %v1715 = vmul.f32 %v944, %v1705
    %v1716 = vmul.f32 %v948, %v1703
    %v1717 = vmul.f32 %v952, %v1709
    %v1718 = vadd.f32 %v1678, %v1710
    %v1719 = vadd.f32 %v1679, %v1711
    %v1720 = vadd.f32 %v1680, %v1712
    %v1721 = vadd.f32 %v1681, %v1713
    %v1722 = vadd.f32 %v1682, %v1714
    %v1723 = vadd.f32 %v1683, %v1715
    %v1724 = vadd.f32 %v1684, %v1716
    %v1725 = vadd.f32 %v1685, %v1717
    %1726 = vrot.lane.b32.xlu0 %v1345, 112
    %v1727 = vpop.permute.xlu0 %1726
    %1728 = vrot.lane.b32.xlu0 %v1349, 112
    %v1729 = vpop.permute.xlu0 %1728
    %1730 = vrot.lane.b32.xlu0 %v1347, 112
    %v1731 = vpop.permute.xlu0 %1730
    %1732 = vrot.lane.b32.xlu0 %v1351, 112
    %v1733 = vpop.permute.xlu0 %1732
    %1734 = vrot.lane.b32.xlu0 %v1468, 112
    %v1735 = vpop.permute.xlu0 %1734
    %1736 = vrot.lane.b32.xlu0 %v1472, 112
    %v1737 = vpop.permute.xlu0 %1736
    %1738 = vrot.lane.b32.xlu0 %v1470, 112
    %v1739 = vpop.permute.xlu0 %1738
    %1740 = vrot.lane.b32.xlu0 %v1474, 112
    %v1741 = vpop.permute.xlu0 %1740
    %v1742 = vsel %vm989, %v1735, %v1739
    %v1743 = vsel %vm989, %v1737, %v1741
    %v1744 = vsel %vm989, %v1731, %v1735
    %v1745 = vsel %vm989, %v1733, %v1737
    %v1746 = vsel %vm989, %v1727, %v1731
    %v1747 = vsel %vm989, %v1729, %v1733
    %v1748 = vsel %vm989, %v1739, %v1727
    %v1749 = vsel %vm989, %v1741, %v1729
    %v1750 = vmul.f32 %v1004, %v1746
    %v1751 = vmul.f32 %v1008, %v1744
    %v1752 = vmul.f32 %v1012, %v1742
    %v1753 = vmul.f32 %v1016, %v1748
    %v1754 = vmul.f32 %v1004, %v1747
    %v1755 = vmul.f32 %v1008, %v1745
    %v1756 = vmul.f32 %v1012, %v1743
    %v1757 = vmul.f32 %v1016, %v1749
    %v1758 = vadd.f32 %v1718, %v1750
    %v1759 = vadd.f32 %v1719, %v1751
    %v1760 = vadd.f32 %v1720, %v1752
    %v1761 = vadd.f32 %v1721, %v1753
    %v1762 = vadd.f32 %v1722, %v1754
    %v1763 = vadd.f32 %v1723, %v1755
    %v1764 = vadd.f32 %v1724, %v1756
    %v1765 = vadd.f32 %v1725, %v1757
    %1766 = vrot.lane.b32.xlu0 %v1355, 111
    %v1767 = vpop.permute.xlu0 %1766
    %1768 = vrot.lane.b32.xlu0 %v1359, 111
    %v1769 = vpop.permute.xlu0 %1768
    %1770 = vrot.lane.b32.xlu0 %v1357, 111
    %v1771 = vpop.permute.xlu0 %1770
    %1772 = vrot.lane.b32.xlu0 %v1361, 111
    %v1773 = vpop.permute.xlu0 %1772
    %1774 = vrot.lane.b32.xlu0 %v1478, 111
    %v1775 = vpop.permute.xlu0 %1774
    %1776 = vrot.lane.b32.xlu0 %v1482, 111
    %v1777 = vpop.permute.xlu0 %1776
    %1778 = vrot.lane.b32.xlu0 %v1480, 111
    %v1779 = vpop.permute.xlu0 %1778
    %1780 = vrot.lane.b32.xlu0 %v1484, 111
    %v1781 = vpop.permute.xlu0 %1780
    %v1782 = vsel %vm1053, %v1775, %v1779
    %v1783 = vsel %vm1053, %v1777, %v1781
    %v1784 = vsel %vm1053, %v1771, %v1775
    %v1785 = vsel %vm1053, %v1773, %v1777
    %v1786 = vsel %vm1053, %v1767, %v1771
    %v1787 = vsel %vm1053, %v1769, %v1773
    %v1788 = vsel %vm1053, %v1779, %v1767
    %v1789 = vsel %vm1053, %v1781, %v1769
    %v1790 = vmul.f32 %v1068, %v1786
    %v1791 = vmul.f32 %v1072, %v1784
    %v1792 = vmul.f32 %v1076, %v1782
    %v1793 = vmul.f32 %v1080, %v1788
    %v1794 = vmul.f32 %v1068, %v1787
    %v1795 = vmul.f32 %v1072, %v1785
    %v1796 = vmul.f32 %v1076, %v1783
    %v1797 = vmul.f32 %v1080, %v1789
    %v1798 = vadd.f32 %v1758, %v1790
    %v1799 = vadd.f32 %v1759, %v1791
    %v1800 = vadd.f32 %v1760, %v1792
    %v1801 = vadd.f32 %v1761, %v1793
    %v1802 = vadd.f32 %v1762, %v1794
    %v1803 = vadd.f32 %v1763, %v1795
    %v1804 = vadd.f32 %v1764, %v1796
    %v1805 = vadd.f32 %v1765, %v1797
    %v1806 = vld [vmem:[%s9] sm:$0xff]
    %v1807 = vld [vmem:[%s9 + $0x8] sm:$0xff]
    %1809 = vset.pattern.permute.xlu0 0
    %1810 = vperm.xlu0 %1809, %v1806
    %v1811 = vpop.permute.xlu0 %1810
    %1814 = vset.pattern.permute.xlu0 0
    %1815 = vperm.xlu0 %1814, %v1807
    %v1816 = vpop.permute.xlu0 %1815
    %v1818 = vadd.f32 %v1798, %v1811
    %v1819 = vadd.f32 %v1799, %v1811
    %v1820 = vadd.f32 %v1800, %v1811
    %v1821 = vadd.f32 %v1801, %v1811
    %v1822 = vadd.f32 %v1802, %v1816
    %v1823 = vadd.f32 %v1803, %v1816
    %v1824 = vadd.f32 %v1804, %v1816
    %v1825 = vadd.f32 %v1805, %v1816
    %vm1826 = vcmp.ge.f32.partialorder %v1818, 0.0
    %vm1827 = vcmp.ge.f32.partialorder %v1819, 0.0
    %vm1828 = vcmp.ge.f32.partialorder %v1820, 0.0
    %vm1829 = vcmp.ge.f32.partialorder %v1821, 0.0
    %vm1830 = vcmp.ge.f32.partialorder %v1822, 0.0
    %vm1831 = vcmp.ge.f32.partialorder %v1823, 0.0
    %vm1832 = vcmp.ge.f32.partialorder %v1824, 0.0
    %vm1833 = vcmp.ge.f32.partialorder %v1825, 0.0
    %v1834 = vmul.f32 %v1818, 0.2
    %v1835 = vmul.f32 %v1819, 0.2
    %v1836 = vmul.f32 %v1820, 0.2
    %v1837 = vmul.f32 %v1821, 0.2
    %v1838 = vmul.f32 %v1822, 0.2
    %v1839 = vmul.f32 %v1823, 0.2
    %v1840 = vmul.f32 %v1824, 0.2
    %v1841 = vmul.f32 %v1825, 0.2
    %v1842 = vsel %vm1826, %v1818, %v1834
    %v1843 = vsel %vm1827, %v1819, %v1835
    %v1844 = vsel %vm1828, %v1820, %v1836
    %v1845 = vsel %vm1829, %v1821, %v1837
    %v1846 = vsel %vm1830, %v1822, %v1838
    %v1847 = vsel %vm1831, %v1823, %v1839
    %v1848 = vsel %vm1832, %v1824, %v1840
    %v1849 = vsel %vm1833, %v1825, %v1841
    %v1850 = vpack.c.bf16 %v1846, %v1842
    %v1851 = vpack.c.bf16 %v1847, %v1843
    %v1852 = vpack.c.bf16 %v1848, %v1844
    %v1853 = vpack.c.bf16 %v1849, %v1845
    %v1854 = vld [vmem:[%s11] sm:$0xf]
    %v1855 = vld [vmem:[%s11 + $0x4] sm:$0xf]
    %v1856 = vld [vmem:[%s11 + $0x8] sm:$0xf]
    %v1857 = vld [vmem:[%s11 + $0xc] sm:$0xf]
    %v1858 = vld [vmem:[%s11 + $0x10] sm:$0xf]
    %v1859 = vld [vmem:[%s11 + $0x14] sm:$0xf]
    %v1860 = vld [vmem:[%s11 + $0x18] sm:$0xf]
    %v1861 = vld [vmem:[%s11 + $0x1c] sm:$0xf]
    %v1862 = vld [vmem:[%s11 + $0x20] sm:$0xf]
    %v1863 = vld [vmem:[%s11 + $0x24] sm:$0xf]
    %v1864 = vld [vmem:[%s11 + $0x28] sm:$0xf]
    %v1865 = vld [vmem:[%s11 + $0x2c] sm:$0xf]
    %v1866 = vld [vmem:[%s11 + $0x30] sm:$0xf]
    %v1867 = vld [vmem:[%s11 + $0x34] sm:$0xf]
    %v1868 = vld [vmem:[%s11 + $0x38] sm:$0xf]
    %v1869 = vld [vmem:[%s11 + $0x3c] sm:$0xf]
    %v1870 = vld [vmem:[%s11 + $0x40] sm:$0xf]
    %v1871 = vld [vmem:[%s11 + $0x44] sm:$0xf]
    %v1872 = vld [vmem:[%s11 + $0x48] sm:$0xf]
    %v1873 = vld [vmem:[%s11 + $0x4c] sm:$0xf]
    %v1874 = vld [vmem:[%s11 + $0x50] sm:$0xf]
    %v1875 = vld [vmem:[%s11 + $0x54] sm:$0xf]
    %v1876 = vld [vmem:[%s11 + $0x58] sm:$0xf]
    %v1877 = vld [vmem:[%s11 + $0x5c] sm:$0xf]
    %v1878 = vld [vmem:[%s11 + $0x60] sm:$0xf]
    %v1879 = vld [vmem:[%s11 + $0x64] sm:$0xf]
    %v1880 = vld [vmem:[%s11 + $0x68] sm:$0xf]
    %v1881 = vld [vmem:[%s11 + $0x6c] sm:$0xf]
    %v1882 = vld [vmem:[%s11 + $0x70] sm:$0xf]
    %v1883 = vld [vmem:[%s11 + $0x74] sm:$0xf]
    %v1884 = vld [vmem:[%s11 + $0x78] sm:$0xf]
    %v1885 = vld [vmem:[%s11 + $0x7c] sm:$0xf]
    %v1886 = vld [vmem:[%s11 + $0x80] sm:$0xf]
    %v1887 = vld [vmem:[%s11 + $0x84] sm:$0xf]
    %v1888 = vld [vmem:[%s11 + $0x88] sm:$0xf]
    %v1889 = vld [vmem:[%s11 + $0x8c] sm:$0xf]
    %v1890 = vld [vmem:[%s11 + $0x90] sm:$0xf]
    %v1891 = vld [vmem:[%s11 + $0x94] sm:$0xf]
    %v1892 = vld [vmem:[%s11 + $0x98] sm:$0xf]
    %v1893 = vld [vmem:[%s11 + $0x9c] sm:$0xf]
    %v1894 = vld [vmem:[%s11 + $0xa0] sm:$0xf]
    %v1895 = vld [vmem:[%s11 + $0xa4] sm:$0xf]
    %v1896 = vld [vmem:[%s11 + $0xa8] sm:$0xf]
    %v1897 = vld [vmem:[%s11 + $0xac] sm:$0xf]
    %v1898 = vld [vmem:[%s11 + $0xb0] sm:$0xf]
    %v1899 = vld [vmem:[%s11 + $0xb4] sm:$0xf]
    %v1900 = vld [vmem:[%s11 + $0xb8] sm:$0xf]
    %v1901 = vld [vmem:[%s11 + $0xbc] sm:$0xf]
    %v1902 = vld [vmem:[%s11 + $0xc0] sm:$0xf]
    %v1903 = vld [vmem:[%s11 + $0xc4] sm:$0xf]
    %v1904 = vld [vmem:[%s11 + $0xc8] sm:$0xf]
    %v1905 = vld [vmem:[%s11 + $0xcc] sm:$0xf]
    %v1906 = vld [vmem:[%s11 + $0xd0] sm:$0xf]
    %v1907 = vld [vmem:[%s11 + $0xd4] sm:$0xf]
    %v1908 = vld [vmem:[%s11 + $0xd8] sm:$0xf]
    %v1909 = vld [vmem:[%s11 + $0xdc] sm:$0xf]
    %v1910 = vld [vmem:[%s11 + $0xe0] sm:$0xf]
    %v1911 = vld [vmem:[%s11 + $0xe4] sm:$0xf]
    %v1912 = vld [vmem:[%s11 + $0xe8] sm:$0xf]
    %v1913 = vld [vmem:[%s11 + $0xec] sm:$0xf]
    %v1914 = vld [vmem:[%s11 + $0xf0] sm:$0xf]
    %v1915 = vld [vmem:[%s11 + $0xf4] sm:$0xf]
    %v1916 = vld [vmem:[%s11 + $0xf8] sm:$0xf]
    %v1917 = vld [vmem:[%s11 + $0xfc] sm:$0xf]
    %v1982 = vunpack.c.l.b16 %v1854
    %v1983 = vunpack.c.l.b16 %v1855
    %v1984 = vunpack.c.l.b16 %v1856
    %v1985 = vunpack.c.l.b16 %v1857
    %v1986 = vunpack.c.l.b16 %v1858
    %v1987 = vunpack.c.l.b16 %v1859
    %v1988 = vunpack.c.l.b16 %v1860
    %v1989 = vunpack.c.l.b16 %v1861
    %v1990 = vunpack.c.l.b16 %v1862
    %v1991 = vunpack.c.l.b16 %v1863
    %v1992 = vunpack.c.l.b16 %v1864
    %v1993 = vunpack.c.l.b16 %v1865
    %v1994 = vunpack.c.l.b16 %v1866
    %v1995 = vunpack.c.l.b16 %v1867
    %v1996 = vunpack.c.l.b16 %v1868
    %v1997 = vunpack.c.l.b16 %v1869
    %v1998 = vunpack.c.l.b16 %v1870
    %v1999 = vunpack.c.l.b16 %v1871
    %v2000 = vunpack.c.l.b16 %v1872
    %v2001 = vunpack.c.l.b16 %v1873
    %v2002 = vunpack.c.l.b16 %v1874
    %v2003 = vunpack.c.l.b16 %v1875
    %v2004 = vunpack.c.l.b16 %v1876
    %v2005 = vunpack.c.l.b16 %v1877
    %v2006 = vunpack.c.l.b16 %v1878
    %v2007 = vunpack.c.l.b16 %v1879
    %v2008 = vunpack.c.l.b16 %v1880
    %v2009 = vunpack.c.l.b16 %v1881
    %v2010 = vunpack.c.l.b16 %v1882
    %v2011 = vunpack.c.l.b16 %v1883
    %v2012 = vunpack.c.l.b16 %v1884
    %v2013 = vunpack.c.l.b16 %v1885
    %v2014 = vunpack.c.l.b16 %v1886
    %v2015 = vunpack.c.l.b16 %v1887
    %v2016 = vunpack.c.l.b16 %v1888
    %v2017 = vunpack.c.l.b16 %v1889
    %v2018 = vunpack.c.l.b16 %v1890
    %v2019 = vunpack.c.l.b16 %v1891
    %v2020 = vunpack.c.l.b16 %v1892
    %v2021 = vunpack.c.l.b16 %v1893
    %v2022 = vunpack.c.l.b16 %v1894
    %v2023 = vunpack.c.l.b16 %v1895
    %v2024 = vunpack.c.l.b16 %v1896
    %v2025 = vunpack.c.l.b16 %v1897
    %v2026 = vunpack.c.l.b16 %v1898
    %v2027 = vunpack.c.l.b16 %v1899
    %v2028 = vunpack.c.l.b16 %v1900
    %v2029 = vunpack.c.l.b16 %v1901
    %v2030 = vunpack.c.l.b16 %v1902
    %v2031 = vunpack.c.l.b16 %v1903
    %v2032 = vunpack.c.l.b16 %v1904
    %v2033 = vunpack.c.l.b16 %v1905
    %v2034 = vunpack.c.l.b16 %v1906
    %v2035 = vunpack.c.l.b16 %v1907
    %v2036 = vunpack.c.l.b16 %v1908
    %v2037 = vunpack.c.l.b16 %v1909
    %v2038 = vunpack.c.l.b16 %v1910
    %v2039 = vunpack.c.l.b16 %v1911
    %v2040 = vunpack.c.l.b16 %v1912
    %v2041 = vunpack.c.l.b16 %v1913
    %v2042 = vunpack.c.l.b16 %v1914
    %v2043 = vunpack.c.l.b16 %v1915
    %v2044 = vunpack.c.l.b16 %v1916
    %v2045 = vunpack.c.l.b16 %v1917
    %v2046 = vpack.c.b16 %v1983, %v1982
    %v2047 = vpack.c.b16 %v1985, %v1984
    %v2048 = vpack.c.b16 %v1987, %v1986
    %v2049 = vpack.c.b16 %v1989, %v1988
    %v2050 = vpack.c.b16 %v1991, %v1990
    %v2051 = vpack.c.b16 %v1993, %v1992
    %v2052 = vpack.c.b16 %v1995, %v1994
    %v2053 = vpack.c.b16 %v1997, %v1996
    %v2054 = vpack.c.b16 %v1999, %v1998
    %v2055 = vpack.c.b16 %v2001, %v2000
    %v2056 = vpack.c.b16 %v2003, %v2002
    %v2057 = vpack.c.b16 %v2005, %v2004
    %v2058 = vpack.c.b16 %v2007, %v2006
    %v2059 = vpack.c.b16 %v2009, %v2008
    %v2060 = vpack.c.b16 %v2011, %v2010
    %v2061 = vpack.c.b16 %v2013, %v2012
    %v2062 = vpack.c.b16 %v2015, %v2014
    %v2063 = vpack.c.b16 %v2017, %v2016
    %v2064 = vpack.c.b16 %v2019, %v2018
    %v2065 = vpack.c.b16 %v2021, %v2020
    %v2066 = vpack.c.b16 %v2023, %v2022
    %v2067 = vpack.c.b16 %v2025, %v2024
    %v2068 = vpack.c.b16 %v2027, %v2026
    %v2069 = vpack.c.b16 %v2029, %v2028
    %v2070 = vpack.c.b16 %v2031, %v2030
    %v2071 = vpack.c.b16 %v2033, %v2032
    %v2072 = vpack.c.b16 %v2035, %v2034
    %v2073 = vpack.c.b16 %v2037, %v2036
    %v2074 = vpack.c.b16 %v2039, %v2038
    %v2075 = vpack.c.b16 %v2041, %v2040
    %v2076 = vpack.c.b16 %v2043, %v2042
    %v2077 = vpack.c.b16 %v2045, %v2044
    %2110 = vmatprep.subr.bf16.mxu0 0
    %2111 = vmatpush1.bf16.msra.mxu0 %v2053
    %2112 = vmatprep.subr.bf16.mxu0 0
    %2113 = vmatpush1.bf16.msra.mxu0 %v2052
    %2114 = vmatprep.subr.bf16.mxu0 0
    %2115 = vmatpush1.bf16.msra.mxu0 %v2051
    %2116 = vmatprep.subr.bf16.mxu0 0
    %2117 = vmatpush1.bf16.msra.mxu0 %v2050
    %2118 = vmatprep.subr.bf16.mxu0 0
    %2119 = vmatpush1.bf16.msra.mxu0 %v2049
    %2120 = vmatprep.subr.bf16.mxu0 0
    %2121 = vmatpush1.bf16.msra.mxu0 %v2048
    %2122 = vmatprep.subr.bf16.mxu0 0
    %2123 = vmatpush1.bf16.msra.mxu0 %v2047
    %2124 = vmatprep.subr.bf16.mxu0 0
    %2125 = vmatpush1.bf16.msra.mxu0 %v2046
    %2126 = vmatprep.subr.bf16.mxu0 0
    %2127 = vmatpush2.bf16.msra.mxu0 %v2061
    %2128 = vmatprep.subr.bf16.mxu0 0
    %2129 = vmatpush2.bf16.msra.mxu0 %v2060
    %2130 = vmatprep.subr.bf16.mxu0 0
    %2131 = vmatpush2.bf16.msra.mxu0 %v2059
    %2132 = vmatprep.subr.bf16.mxu0 0
    %2133 = vmatpush2.bf16.msra.mxu0 %v2058
    %2134 = vmatprep.subr.bf16.mxu0 0
    %2135 = vmatpush2.bf16.msra.mxu0 %v2057
    %2136 = vmatprep.subr.bf16.mxu0 0
    %2137 = vmatpush2.bf16.msra.mxu0 %v2056
    %2138 = vmatprep.subr.bf16.mxu0 0
    %2139 = vmatpush2.bf16.msra.mxu0 %v2055
    %2140 = vmatprep.subr.bf16.mxu0 0
    %2141 = vmatpush2.bf16.msra.mxu0 %v2054
    %2142 = vmatprep.mubr.bf16.mxu0 %v1851
    %2143 = vmatmul.mubr.bf16.gmra.mxu0 %v1850
    %v2144 = vpop.f32.mrf.mxu0
    %v2145 = vadd.f32 0.0, %v2144
    %v2146 = vpop.f32.mrf.mxu0
    %v2147 = vpop.f32.mrf.mxu0
    %v2148 = vadd.f32 0.0, %v2147
    %v2149 = vpop.f32.mrf.mxu0
    %2150 = vdwg.mxu0
    %2151 = vmatprep.subr.bf16.mxu0 0
    %2152 = vmatpush1.bf16.msra.mxu0 %v2069
    %2153 = vmatprep.subr.bf16.mxu0 0
    %2154 = vmatpush1.bf16.msra.mxu0 %v2068
    %2155 = vmatprep.subr.bf16.mxu0 0
    %2156 = vmatpush1.bf16.msra.mxu0 %v2067
    %2157 = vmatprep.subr.bf16.mxu0 0
    %2158 = vmatpush1.bf16.msra.mxu0 %v2066
    %2159 = vmatprep.subr.bf16.mxu0 0
    %2160 = vmatpush1.bf16.msra.mxu0 %v2065
    %2161 = vmatprep.subr.bf16.mxu0 0
    %2162 = vmatpush1.bf16.msra.mxu0 %v2064
    %2163 = vmatprep.subr.bf16.mxu0 0
    %2164 = vmatpush1.bf16.msra.mxu0 %v2063
    %2165 = vmatprep.subr.bf16.mxu0 0
    %2166 = vmatpush1.bf16.msra.mxu0 %v2062
    %2167 = vmatprep.subr.bf16.mxu0 0
    %2168 = vmatpush2.bf16.msra.mxu0 %v2077
    %2169 = vmatprep.subr.bf16.mxu0 0
    %2170 = vmatpush2.bf16.msra.mxu0 %v2076
    %2171 = vmatprep.subr.bf16.mxu0 0
    %2172 = vmatpush2.bf16.msra.mxu0 %v2075
    %2173 = vmatprep.subr.bf16.mxu0 0
    %2174 = vmatpush2.bf16.msra.mxu0 %v2074
    %2175 = vmatprep.subr.bf16.mxu0 0
    %2176 = vmatpush2.bf16.msra.mxu0 %v2073
    %2177 = vmatprep.subr.bf16.mxu0 0
    %2178 = vmatpush2.bf16.msra.mxu0 %v2072
    %2179 = vmatprep.subr.bf16.mxu0 0
    %2180 = vmatpush2.bf16.msra.mxu0 %v2071
    %2181 = vmatprep.subr.bf16.mxu0 0
    %2182 = vmatpush2.bf16.msra.mxu0 %v2070
    %2183 = vmatprep.mubr.bf16.mxu0 %v1853
    %2184 = vmatmul.mubr.bf16.gmra.mxu0 %v1852
    %v2185 = vpop.f32.mrf.mxu0
    %v2186 = vadd.f32 %v2145, %v2185
    %v2187 = vpop.f32.mrf.mxu0
    %v2188 = vpop.f32.mrf.mxu0
    %v2189 = vadd.f32 %v2148, %v2188
    %v2190 = vpop.f32.mrf.mxu0
    %2191 = vdwg.mxu0
    %2196 = vmatprep.subr.bf16.mxu0 0
    %2197 = vmatpush1.bf16.msra.mxu0 %v2053
    %2198 = vmatprep.subr.bf16.mxu0 0
    %2199 = vmatpush1.bf16.msra.mxu0 %v2052
    %2200 = vmatprep.subr.bf16.mxu0 0
    %2201 = vmatpush1.bf16.msra.mxu0 %v2051
    %2202 = vmatprep.subr.bf16.mxu0 0
    %2203 = vmatpush1.bf16.msra.mxu0 %v2050
    %2204 = vmatprep.subr.bf16.mxu0 0
    %2205 = vmatpush1.bf16.msra.mxu0 %v2049
    %2206 = vmatprep.subr.bf16.mxu0 0
    %2207 = vmatpush1.bf16.msra.mxu0 %v2048
    %2208 = vmatprep.subr.bf16.mxu0 0
    %2209 = vmatpush1.bf16.msra.mxu0 %v2047
    %2210 = vmatprep.subr.bf16.mxu0 0
    %2211 = vmatpush1.bf16.msra.mxu0 %v2046
    %2212 = vmatprep.subr.bf16.mxu0 0
    %2213 = vmatpush2.bf16.msra.mxu0 %v2061
    %2214 = vmatprep.subr.bf16.mxu0 0
    %2215 = vmatpush2.bf16.msra.mxu0 %v2060
    %2216 = vmatprep.subr.bf16.mxu0 0
    %2217 = vmatpush2.bf16.msra.mxu0 %v2059
    %2218 = vmatprep.subr.bf16.mxu0 0
    %2219 = vmatpush2.bf16.msra.mxu0 %v2058
    %2220 = vmatprep.subr.bf16.mxu0 0
    %2221 = vmatpush2.bf16.msra.mxu0 %v2057
    %2222 = vmatprep.subr.bf16.mxu0 0
    %2223 = vmatpush2.bf16.msra.mxu0 %v2056
    %2224 = vmatprep.subr.bf16.mxu0 0
    %2225 = vmatpush2.bf16.msra.mxu0 %v2055
    %2226 = vmatprep.subr.bf16.mxu0 0
    %2227 = vmatpush2.bf16.msra.mxu0 %v2054
    %2228 = vmatprep.mubr.bf16.mxu0 %v118
    %2229 = vmatmul.mubr.bf16.gmra.mxu0 %v110
    %v2230 = vpop.f32.mrf.mxu0
    %v2231 = vadd.f32 0.0, %v2230
    %v2232 = vpop.f32.mrf.mxu0
    %v2233 = vpop.f32.mrf.mxu0
    %v2234 = vpop.f32.mrf.mxu0
    %2235 = vdwg.mxu0
    %2236 = vmatprep.subr.bf16.mxu0 0
    %2237 = vmatpush1.bf16.msra.mxu0 %v2069
    %2238 = vmatprep.subr.bf16.mxu0 0
    %2239 = vmatpush1.bf16.msra.mxu0 %v2068
    %2240 = vmatprep.subr.bf16.mxu0 0
    %2241 = vmatpush1.bf16.msra.mxu0 %v2067
    %2242 = vmatprep.subr.bf16.mxu0 0
    %2243 = vmatpush1.bf16.msra.mxu0 %v2066
    %2244 = vmatprep.subr.bf16.mxu0 0
    %2245 = vmatpush1.bf16.msra.mxu0 %v2065
    %2246 = vmatprep.subr.bf16.mxu0 0
    %2247 = vmatpush1.bf16.msra.mxu0 %v2064
    %2248 = vmatprep.subr.bf16.mxu0 0
    %2249 = vmatpush1.bf16.msra.mxu0 %v2063
    %2250 = vmatprep.subr.bf16.mxu0 0
    %2251 = vmatpush1.bf16.msra.mxu0 %v2062
    %2252 = vmatprep.subr.bf16.mxu0 0
    %2253 = vmatpush2.bf16.msra.mxu0 %v2077
    %2254 = vmatprep.subr.bf16.mxu0 0
    %2255 = vmatpush2.bf16.msra.mxu0 %v2076
    %2256 = vmatprep.subr.bf16.mxu0 0
    %2257 = vmatpush2.bf16.msra.mxu0 %v2075
    %2258 = vmatprep.subr.bf16.mxu0 0
    %2259 = vmatpush2.bf16.msra.mxu0 %v2074
    %2260 = vmatprep.subr.bf16.mxu0 0
    %2261 = vmatpush2.bf16.msra.mxu0 %v2073
    %2262 = vmatprep.subr.bf16.mxu0 0
    %2263 = vmatpush2.bf16.msra.mxu0 %v2072
    %2264 = vmatprep.subr.bf16.mxu0 0
    %2265 = vmatpush2.bf16.msra.mxu0 %v2071
    %2266 = vmatprep.subr.bf16.mxu0 0
    %2267 = vmatpush2.bf16.msra.mxu0 %v2070
    %2268 = vmatprep.mubr.bf16.mxu0 %v119
    %2269 = vmatmul.mubr.bf16.gmra.mxu0 %v117
    %v2270 = vpop.f32.mrf.mxu0
    %v2271 = vadd.f32 %v2231, %v2270
    %v2272 = vpop.f32.mrf.mxu0
    %v2273 = vpop.f32.mrf.mxu0
    %v2274 = vpop.f32.mrf.mxu0
    %2275 = vdwg.mxu0
    %v2276 = vld [vmem:[%s4] sm:$0xf]
    %v2277 = vld [vmem:[%s4 + $0x4] sm:$0xf]
    %v2278 = vpack.c.bf16 %v2271, %v2271
    %v2279 = vld [vmem:[%s5] sm:$0xff]
    %v2280 = vld [vmem:[%s5 + $0x8] sm:$0xff]
    %2282 = vset.pattern.permute.xlu0 0
    %2283 = vperm.xlu0 %2282, %v2279
    %v2284 = vpop.permute.xlu0 %2283
    %2287 = vset.pattern.permute.xlu0 0
    %2288 = vperm.xlu0 %2287, %v2280
    %v2289 = vpop.permute.xlu0 %2288
    %v2293 = vunpack.c.l.b16 %v2276
    %v2294 = vunpack.c.l.b16 %v2277
    %v2295 = vpack.c.b16 %v2294, %v2293
    %v2297 = vsel %vm120, %v2295, 0
    %v2300 = vand.u32 %v2278, %v127
    %2302 = vmatprep.subr.bf16.mxu0 0
    %2303 = vmatpush1.bf16.msra.mxu0 0
    %2304 = vmatprep.subr.bf16.mxu0 0
    %2305 = vmatpush1.bf16.msra.mxu0 0
    %2306 = vmatprep.subr.bf16.mxu0 0
    %2307 = vmatpush1.bf16.msra.mxu0 0
    %2308 = vmatprep.subr.bf16.mxu0 0
    %2309 = vmatpush1.bf16.msra.mxu0 0
    %2310 = vmatprep.subr.bf16.mxu0 0
    %2311 = vmatpush1.bf16.msra.mxu0 0
    %2312 = vmatprep.subr.bf16.mxu0 0
    %2313 = vmatpush1.bf16.msra.mxu0 0
    %2314 = vmatprep.subr.bf16.mxu0 0
    %2315 = vmatpush1.bf16.msra.mxu0 0
    %2316 = vmatprep.subr.bf16.mxu0 0
    %2317 = vmatpush1.bf16.msra.mxu0 %v2300
    %2318 = vmatprep.subr.bf16.mxu0 0
    %2319 = vmatpush2.bf16.msra.mxu0 0
    %2320 = vmatprep.subr.bf16.mxu0 0
    %2321 = vmatpush2.bf16.msra.mxu0 0
    %2322 = vmatprep.subr.bf16.mxu0 0
    %2323 = vmatpush2.bf16.msra.mxu0 0
    %2324 = vmatprep.subr.bf16.mxu0 0
    %2325 = vmatpush2.bf16.msra.mxu0 0
    %2326 = vmatprep.subr.bf16.mxu0 0
    %2327 = vmatpush2.bf16.msra.mxu0 0
    %2328 = vmatprep.subr.bf16.mxu0 0
    %2329 = vmatpush2.bf16.msra.mxu0 0
    %2330 = vmatprep.subr.bf16.mxu0 0
    %2331 = vmatpush2.bf16.msra.mxu0 0
    %2332 = vmatprep.subr.bf16.mxu0 0
    %2333 = vmatpush2.bf16.msra.mxu0 0
    %2334 = vmatprep.mubr.bf16.mxu0 0
    %2335 = vmatmul.mubr.bf16.gmra.mxu0 %v2297
    %v2336 = vpop.f32.mrf.mxu0
    %v2337 = vadd.f32 %v2284, %v2336
    %v2338 = vpop.f32.mrf.mxu0
    %v2339 = vpop.f32.mrf.mxu0
    %v2340 = vadd.f32 %v2289, %v2339
    %v2341 = vpop.f32.mrf.mxu0
    %2342 = vdwg.mxu0
    %vm2343 = vcmp.ge.f32.partialorder %v2337, 0.0
    %vm2344 = vcmp.ge.f32.partialorder %v2340, 0.0
    %v2345 = vmul.f32 %v2337, 0.2
    %v2346 = vmul.f32 %v2340, 0.2
    %v2347 = vsel %vm2343, %v2337, %v2345
    %v2348 = vsel %vm2344, %v2340, %v2346
    %s2349 = sld [smem:[#allocation2]]
    %v2350 = vstv %s2349
    %v2351 = vmul.f32 %v2350, %v2186
    %v2352 = vmul.f32 %v2350, %v2189
    %s2353 = ssub.f32 1.0, %s2349
    %v2354 = vstv %s2353
    %v2355 = vmul.f32 %v2354, %v2347
    %v2356 = vmul.f32 %v2354, %v2348
    %v2357 = vadd.f32 %v2351, %v2355
    %v2358 = vadd.f32 %v2352, %v2356
    %v2359 = vld [vmem:[%s12] sm:$0xf]
    %v2360 = vld [vmem:[%s12 + $0x4] sm:$0xf]
    %v2361 = vld [vmem:[%s12 + $0x8] sm:$0xf]
    %v2362 = vld [vmem:[%s12 + $0xc] sm:$0xf]
    %v2363 = vld [vmem:[%s12 + $0x10] sm:$0xf]
    %v2364 = vld [vmem:[%s12 + $0x14] sm:$0xf]
    %v2365 = vld [vmem:[%s12 + $0x18] sm:$0xf]
    %v2366 = vld [vmem:[%s12 + $0x1c] sm:$0xf]
    %v2367 = vld [vmem:[%s12 + $0x20] sm:$0xf]
    %v2368 = vld [vmem:[%s12 + $0x24] sm:$0xf]
    %v2369 = vld [vmem:[%s12 + $0x28] sm:$0xf]
    %v2370 = vld [vmem:[%s12 + $0x2c] sm:$0xf]
    %v2371 = vld [vmem:[%s12 + $0x30] sm:$0xf]
    %v2372 = vld [vmem:[%s12 + $0x34] sm:$0xf]
    %v2373 = vld [vmem:[%s12 + $0x38] sm:$0xf]
    %v2374 = vld [vmem:[%s12 + $0x3c] sm:$0xf]
    %v2375 = vld [vmem:[%s12 + $0x40] sm:$0xf]
    %v2376 = vld [vmem:[%s12 + $0x44] sm:$0xf]
    %v2377 = vpack.c.bf16 %v2358, %v2357
    %v2396 = vunpack.c.l.b16 %v2359
    %v2397 = vunpack.c.l.b16 %v2360
    %v2398 = vunpack.c.l.b16 %v2361
    %v2399 = vunpack.c.l.b16 %v2362
    %v2400 = vunpack.c.l.b16 %v2363
    %v2401 = vunpack.c.l.b16 %v2364
    %v2402 = vunpack.c.l.b16 %v2365
    %v2403 = vunpack.c.l.b16 %v2366
    %v2404 = vunpack.c.l.b16 %v2367
    %v2405 = vunpack.c.l.b16 %v2368
    %v2406 = vunpack.c.l.b16 %v2369
    %v2407 = vunpack.c.l.b16 %v2370
    %v2408 = vunpack.c.l.b16 %v2371
    %v2409 = vunpack.c.l.b16 %v2372
    %v2410 = vunpack.c.l.b16 %v2373
    %v2411 = vunpack.c.l.b16 %v2374
    %v2412 = vunpack.c.l.b16 %v2375
    %v2413 = vunpack.c.l.b16 %v2376
    %v2414 = vpack.c.b16 %v2397, %v2396
    %v2415 = vpack.c.b16 %v2399, %v2398
    %v2416 = vpack.c.b16 %v2401, %v2400
    %v2417 = vpack.c.b16 %v2403, %v2402
    %v2418 = vpack.c.b16 %v2405, %v2404
    %v2419 = vpack.c.b16 %v2407, %v2406
    %v2420 = vpack.c.b16 %v2409, %v2408
    %v2421 = vpack.c.b16 %v2411, %v2410
    %v2422 = vpack.c.b16 %v2413, %v2412
    %v2424 = vsel %vm1212, %v2414, 0
    %v2427 = vsel %vm1212, %v2415, 0
    %v2430 = vsel %vm1212, %v2416, 0
    %v2433 = vsel %vm1212, %v2417, 0
    %v2436 = vsel %vm1212, %v2418, 0
    %v2439 = vsel %vm1212, %v2419, 0
    %v2442 = vsel %vm1212, %v2420, 0
    %v2445 = vsel %vm1212, %v2421, 0
    %v2448 = vsel %vm1212, %v2422, 0
    %2450 = vmatprep.subr.bf16.mxu0 0
    %2451 = vmatpush1.bf16.msra.mxu0 0
    %2452 = vmatprep.subr.bf16.mxu0 0
    %2453 = vmatpush1.bf16.msra.mxu0 0
    %2454 = vmatprep.subr.bf16.mxu0 0
    %2455 = vmatpush1.bf16.msra.mxu0 0
    %2456 = vmatprep.subr.bf16.mxu0 0
    %2457 = vmatpush1.bf16.msra.mxu0 0
    %2458 = vmatprep.subr.bf16.mxu0 0
    %2459 = vmatpush1.bf16.msra.mxu0 0
    %2460 = vmatprep.subr.bf16.mxu0 0
    %2461 = vmatpush1.bf16.msra.mxu0 0
    %2462 = vmatprep.subr.bf16.mxu0 0
    %2463 = vmatpush1.bf16.msra.mxu0 0
    %2464 = vmatprep.subr.bf16.mxu0 0
    %2465 = vmatpush1.bf16.msra.mxu0 %v2377
    %2466 = vmatprep.subr.bf16.mxu0 0
    %2467 = vmatpush2.bf16.msra.mxu0 0
    %2468 = vmatprep.subr.bf16.mxu0 0
    %2469 = vmatpush2.bf16.msra.mxu0 0
    %2470 = vmatprep.subr.bf16.mxu0 0
    %2471 = vmatpush2.bf16.msra.mxu0 0
    %2472 = vmatprep.subr.bf16.mxu0 0
    %2473 = vmatpush2.bf16.msra.mxu0 0
    %2474 = vmatprep.subr.bf16.mxu0 0
    %2475 = vmatpush2.bf16.msra.mxu0 0
    %2476 = vmatprep.subr.bf16.mxu0 0
    %2477 = vmatpush2.bf16.msra.mxu0 0
    %2478 = vmatprep.subr.bf16.mxu0 0
    %2479 = vmatpush2.bf16.msra.mxu0 0
    %2480 = vmatprep.subr.bf16.mxu0 0
    %2481 = vmatpush2.bf16.msra.mxu0 0
    %2482 = vmatprep.mubr.bf16.mxu0 0
    %2483 = vmatmul.mubr.bf16.gmra.mxu0 %v2424
    %v2484 = vpop.f32.mrf.mxu0
    %v2485 = vadd.f32 0.0, %v2484
    %v2486 = vpop.f32.mrf.mxu0
    %v2487 = vpop.f32.mrf.mxu0
    %v2488 = vadd.f32 0.0, %v2487
    %v2489 = vpop.f32.mrf.mxu0
    %2490 = vmatprep.mubr.bf16.mxu0 0
    %2491 = vmatmul.mubr.bf16.gmra.mxu0 %v2427
    %v2492 = vpop.f32.mrf.mxu0
    %v2493 = vadd.f32 0.0, %v2492
    %v2494 = vpop.f32.mrf.mxu0
    %v2495 = vpop.f32.mrf.mxu0
    %v2496 = vadd.f32 0.0, %v2495
    %v2497 = vpop.f32.mrf.mxu0
    %2498 = vmatprep.mubr.bf16.mxu0 0
    %2499 = vmatmul.mubr.bf16.gmra.mxu0 %v2430
    %v2500 = vpop.f32.mrf.mxu0
    %v2501 = vadd.f32 0.0, %v2500
    %v2502 = vpop.f32.mrf.mxu0
    %v2503 = vpop.f32.mrf.mxu0
    %v2504 = vadd.f32 0.0, %v2503
    %v2505 = vpop.f32.mrf.mxu0
    %2506 = vmatprep.mubr.bf16.mxu0 0
    %2507 = vmatmul.mubr.bf16.gmra.mxu0 %v2433
    %v2508 = vpop.f32.mrf.mxu0
    %v2509 = vadd.f32 0.0, %v2508
    %v2510 = vpop.f32.mrf.mxu0
    %v2511 = vpop.f32.mrf.mxu0
    %v2512 = vadd.f32 0.0, %v2511
    %v2513 = vpop.f32.mrf.mxu0
    %2514 = vmatprep.mubr.bf16.mxu0 0
    %2515 = vmatmul.mubr.bf16.gmra.mxu0 %v2436
    %v2516 = vpop.f32.mrf.mxu0
    %v2517 = vadd.f32 0.0, %v2516
    %v2518 = vpop.f32.mrf.mxu0
    %v2519 = vpop.f32.mrf.mxu0
    %v2520 = vadd.f32 0.0, %v2519
    %v2521 = vpop.f32.mrf.mxu0
    %2522 = vmatprep.mubr.bf16.mxu0 0
    %2523 = vmatmul.mubr.bf16.gmra.mxu0 %v2439
    %v2524 = vpop.f32.mrf.mxu0
    %v2525 = vadd.f32 0.0, %v2524
    %v2526 = vpop.f32.mrf.mxu0
    %v2527 = vpop.f32.mrf.mxu0
    %v2528 = vadd.f32 0.0, %v2527
    %v2529 = vpop.f32.mrf.mxu0
    %2530 = vmatprep.mubr.bf16.mxu0 0
    %2531 = vmatmul.mubr.bf16.gmra.mxu0 %v2442
    %v2532 = vpop.f32.mrf.mxu0
    %v2533 = vadd.f32 0.0, %v2532
    %v2534 = vpop.f32.mrf.mxu0
    %v2535 = vpop.f32.mrf.mxu0
    %v2536 = vadd.f32 0.0, %v2535
    %v2537 = vpop.f32.mrf.mxu0
    %2538 = vmatprep.mubr.bf16.mxu0 0
    %2539 = vmatmul.mubr.bf16.gmra.mxu0 %v2445
    %v2540 = vpop.f32.mrf.mxu0
    %v2541 = vadd.f32 0.0, %v2540
    %v2542 = vpop.f32.mrf.mxu0
    %v2543 = vpop.f32.mrf.mxu0
    %v2544 = vadd.f32 0.0, %v2543
    %v2545 = vpop.f32.mrf.mxu0
    %2546 = vmatprep.mubr.bf16.mxu0 0
    %2547 = vmatmul.mubr.bf16.gmra.mxu0 %v2448
    %v2548 = vpop.f32.mrf.mxu0
    %v2549 = vadd.f32 0.0, %v2548
    %v2550 = vpop.f32.mrf.mxu0
    %v2551 = vpop.f32.mrf.mxu0
    %v2552 = vadd.f32 0.0, %v2551
    %v2553 = vpop.f32.mrf.mxu0
    %2554 = vdwg.mxu0
    %2555 = vrot.lane.b32.xlu0 %v2485, 9
    %v2556 = vpop.permute.xlu0 %2555
    %2557 = vrot.lane.b32.xlu0 %v2488, 9
    %v2558 = vpop.permute.xlu0 %2557
    %v2559 = vld [vmem:[%s16] sm:$0x1]
    %v2560 = vlaneseq
    %v2561 = vshrl.u32 %v2560, 7
    %v2562 = vsub.s32 0, %v2561
    %v2563 = vrot.slane %v2559, %v2562
    %v2564 = vmul.f32 %v2563, %v2556
    %v2565 = vmul.f32 %v2563, %v2558
    %2566 = vrot.lane.b32.xlu0 %v2493, 8
    %v2567 = vpop.permute.xlu0 %2566
    %2568 = vrot.lane.b32.xlu0 %v2496, 8
    %v2569 = vpop.permute.xlu0 %2568
    %v2570 = vld [vmem:[%s16 + $0x1] sm:$0x1]
    %v2571 = vlaneseq
    %v2572 = vshrl.u32 %v2571, 7
    %v2573 = vsub.s32 0, %v2572
    %v2574 = vrot.slane %v2570, %v2573
    %v2575 = vmul.f32 %v2574, %v2567
    %v2576 = vmul.f32 %v2574, %v2569
    %v2577 = vadd.f32 %v2564, %v2575
    %v2578 = vadd.f32 %v2565, %v2576
    %2579 = vrot.lane.b32.xlu0 %v2501, 7
    %v2580 = vpop.permute.xlu0 %2579
    %2581 = vrot.lane.b32.xlu0 %v2504, 7
    %v2582 = vpop.permute.xlu0 %2581
    %v2583 = vld [vmem:[%s16 + $0x2] sm:$0x1]
    %v2584 = vlaneseq
    %v2585 = vshrl.u32 %v2584, 7
    %v2586 = vsub.s32 0, %v2585
    %v2587 = vrot.slane %v2583, %v2586
    %v2588 = vmul.f32 %v2587, %v2580
    %v2589 = vmul.f32 %v2587, %v2582
    %v2590 = vadd.f32 %v2577, %v2588
    %v2591 = vadd.f32 %v2578, %v2589
    %2592 = vrot.lane.b32.xlu0 %v2509, 1
    %v2593 = vpop.permute.xlu0 %2592
    %2594 = vrot.lane.b32.xlu0 %v2512, 1
    %v2595 = vpop.permute.xlu0 %2594
    %v2596 = vld [vmem:[%s16 + $0x3] sm:$0x1]
    %v2597 = vlaneseq
    %v2598 = vshrl.u32 %v2597, 7
    %v2599 = vsub.s32 0, %v2598
    %v2600 = vrot.slane %v2596, %v2599
    %v2601 = vmul.f32 %v2600, %v2593
    %v2602 = vmul.f32 %v2600, %v2595
    %v2603 = vadd.f32 %v2590, %v2601
    %v2604 = vadd.f32 %v2591, %v2602
    %v2605 = vadd.f32 %v2603, %v2517
    %v2606 = vadd.f32 %v2604, %v2520
    %2607 = vrot.lane.b32.xlu0 %v2525, 127
    %v2608 = vpop.permute.xlu0 %2607
    %2609 = vrot.lane.b32.xlu0 %v2528, 127
    %v2610 = vpop.permute.xlu0 %2609
    %v2611 = vld [vmem:[%s16 + $0x5] sm:$0x1]
    %v2612 = vlaneseq
    %v2613 = vshrl.u32 %v2612, 7
    %v2614 = vsub.s32 0, %v2613
    %v2615 = vrot.slane %v2611, %v2614
    %v2616 = vmul.f32 %v2615, %v2608
    %v2617 = vmul.f32 %v2615, %v2610
    %v2618 = vadd.f32 %v2605, %v2616
    %v2619 = vadd.f32 %v2606, %v2617
    %2620 = vrot.lane.b32.xlu0 %v2533, 121
    %v2621 = vpop.permute.xlu0 %2620
    %2622 = vrot.lane.b32.xlu0 %v2536, 121
    %v2623 = vpop.permute.xlu0 %2622
    %v2624 = vld [vmem:[%s16 + $0x6] sm:$0x1]
    %v2625 = vlaneseq
    %v2626 = vshrl.u32 %v2625, 7
    %v2627 = vsub.s32 0, %v2626
    %v2628 = vrot.slane %v2624, %v2627
    %v2629 = vmul.f32 %v2628, %v2621
    %v2630 = vmul.f32 %v2628, %v2623
    %v2631 = vadd.f32 %v2618, %v2629
    %v2632 = vadd.f32 %v2619, %v2630
    %2633 = vrot.lane.b32.xlu0 %v2541, 120
    %v2634 = vpop.permute.xlu0 %2633
    %2635 = vrot.lane.b32.xlu0 %v2544, 120
    %v2636 = vpop.permute.xlu0 %2635
    %v2637 = vld [vmem:[%s16 + $0x7] sm:$0x1]
    %v2638 = vlaneseq
    %v2639 = vshrl.u32 %v2638, 7
    %v2640 = vsub.s32 0, %v2639
    %v2641 = vrot.slane %v2637, %v2640
    %v2642 = vmul.f32 %v2641, %v2634
    %v2643 = vmul.f32 %v2641, %v2636
    %v2644 = vadd.f32 %v2631, %v2642
    %v2645 = vadd.f32 %v2632, %v2643
    %2646 = vrot.lane.b32.xlu0 %v2549, 119
    %v2647 = vpop.permute.xlu0 %2646
    %2648 = vrot.lane.b32.xlu0 %v2552, 119
    %v2649 = vpop.permute.xlu0 %2648
    %v2650 = vld [vmem:[%s16 + $0x8] sm:$0x1]
    %v2651 = vlaneseq
    %v2652 = vshrl.u32 %v2651, 7
    %v2653 = vsub.s32 0, %v2652
    %v2654 = vrot.slane %v2650, %v2653
    %v2655 = vmul.f32 %v2654, %v2647
    %v2656 = vmul.f32 %v2654, %v2649
    %v2657 = vadd.f32 %v2644, %v2655
    %v2658 = vadd.f32 %v2645, %v2656
    %v2659 = vld [vmem:[%s13] sm:$0xff]
    %v2660 = vld [vmem:[%s13 + $0x8] sm:$0xff]
    %2662 = vset.pattern.permute.xlu0 0
    %2663 = vperm.xlu0 %2662, %v2659
    %v2664 = vpop.permute.xlu0 %2663
    %2667 = vset.pattern.permute.xlu0 0
    %2668 = vperm.xlu0 %2667, %v2660
    %v2669 = vpop.permute.xlu0 %2668
    %v2671 = vadd.f32 %v2657, %v2664
    %v2672 = vadd.f32 %v2658, %v2669
    %vm2673 = vcmp.ge.f32.partialorder %v2671, 0.0
    %vm2674 = vcmp.ge.f32.partialorder %v2672, 0.0
    %v2675 = vmul.f32 %v2671, 0.2
    %v2676 = vmul.f32 %v2672, 0.2
    %v2677 = vsel %vm2673, %v2671, %v2675
    %v2678 = vsel %vm2674, %v2672, %v2676
    %v2679 = vld [vmem:[%s14] sm:$0xf]
    %v2680 = vld [vmem:[%s14 + $0x4] sm:$0xf]
    %v2681 = vld [vmem:[%s14 + $0x8] sm:$0xf]
    %v2682 = vld [vmem:[%s14 + $0xc] sm:$0xf]
    %v2683 = vld [vmem:[%s14 + $0x10] sm:$0xf]
    %v2684 = vld [vmem:[%s14 + $0x14] sm:$0xf]
    %v2685 = vld [vmem:[%s14 + $0x18] sm:$0xf]
    %v2686 = vld [vmem:[%s14 + $0x1c] sm:$0xf]
    %v2687 = vld [vmem:[%s14 + $0x20] sm:$0xf]
    %v2688 = vld [vmem:[%s14 + $0x24] sm:$0xf]
    %v2689 = vld [vmem:[%s14 + $0x28] sm:$0xf]
    %v2690 = vld [vmem:[%s14 + $0x2c] sm:$0xf]
    %v2691 = vld [vmem:[%s14 + $0x30] sm:$0xf]
    %v2692 = vld [vmem:[%s14 + $0x34] sm:$0xf]
    %v2693 = vld [vmem:[%s14 + $0x38] sm:$0xf]
    %v2694 = vld [vmem:[%s14 + $0x3c] sm:$0xf]
    %v2695 = vld [vmem:[%s14 + $0x40] sm:$0xf]
    %v2696 = vld [vmem:[%s14 + $0x44] sm:$0xf]
    %v2697 = vpack.c.bf16 %v2678, %v2677
    %v2716 = vunpack.c.l.b16 %v2679
    %v2717 = vunpack.c.l.b16 %v2680
    %v2718 = vunpack.c.l.b16 %v2681
    %v2719 = vunpack.c.l.b16 %v2682
    %v2720 = vunpack.c.l.b16 %v2683
    %v2721 = vunpack.c.l.b16 %v2684
    %v2722 = vunpack.c.l.b16 %v2685
    %v2723 = vunpack.c.l.b16 %v2686
    %v2724 = vunpack.c.l.b16 %v2687
    %v2725 = vunpack.c.l.b16 %v2688
    %v2726 = vunpack.c.l.b16 %v2689
    %v2727 = vunpack.c.l.b16 %v2690
    %v2728 = vunpack.c.l.b16 %v2691
    %v2729 = vunpack.c.l.b16 %v2692
    %v2730 = vunpack.c.l.b16 %v2693
    %v2731 = vunpack.c.l.b16 %v2694
    %v2732 = vunpack.c.l.b16 %v2695
    %v2733 = vunpack.c.l.b16 %v2696
    %v2734 = vpack.c.b16 %v2717, %v2716
    %v2735 = vpack.c.b16 %v2719, %v2718
    %v2736 = vpack.c.b16 %v2721, %v2720
    %v2737 = vpack.c.b16 %v2723, %v2722
    %v2738 = vpack.c.b16 %v2725, %v2724
    %v2739 = vpack.c.b16 %v2727, %v2726
    %v2740 = vpack.c.b16 %v2729, %v2728
    %v2741 = vpack.c.b16 %v2731, %v2730
    %v2742 = vpack.c.b16 %v2733, %v2732
    %v2744 = vsel %vm1212, %v2734, 0
    %v2747 = vsel %vm1212, %v2735, 0
    %v2750 = vsel %vm1212, %v2736, 0
    %v2753 = vsel %vm1212, %v2737, 0
    %v2756 = vsel %vm1212, %v2738, 0
    %v2759 = vsel %vm1212, %v2739, 0
    %v2762 = vsel %vm1212, %v2740, 0
    %v2765 = vsel %vm1212, %v2741, 0
    %v2768 = vsel %vm1212, %v2742, 0
    %2770 = vmatprep.subr.bf16.mxu0 0
    %2771 = vmatpush1.bf16.msra.mxu0 0
    %2772 = vmatprep.subr.bf16.mxu0 0
    %2773 = vmatpush1.bf16.msra.mxu0 0
    %2774 = vmatprep.subr.bf16.mxu0 0
    %2775 = vmatpush1.bf16.msra.mxu0 0
    %2776 = vmatprep.subr.bf16.mxu0 0
    %2777 = vmatpush1.bf16.msra.mxu0 0
    %2778 = vmatprep.subr.bf16.mxu0 0
    %2779 = vmatpush1.bf16.msra.mxu0 0
    %2780 = vmatprep.subr.bf16.mxu0 0
    %2781 = vmatpush1.bf16.msra.mxu0 0
    %2782 = vmatprep.subr.bf16.mxu0 0
    %2783 = vmatpush1.bf16.msra.mxu0 0
    %2784 = vmatprep.subr.bf16.mxu0 0
    %2785 = vmatpush1.bf16.msra.mxu0 %v2697
    %2786 = vmatprep.subr.bf16.mxu0 0
    %2787 = vmatpush2.bf16.msra.mxu0 0
    %2788 = vmatprep.subr.bf16.mxu0 0
    %2789 = vmatpush2.bf16.msra.mxu0 0
    %2790 = vmatprep.subr.bf16.mxu0 0
    %2791 = vmatpush2.bf16.msra.mxu0 0
    %2792 = vmatprep.subr.bf16.mxu0 0
    %2793 = vmatpush2.bf16.msra.mxu0 0
    %2794 = vmatprep.subr.bf16.mxu0 0
    %2795 = vmatpush2.bf16.msra.mxu0 0
    %2796 = vmatprep.subr.bf16.mxu0 0
    %2797 = vmatpush2.bf16.msra.mxu0 0
    %2798 = vmatprep.subr.bf16.mxu0 0
    %2799 = vmatpush2.bf16.msra.mxu0 0
    %2800 = vmatprep.subr.bf16.mxu0 0
    %2801 = vmatpush2.bf16.msra.mxu0 0
    %2802 = vmatprep.mubr.bf16.mxu0 0
    %2803 = vmatmul.mubr.bf16.gmra.mxu0 %v2744
    %v2804 = vpop.f32.mrf.mxu0
    %v2805 = vadd.f32 0.0, %v2804
    %v2806 = vpop.f32.mrf.mxu0
    %v2807 = vpop.f32.mrf.mxu0
    %v2808 = vadd.f32 0.0, %v2807
    %v2809 = vpop.f32.mrf.mxu0
    %2810 = vmatprep.mubr.bf16.mxu0 0
    %2811 = vmatmul.mubr.bf16.gmra.mxu0 %v2747
    %v2812 = vpop.f32.mrf.mxu0
    %v2813 = vadd.f32 0.0, %v2812
    %v2814 = vpop.f32.mrf.mxu0
    %v2815 = vpop.f32.mrf.mxu0
    %v2816 = vadd.f32 0.0, %v2815
    %v2817 = vpop.f32.mrf.mxu0
    %2818 = vmatprep.mubr.bf16.mxu0 0
    %2819 = vmatmul.mubr.bf16.gmra.mxu0 %v2750
    %v2820 = vpop.f32.mrf.mxu0
    %v2821 = vadd.f32 0.0, %v2820
    %v2822 = vpop.f32.mrf.mxu0
    %v2823 = vpop.f32.mrf.mxu0
    %v2824 = vadd.f32 0.0, %v2823
    %v2825 = vpop.f32.mrf.mxu0
    %2826 = vmatprep.mubr.bf16.mxu0 0
    %2827 = vmatmul.mubr.bf16.gmra.mxu0 %v2753
    %v2828 = vpop.f32.mrf.mxu0
    %v2829 = vadd.f32 0.0, %v2828
    %v2830 = vpop.f32.mrf.mxu0
    %v2831 = vpop.f32.mrf.mxu0
    %v2832 = vadd.f32 0.0, %v2831
    %v2833 = vpop.f32.mrf.mxu0
    %2834 = vmatprep.mubr.bf16.mxu0 0
    %2835 = vmatmul.mubr.bf16.gmra.mxu0 %v2756
    %v2836 = vpop.f32.mrf.mxu0
    %v2837 = vadd.f32 0.0, %v2836
    %v2838 = vpop.f32.mrf.mxu0
    %v2839 = vpop.f32.mrf.mxu0
    %v2840 = vadd.f32 0.0, %v2839
    %v2841 = vpop.f32.mrf.mxu0
    %2842 = vmatprep.mubr.bf16.mxu0 0
    %2843 = vmatmul.mubr.bf16.gmra.mxu0 %v2759
    %v2844 = vpop.f32.mrf.mxu0
    %v2845 = vadd.f32 0.0, %v2844
    %v2846 = vpop.f32.mrf.mxu0
    %v2847 = vpop.f32.mrf.mxu0
    %v2848 = vadd.f32 0.0, %v2847
    %v2849 = vpop.f32.mrf.mxu0
    %2850 = vmatprep.mubr.bf16.mxu0 0
    %2851 = vmatmul.mubr.bf16.gmra.mxu0 %v2762
    %v2852 = vpop.f32.mrf.mxu0
    %v2853 = vadd.f32 0.0, %v2852
    %v2854 = vpop.f32.mrf.mxu0
    %v2855 = vpop.f32.mrf.mxu0
    %v2856 = vadd.f32 0.0, %v2855
    %v2857 = vpop.f32.mrf.mxu0
    %2858 = vmatprep.mubr.bf16.mxu0 0
    %2859 = vmatmul.mubr.bf16.gmra.mxu0 %v2765
    %v2860 = vpop.f32.mrf.mxu0
    %v2861 = vadd.f32 0.0, %v2860
    %v2862 = vpop.f32.mrf.mxu0
    %v2863 = vpop.f32.mrf.mxu0
    %v2864 = vadd.f32 0.0, %v2863
    %v2865 = vpop.f32.mrf.mxu0
    %2866 = vmatprep.mubr.bf16.mxu0 0
    %2867 = vmatmul.mubr.bf16.gmra.mxu0 %v2768
    %v2868 = vpop.f32.mrf.mxu0
    %v2869 = vadd.f32 0.0, %v2868
    %v2870 = vpop.f32.mrf.mxu0
    %v2871 = vpop.f32.mrf.mxu0
    %v2872 = vadd.f32 0.0, %v2871
    %v2873 = vpop.f32.mrf.mxu0
    %2874 = vdwg.mxu0
    %2875 = vrot.lane.b32.xlu0 %v2805, 9
    %v2876 = vpop.permute.xlu0 %2875
    %2877 = vrot.lane.b32.xlu0 %v2808, 9
    %v2878 = vpop.permute.xlu0 %2877
    %v2879 = vmul.f32 %v2563, %v2876
    %v2880 = vmul.f32 %v2563, %v2878
    %2881 = vrot.lane.b32.xlu0 %v2813, 8
    %v2882 = vpop.permute.xlu0 %2881
    %2883 = vrot.lane.b32.xlu0 %v2816, 8
    %v2884 = vpop.permute.xlu0 %2883
    %v2885 = vmul.f32 %v2574, %v2882
    %v2886 = vmul.f32 %v2574, %v2884
    %v2887 = vadd.f32 %v2879, %v2885
    %v2888 = vadd.f32 %v2880, %v2886
    %2889 = vrot.lane.b32.xlu0 %v2821, 7
    %v2890 = vpop.permute.xlu0 %2889
    %2891 = vrot.lane.b32.xlu0 %v2824, 7
    %v2892 = vpop.permute.xlu0 %2891
    %v2893 = vmul.f32 %v2587, %v2890
    %v2894 = vmul.f32 %v2587, %v2892
    %v2895 = vadd.f32 %v2887, %v2893
    %v2896 = vadd.f32 %v2888, %v2894
    %2897 = vrot.lane.b32.xlu0 %v2829, 1
    %v2898 = vpop.permute.xlu0 %2897
    %2899 = vrot.lane.b32.xlu0 %v2832, 1
    %v2900 = vpop.permute.xlu0 %2899
    %v2901 = vmul.f32 %v2600, %v2898
    %v2902 = vmul.f32 %v2600, %v2900
    %v2903 = vadd.f32 %v2895, %v2901
    %v2904 = vadd.f32 %v2896, %v2902
    %v2905 = vadd.f32 %v2903, %v2837
    %v2906 = vadd.f32 %v2904, %v2840
    %2907 = vrot.lane.b32.xlu0 %v2845, 127
    %v2908 = vpop.permute.xlu0 %2907
    %2909 = vrot.lane.b32.xlu0 %v2848, 127
    %v2910 = vpop.permute.xlu0 %2909
    %v2911 = vmul.f32 %v2615, %v2908
    %v2912 = vmul.f32 %v2615, %v2910
    %v2913 = vadd.f32 %v2905, %v2911
    %v2914 = vadd.f32 %v2906, %v2912
    %2915 = vrot.lane.b32.xlu0 %v2853, 121
    %v2916 = vpop.permute.xlu0 %2915
    %2917 = vrot.lane.b32.xlu0 %v2856, 121
    %v2918 = vpop.permute.xlu0 %2917
    %v2919 = vmul.f32 %v2628, %v2916
    %v2920 = vmul.f32 %v2628, %v2918
    %v2921 = vadd.f32 %v2913, %v2919
    %v2922 = vadd.f32 %v2914, %v2920
    %2923 = vrot.lane.b32.xlu0 %v2861, 120
    %v2924 = vpop.permute.xlu0 %2923
    %2925 = vrot.lane.b32.xlu0 %v2864, 120
    %v2926 = vpop.permute.xlu0 %2925
    %v2927 = vmul.f32 %v2641, %v2924
    %v2928 = vmul.f32 %v2641, %v2926
    %v2929 = vadd.f32 %v2921, %v2927
    %v2930 = vadd.f32 %v2922, %v2928
    %2931 = vrot.lane.b32.xlu0 %v2869, 119
    %v2932 = vpop.permute.xlu0 %2931
    %2933 = vrot.lane.b32.xlu0 %v2872, 119
    %v2934 = vpop.permute.xlu0 %2933
    %v2935 = vmul.f32 %v2654, %v2932
    %v2936 = vmul.f32 %v2654, %v2934
    %v2937 = vadd.f32 %v2929, %v2935
    %v2938 = vadd.f32 %v2930, %v2936
    %v2939 = vld [vmem:[%s15] sm:$0xff]
    %v2940 = vld [vmem:[%s15 + $0x8] sm:$0xff]
    %2942 = vset.pattern.permute.xlu0 0
    %2943 = vperm.xlu0 %2942, %v2939
    %v2944 = vpop.permute.xlu0 %2943
    %2947 = vset.pattern.permute.xlu0 0
    %2948 = vperm.xlu0 %2947, %v2940
    %v2949 = vpop.permute.xlu0 %2948
    %v2951 = vadd.f32 %v2937, %v2944
    %v2952 = vadd.f32 %v2938, %v2949
    %vm2953 = vcmp.ge.f32.partialorder %v2951, 0.0
    %vm2954 = vcmp.ge.f32.partialorder %v2952, 0.0
    %v2955 = vmul.f32 %v2951, 0.2
    %v2956 = vmul.f32 %v2952, 0.2
    %v2957 = vsel %vm2953, %v2951, %v2955
    %v2958 = vsel %vm2954, %v2952, %v2956
    %v2959 = vpack.c.bf16 %v2958, %v2957
    %v2960 = vld [vmem:[%s17] sm:$0xf]
    %v2961 = vld [vmem:[%s17 + $0x4] sm:$0xf]
    %v2962 = vld [vmem:[%s17 + $0x8] sm:$0xf]
    %v2963 = vld [vmem:[%s17 + $0xc] sm:$0xf]
    %v2964 = vld [vmem:[%s17 + $0x10] sm:$0xf]
    %v2965 = vld [vmem:[%s17 + $0x14] sm:$0xf]
    %v2966 = vld [vmem:[%s17 + $0x18] sm:$0xf]
    %v2967 = vld [vmem:[%s17 + $0x1c] sm:$0xf]
    %v2968 = vld [vmem:[%s17 + $0x20] sm:$0xf]
    %v2969 = vld [vmem:[%s17 + $0x24] sm:$0xf]
    %v2970 = vld [vmem:[%s17 + $0x28] sm:$0xf]
    %v2971 = vld [vmem:[%s17 + $0x2c] sm:$0xf]
    %v2972 = vld [vmem:[%s17 + $0x30] sm:$0xf]
    %v2973 = vld [vmem:[%s17 + $0x34] sm:$0xf]
    %v2974 = vld [vmem:[%s17 + $0x38] sm:$0xf]
    %v2975 = vld [vmem:[%s17 + $0x3c] sm:$0xf]
    %v2992 = vunpack.c.l.b16 %v2960
    %v2993 = vunpack.c.l.b16 %v2961
    %v2994 = vunpack.c.l.b16 %v2962
    %v2995 = vunpack.c.l.b16 %v2963
    %v2996 = vunpack.c.l.b16 %v2964
    %v2997 = vunpack.c.l.b16 %v2965
    %v2998 = vunpack.c.l.b16 %v2966
    %v2999 = vunpack.c.l.b16 %v2967
    %v3000 = vunpack.c.l.b16 %v2968
    %v3001 = vunpack.c.l.b16 %v2969
    %v3002 = vunpack.c.l.b16 %v2970
    %v3003 = vunpack.c.l.b16 %v2971
    %v3004 = vunpack.c.l.b16 %v2972
    %v3005 = vunpack.c.l.b16 %v2973
    %v3006 = vunpack.c.l.b16 %v2974
    %v3007 = vunpack.c.l.b16 %v2975
    %v3008 = vpack.c.b16 %v2993, %v2992
    %v3009 = vpack.c.b16 %v2995, %v2994
    %v3010 = vpack.c.b16 %v2997, %v2996
    %v3011 = vpack.c.b16 %v2999, %v2998
    %v3012 = vpack.c.b16 %v3001, %v3000
    %v3013 = vpack.c.b16 %v3003, %v3002
    %v3014 = vpack.c.b16 %v3005, %v3004
    %v3015 = vpack.c.b16 %v3007, %v3006
    %3024 = vmatprep.subr.bf16.mxu0 0
    %3025 = vmatpush1.bf16.msra.mxu0 %v3015
    %3026 = vmatprep.subr.bf16.mxu0 0
    %3027 = vmatpush1.bf16.msra.mxu0 %v3014
    %3028 = vmatprep.subr.bf16.mxu0 0
    %3029 = vmatpush1.bf16.msra.mxu0 %v3013
    %3030 = vmatprep.subr.bf16.mxu0 0
    %3031 = vmatpush1.bf16.msra.mxu0 %v3012
    %3032 = vmatprep.subr.bf16.mxu0 0
    %3033 = vmatpush1.bf16.msra.mxu0 %v3011
    %3034 = vmatprep.subr.bf16.mxu0 0
    %3035 = vmatpush1.bf16.msra.mxu0 %v3010
    %3036 = vmatprep.subr.bf16.mxu0 0
    %3037 = vmatpush1.bf16.msra.mxu0 %v3009
    %3038 = vmatprep.subr.bf16.mxu0 0
    %3039 = vmatpush1.bf16.msra.mxu0 %v3008
    %3040 = vmatprep.subr.bf16.mxu0 0
    %3041 = vmatpush2.bf16.msra.mxu0 0
    %3042 = vmatprep.subr.bf16.mxu0 0
    %3043 = vmatpush2.bf16.msra.mxu0 0
    %3044 = vmatprep.subr.bf16.mxu0 0
    %3045 = vmatpush2.bf16.msra.mxu0 0
    %3046 = vmatprep.subr.bf16.mxu0 0
    %3047 = vmatpush2.bf16.msra.mxu0 0
    %3048 = vmatprep.subr.bf16.mxu0 0
    %3049 = vmatpush2.bf16.msra.mxu0 0
    %3050 = vmatprep.subr.bf16.mxu0 0
    %3051 = vmatpush2.bf16.msra.mxu0 0
    %3052 = vmatprep.subr.bf16.mxu0 0
    %3053 = vmatpush2.bf16.msra.mxu0 0
    %3054 = vmatprep.subr.bf16.mxu0 0
    %3055 = vmatpush2.bf16.msra.mxu0 0
    %3056 = vmatprep.mubr.bf16.mxu0 0
    %3057 = vmatmul.mubr.bf16.gmra.mxu0 %v2959
    %v3058 = vpop.f32.mrf.mxu0
    %v3059 = vadd.f32 0.0, %v3058
    %v3060 = vpop.f32.mrf.mxu0
    %v3061 = vpop.f32.mrf.mxu0
    %v3062 = vadd.f32 0.0, %v3061
    %v3063 = vpop.f32.mrf.mxu0
    %3064 = vdwg.mxu0
    %3067 = vrot.lane.b32.xlu0 %v3059, 112
    %v3068 = vpop.permute.xlu0 %3067
    %3069 = vrot.lane.b32.xlu0 %v3062, 112
    %v3070 = vpop.permute.xlu0 %3069
    %v3073 = vadd.f32 %v3059, %v3068
    %v3074 = vadd.f32 %v3062, %v3070
    %v3075 = vmul.f32 %v3073, 0.5
    %v3076 = vmul.f32 %v3074, 0.5
    %v3077 = vsub.f32 %v3059, %v3075
    %v3078 = vsub.f32 %v3062, %v3076
    %v3079 = vmul.f32 %v3077, %v3077
    %v3080 = vmul.f32 %v3078, %v3078
    %3083 = vrot.lane.b32.xlu0 %v3075, 16
    %v3084 = vpop.permute.xlu0 %3083
    %3085 = vrot.lane.b32.xlu0 %v3076, 16
    %v3086 = vpop.permute.xlu0 %3085
    %v3089 = vsub.f32 %v3059, %v3084
    %v3090 = vsub.f32 %v3062, %v3086
    %v3091 = vmul.f32 %v3089, %v3089
    %v3092 = vmul.f32 %v3090, %v3090
    %3095 = vrot.lane.b32.xlu0 %v3091, 112
    %v3096 = vpop.permute.xlu0 %3095
    %3097 = vrot.lane.b32.xlu0 %v3092, 112
    %v3098 = vpop.permute.xlu0 %3097
    %v3101 = vadd.f32 %v3079, %v3096
    %v3102 = vadd.f32 %v3080, %v3098
    %v3103 = vrsqrt.pop %v3101
    %v3104 = vmul.f32 %v3101, %v3103
    %vm3105 = vcmp.eq.f32.partialorder %v3101, inf
    %v3106 = vsel %vm3105, %v3101, %v3104
    %vm3107 = vcmp.eq.f32.partialorder %v3101, 0.0
    %v3108 = vand.u32 %v3101, 2147483648
    %v3109 = vsel %vm3107, %v3108, %v3106
    %v3110 = vrsqrt.pop %v3102
    %v3111 = vmul.f32 %v3102, %v3110
    %vm3112 = vcmp.eq.f32.partialorder %v3102, inf
    %v3113 = vsel %vm3112, %v3102, %v3111
    %vm3114 = vcmp.eq.f32.partialorder %v3102, 0.0
    %v3115 = vand.u32 %v3102, 2147483648
    %v3116 = vsel %vm3114, %v3115, %v3113
    %v3117 = vsel %vm1212, %v3109, 0.0
    %v3118 = vsel %vm1212, %v3116, 0.0
    %v3119 = vadd.f32 %v3117, %v3118
    %3120 = vadd.xlane.f32.xlu0 %v3119
    %v3121 = vpop.xlane.xlu0 %3120
    %v3122 = vrot.slane %v3121, 4
    %v3123 = vadd.f32 %v3121, %v3122
    %v3124 = vrot.slane %v3123, 2
    %v3125 = vadd.f32 %v3123, %v3124
    %v3126 = vrot.slane %v3125, 1
    %v3127 = vadd.f32 %v3125, %v3126
    %s3128 = vtos %v3127
    %v3129 = vstv %s3128
    %v3130 = vrcp.pop 256.0
    %v3131 = vmul.f32 %v3129, %v3130
    %v3132 = vld [vmem:[%s20] sm:$0xf]
    %v3133 = vld [vmem:[%s20 + $0x4] sm:$0xf]
    %v3134 = vld [vmem:[%s20 + $0x8] sm:$0xf]
    %v3135 = vld [vmem:[%s20 + $0xc] sm:$0xf]
    %v3136 = vld [vmem:[%s20 + $0x10] sm:$0xf]
    %v3137 = vld [vmem:[%s20 + $0x14] sm:$0xf]
    %v3138 = vld [vmem:[%s20 + $0x18] sm:$0xf]
    %v3139 = vld [vmem:[%s20 + $0x1c] sm:$0xf]
    %v3140 = vld [vmem:[%s20 + $0x20] sm:$0xf]
    %v3141 = vld [vmem:[%s20 + $0x24] sm:$0xf]
    %v3142 = vld [vmem:[%s20 + $0x28] sm:$0xf]
    %v3143 = vld [vmem:[%s20 + $0x2c] sm:$0xf]
    %v3144 = vld [vmem:[%s20 + $0x30] sm:$0xf]
    %v3145 = vld [vmem:[%s20 + $0x34] sm:$0xf]
    %v3146 = vld [vmem:[%s20 + $0x38] sm:$0xf]
    %v3147 = vld [vmem:[%s20 + $0x3c] sm:$0xf]
    %v3148 = vld [vmem:[%s20 + $0x40] sm:$0xf]
    %v3149 = vld [vmem:[%s20 + $0x44] sm:$0xf]
    %v3150 = vpack.c.bf16 %v3062, %v3059
    %v3169 = vunpack.c.l.b16 %v3132
    %v3170 = vunpack.c.l.b16 %v3133
    %v3171 = vunpack.c.l.b16 %v3134
    %v3172 = vunpack.c.l.b16 %v3135
    %v3173 = vunpack.c.l.b16 %v3136
    %v3174 = vunpack.c.l.b16 %v3137
    %v3175 = vunpack.c.l.b16 %v3138
    %v3176 = vunpack.c.l.b16 %v3139
    %v3177 = vunpack.c.l.b16 %v3140
    %v3178 = vunpack.c.l.b16 %v3141
    %v3179 = vunpack.c.l.b16 %v3142
    %v3180 = vunpack.c.l.b16 %v3143
    %v3181 = vunpack.c.l.b16 %v3144
    %v3182 = vunpack.c.l.b16 %v3145
    %v3183 = vunpack.c.l.b16 %v3146
    %v3184 = vunpack.c.l.b16 %v3147
    %v3185 = vunpack.c.l.b16 %v3148
    %v3186 = vunpack.c.l.b16 %v3149
    %v3187 = vpack.c.b16 %v3170, %v3169
    %v3188 = vpack.c.b16 %v3172, %v3171
    %v3189 = vpack.c.b16 %v3174, %v3173
    %v3190 = vpack.c.b16 %v3176, %v3175
    %v3191 = vpack.c.b16 %v3178, %v3177
    %v3192 = vpack.c.b16 %v3180, %v3179
    %v3193 = vpack.c.b16 %v3182, %v3181
    %v3194 = vpack.c.b16 %v3184, %v3183
    %v3195 = vpack.c.b16 %v3186, %v3185
    %v3197 = vsel %vm1212, %v3187, 0
    %v3200 = vsel %vm1212, %v3188, 0
    %v3203 = vsel %vm1212, %v3189, 0
    %v3206 = vsel %vm1212, %v3190, 0
    %v3209 = vsel %vm1212, %v3191, 0
    %v3212 = vsel %vm1212, %v3192, 0
    %v3215 = vsel %vm1212, %v3193, 0
    %v3218 = vsel %vm1212, %v3194, 0
    %v3221 = vsel %vm1212, %v3195, 0
    %3223 = vmatprep.subr.bf16.mxu0 0
    %3224 = vmatpush1.bf16.msra.mxu0 0
    %3225 = vmatprep.subr.bf16.mxu0 0
    %3226 = vmatpush1.bf16.msra.mxu0 0
    %3227 = vmatprep.subr.bf16.mxu0 0
    %3228 = vmatpush1.bf16.msra.mxu0 0
    %3229 = vmatprep.subr.bf16.mxu0 0
    %3230 = vmatpush1.bf16.msra.mxu0 0
    %3231 = vmatprep.subr.bf16.mxu0 0
    %3232 = vmatpush1.bf16.msra.mxu0 0
    %3233 = vmatprep.subr.bf16.mxu0 0
    %3234 = vmatpush1.bf16.msra.mxu0 0
    %3235 = vmatprep.subr.bf16.mxu0 0
    %3236 = vmatpush1.bf16.msra.mxu0 0
    %3237 = vmatprep.subr.bf16.mxu0 0
    %3238 = vmatpush1.bf16.msra.mxu0 %v3150
    %3239 = vmatprep.subr.bf16.mxu0 0
    %3240 = vmatpush2.bf16.msra.mxu0 0
    %3241 = vmatprep.subr.bf16.mxu0 0
    %3242 = vmatpush2.bf16.msra.mxu0 0
    %3243 = vmatprep.subr.bf16.mxu0 0
    %3244 = vmatpush2.bf16.msra.mxu0 0
    %3245 = vmatprep.subr.bf16.mxu0 0
    %3246 = vmatpush2.bf16.msra.mxu0 0
    %3247 = vmatprep.subr.bf16.mxu0 0
    %3248 = vmatpush2.bf16.msra.mxu0 0
    %3249 = vmatprep.subr.bf16.mxu0 0
    %3250 = vmatpush2.bf16.msra.mxu0 0
    %3251 = vmatprep.subr.bf16.mxu0 0
    %3252 = vmatpush2.bf16.msra.mxu0 0
    %3253 = vmatprep.subr.bf16.mxu0 0
    %3254 = vmatpush2.bf16.msra.mxu0 0
    %3255 = vmatprep.mubr.bf16.mxu0 0
    %3256 = vmatmul.mubr.bf16.gmra.mxu0 %v3197
    %v3257 = vpop.f32.mrf.mxu0
    %v3258 = vadd.f32 0.0, %v3257
    %v3259 = vpop.f32.mrf.mxu0
    %v3260 = vpop.f32.mrf.mxu0
    %v3261 = vadd.f32 0.0, %v3260
    %v3262 = vpop.f32.mrf.mxu0
    %3263 = vmatprep.mubr.bf16.mxu0 0
    %3264 = vmatmul.mubr.bf16.gmra.mxu0 %v3200
    %v3265 = vpop.f32.mrf.mxu0
    %v3266 = vadd.f32 0.0, %v3265
    %v3267 = vpop.f32.mrf.mxu0
    %v3268 = vpop.f32.mrf.mxu0
    %v3269 = vadd.f32 0.0, %v3268
    %v3270 = vpop.f32.mrf.mxu0
    %3271 = vmatprep.mubr.bf16.mxu0 0
    %3272 = vmatmul.mubr.bf16.gmra.mxu0 %v3203
    %v3273 = vpop.f32.mrf.mxu0
    %v3274 = vadd.f32 0.0, %v3273
    %v3275 = vpop.f32.mrf.mxu0
    %v3276 = vpop.f32.mrf.mxu0
    %v3277 = vadd.f32 0.0, %v3276
    %v3278 = vpop.f32.mrf.mxu0
    %3279 = vmatprep.mubr.bf16.mxu0 0
    %3280 = vmatmul.mubr.bf16.gmra.mxu0 %v3206
    %v3281 = vpop.f32.mrf.mxu0
    %v3282 = vadd.f32 0.0, %v3281
    %v3283 = vpop.f32.mrf.mxu0
    %v3284 = vpop.f32.mrf.mxu0
    %v3285 = vadd.f32 0.0, %v3284
    %v3286 = vpop.f32.mrf.mxu0
    %3287 = vmatprep.mubr.bf16.mxu0 0
    %3288 = vmatmul.mubr.bf16.gmra.mxu0 %v3209
    %v3289 = vpop.f32.mrf.mxu0
    %v3290 = vadd.f32 0.0, %v3289
    %v3291 = vpop.f32.mrf.mxu0
    %v3292 = vpop.f32.mrf.mxu0
    %v3293 = vadd.f32 0.0, %v3292
    %v3294 = vpop.f32.mrf.mxu0
    %3295 = vmatprep.mubr.bf16.mxu0 0
    %3296 = vmatmul.mubr.bf16.gmra.mxu0 %v3212
    %v3297 = vpop.f32.mrf.mxu0
    %v3298 = vadd.f32 0.0, %v3297
    %v3299 = vpop.f32.mrf.mxu0
    %v3300 = vpop.f32.mrf.mxu0
    %v3301 = vadd.f32 0.0, %v3300
    %v3302 = vpop.f32.mrf.mxu0
    %3303 = vmatprep.mubr.bf16.mxu0 0
    %3304 = vmatmul.mubr.bf16.gmra.mxu0 %v3215
    %v3305 = vpop.f32.mrf.mxu0
    %v3306 = vadd.f32 0.0, %v3305
    %v3307 = vpop.f32.mrf.mxu0
    %v3308 = vpop.f32.mrf.mxu0
    %v3309 = vadd.f32 0.0, %v3308
    %v3310 = vpop.f32.mrf.mxu0
    %3311 = vmatprep.mubr.bf16.mxu0 0
    %3312 = vmatmul.mubr.bf16.gmra.mxu0 %v3218
    %v3313 = vpop.f32.mrf.mxu0
    %v3314 = vadd.f32 0.0, %v3313
    %v3315 = vpop.f32.mrf.mxu0
    %v3316 = vpop.f32.mrf.mxu0
    %v3317 = vadd.f32 0.0, %v3316
    %v3318 = vpop.f32.mrf.mxu0
    %3319 = vmatprep.mubr.bf16.mxu0 0
    %3320 = vmatmul.mubr.bf16.gmra.mxu0 %v3221
    %v3321 = vpop.f32.mrf.mxu0
    %v3322 = vadd.f32 0.0, %v3321
    %v3323 = vpop.f32.mrf.mxu0
    %v3324 = vpop.f32.mrf.mxu0
    %v3325 = vadd.f32 0.0, %v3324
    %v3326 = vpop.f32.mrf.mxu0
    %3327 = vdwg.mxu0
    %v3328 = vpack.c.bf16 %v3261, %v3258
    %v3329 = vld [vmem:[%s18] sm:$0xf]
    %v3330 = vld [vmem:[%s18 + $0x4] sm:$0xf]
    %v3331 = vld [vmem:[%s18 + $0x8] sm:$0xf]
    %v3332 = vld [vmem:[%s18 + $0xc] sm:$0xf]
    %v3333 = vpack.c.bf16 %v3269, %v3266
    %s3334 = scalar_lea.vmem %s18, 16
    %v3335 = vld [vmem:[%s3334] sm:$0xf]
    %v3336 = vld [vmem:[%s3334 + $0x4] sm:$0xf]
    %v3337 = vld [vmem:[%s3334 + $0x8] sm:$0xf]
    %v3338 = vld [vmem:[%s3334 + $0xc] sm:$0xf]
    %v3343 = vunpack.c.l.b16 %v3335
    %v3344 = vunpack.c.l.b16 %v3336
    %v3345 = vunpack.c.l.b16 %v3337
    %v3346 = vunpack.c.l.b16 %v3338
    %v3347 = vpack.c.b16 %v3344, %v3343
    %v3348 = vpack.c.b16 %v3346, %v3345
    %vm3351 = vcmask 261120
    %v3353 = vsel %vm3351, %v3333, 0
    %3355 = vmatprep.subr.bf16.mxu0 0
    %3356 = vmatpush1.bf16.msra.mxu0 0
    %3357 = vmatprep.subr.bf16.mxu0 0
    %3358 = vmatpush1.bf16.msra.mxu0 0
    %3359 = vmatprep.subr.bf16.mxu0 0
    %3360 = vmatpush1.bf16.msra.mxu0 0
    %3361 = vmatprep.subr.bf16.mxu0 0
    %3362 = vmatpush1.bf16.msra.mxu0 0
    %3363 = vmatprep.subr.bf16.mxu0 0
    %3364 = vmatpush1.bf16.msra.mxu0 0
    %3365 = vmatprep.subr.bf16.mxu0 0
    %3366 = vmatpush1.bf16.msra.mxu0 0
    %3367 = vmatprep.subr.bf16.mxu0 0
    %3368 = vmatpush1.bf16.msra.mxu0 %v3348
    %3369 = vmatprep.subr.bf16.mxu0 0
    %3370 = vmatpush1.bf16.msra.mxu0 %v3347
    %3371 = vmatprep.subr.bf16.mxu0 0
    %3372 = vmatpush2.bf16.msra.mxu0 0
    %3373 = vmatprep.subr.bf16.mxu0 0
    %3374 = vmatpush2.bf16.msra.mxu0 0
    %3375 = vmatprep.subr.bf16.mxu0 0
    %3376 = vmatpush2.bf16.msra.mxu0 0
    %3377 = vmatprep.subr.bf16.mxu0 0
    %3378 = vmatpush2.bf16.msra.mxu0 0
    %3379 = vmatprep.subr.bf16.mxu0 0
    %3380 = vmatpush2.bf16.msra.mxu0 0
    %3381 = vmatprep.subr.bf16.mxu0 0
    %3382 = vmatpush2.bf16.msra.mxu0 0
    %3383 = vmatprep.subr.bf16.mxu0 0
    %3384 = vmatpush2.bf16.msra.mxu0 0
    %3385 = vmatprep.subr.bf16.mxu0 0
    %3386 = vmatpush2.bf16.msra.mxu0 0
    %3387 = vmatprep.mubr.bf16.mxu0 0
    %3388 = vmatmul.mubr.bf16.gmra.mxu0 %v3353
    %v3389 = vpop.f32.mrf.mxu0
    %v3390 = vadd.f32 0.0, %v3389
    %v3391 = vpop.f32.mrf.mxu0
    %v3392 = vpop.f32.mrf.mxu0
    %v3393 = vadd.f32 0.0, %v3392
    %v3394 = vpop.f32.mrf.mxu0
    %3395 = vdwg.mxu0
    %v3400 = vunpack.c.l.b16 %v3329
    %v3401 = vunpack.c.l.b16 %v3330
    %v3402 = vunpack.c.l.b16 %v3331
    %v3403 = vunpack.c.l.b16 %v3332
    %v3404 = vpack.c.b16 %v3401, %v3400
    %v3405 = vpack.c.b16 %v3403, %v3402
    %v3409 = vsel %vm3351, %v3328, 0
    %3411 = vmatprep.subr.bf16.mxu0 0
    %3412 = vmatpush1.bf16.msra.mxu0 0
    %3413 = vmatprep.subr.bf16.mxu0 0
    %3414 = vmatpush1.bf16.msra.mxu0 0
    %3415 = vmatprep.subr.bf16.mxu0 0
    %3416 = vmatpush1.bf16.msra.mxu0 0
    %3417 = vmatprep.subr.bf16.mxu0 0
    %3418 = vmatpush1.bf16.msra.mxu0 0
    %3419 = vmatprep.subr.bf16.mxu0 0
    %3420 = vmatpush1.bf16.msra.mxu0 0
    %3421 = vmatprep.subr.bf16.mxu0 0
    %3422 = vmatpush1.bf16.msra.mxu0 0
    %3423 = vmatprep.subr.bf16.mxu0 0
    %3424 = vmatpush1.bf16.msra.mxu0 %v3405
    %3425 = vmatprep.subr.bf16.mxu0 0
    %3426 = vmatpush1.bf16.msra.mxu0 %v3404
    %3427 = vmatprep.subr.bf16.mxu0 0
    %3428 = vmatpush2.bf16.msra.mxu0 0
    %3429 = vmatprep.subr.bf16.mxu0 0
    %3430 = vmatpush2.bf16.msra.mxu0 0
    %3431 = vmatprep.subr.bf16.mxu0 0
    %3432 = vmatpush2.bf16.msra.mxu0 0
    %3433 = vmatprep.subr.bf16.mxu0 0
    %3434 = vmatpush2.bf16.msra.mxu0 0
    %3435 = vmatprep.subr.bf16.mxu0 0
    %3436 = vmatpush2.bf16.msra.mxu0 0
    %3437 = vmatprep.subr.bf16.mxu0 0
    %3438 = vmatpush2.bf16.msra.mxu0 0
    %3439 = vmatprep.subr.bf16.mxu0 0
    %3440 = vmatpush2.bf16.msra.mxu0 0
    %3441 = vmatprep.subr.bf16.mxu0 0
    %3442 = vmatpush2.bf16.msra.mxu0 0
    %3443 = vmatprep.mubr.bf16.mxu0 0
    %3444 = vmatmul.mubr.bf16.gmra.mxu0 %v3409
    %v3445 = vpop.f32.mrf.mxu0
    %v3446 = vadd.f32 %v3390, %v3445
    %v3447 = vpop.f32.mrf.mxu0
    %v3448 = vpop.f32.mrf.mxu0
    %v3449 = vadd.f32 %v3393, %v3448
    %v3450 = vpop.f32.mrf.mxu0
    %3451 = vdwg.mxu0
    %v3452 = vpack.c.bf16 %v3277, %v3274
    %s3453 = scalar_lea.vmem %s18, 32
    %v3454 = vld [vmem:[%s3453] sm:$0xf]
    %v3455 = vld [vmem:[%s3453 + $0x4] sm:$0xf]
    %v3456 = vld [vmem:[%s3453 + $0x8] sm:$0xf]
    %v3457 = vld [vmem:[%s3453 + $0xc] sm:$0xf]
    %v3462 = vunpack.c.l.b16 %v3454
    %v3463 = vunpack.c.l.b16 %v3455
    %v3464 = vunpack.c.l.b16 %v3456
    %v3465 = vunpack.c.l.b16 %v3457
    %v3466 = vpack.c.b16 %v3463, %v3462
    %v3467 = vpack.c.b16 %v3465, %v3464
    %v3471 = vsel %vm3351, %v3452, 0
    %3473 = vmatprep.subr.bf16.mxu0 0
    %3474 = vmatpush1.bf16.msra.mxu0 0
    %3475 = vmatprep.subr.bf16.mxu0 0
    %3476 = vmatpush1.bf16.msra.mxu0 0
    %3477 = vmatprep.subr.bf16.mxu0 0
    %3478 = vmatpush1.bf16.msra.mxu0 0
    %3479 = vmatprep.subr.bf16.mxu0 0
    %3480 = vmatpush1.bf16.msra.mxu0 0
    %3481 = vmatprep.subr.bf16.mxu0 0
    %3482 = vmatpush1.bf16.msra.mxu0 0
    %3483 = vmatprep.subr.bf16.mxu0 0
    %3484 = vmatpush1.bf16.msra.mxu0 0
    %3485 = vmatprep.subr.bf16.mxu0 0
    %3486 = vmatpush1.bf16.msra.mxu0 %v3467
    %3487 = vmatprep.subr.bf16.mxu0 0
    %3488 = vmatpush1.bf16.msra.mxu0 %v3466
    %3489 = vmatprep.subr.bf16.mxu0 0
    %3490 = vmatpush2.bf16.msra.mxu0 0
    %3491 = vmatprep.subr.bf16.mxu0 0
    %3492 = vmatpush2.bf16.msra.mxu0 0
    %3493 = vmatprep.subr.bf16.mxu0 0
    %3494 = vmatpush2.bf16.msra.mxu0 0
    %3495 = vmatprep.subr.bf16.mxu0 0
    %3496 = vmatpush2.bf16.msra.mxu0 0
    %3497 = vmatprep.subr.bf16.mxu0 0
    %3498 = vmatpush2.bf16.msra.mxu0 0
    %3499 = vmatprep.subr.bf16.mxu0 0
    %3500 = vmatpush2.bf16.msra.mxu0 0
    %3501 = vmatprep.subr.bf16.mxu0 0
    %3502 = vmatpush2.bf16.msra.mxu0 0
    %3503 = vmatprep.subr.bf16.mxu0 0
    %3504 = vmatpush2.bf16.msra.mxu0 0
    %3505 = vmatprep.mubr.bf16.mxu0 0
    %3506 = vmatmul.mubr.bf16.gmra.mxu0 %v3471
    %v3507 = vpop.f32.mrf.mxu0
    %v3508 = vadd.f32 0.0, %v3507
    %v3509 = vpop.f32.mrf.mxu0
    %v3510 = vpop.f32.mrf.mxu0
    %v3511 = vadd.f32 0.0, %v3510
    %v3512 = vpop.f32.mrf.mxu0
    %3513 = vdwg.mxu0
    %v3514 = vadd.f32 %v3446, %v3508
    %v3515 = vadd.f32 %v3449, %v3511
    %v3516 = vpack.c.bf16 %v3285, %v3282
    %s3517 = scalar_lea.vmem %s18, 48
    %v3518 = vld [vmem:[%s3517] sm:$0xf]
    %v3519 = vld [vmem:[%s3517 + $0x4] sm:$0xf]
    %v3520 = vld [vmem:[%s3517 + $0x8] sm:$0xf]
    %v3521 = vld [vmem:[%s3517 + $0xc] sm:$0xf]
    %v3526 = vunpack.c.l.b16 %v3518
    %v3527 = vunpack.c.l.b16 %v3519
    %v3528 = vunpack.c.l.b16 %v3520
    %v3529 = vunpack.c.l.b16 %v3521
    %v3530 = vpack.c.b16 %v3527, %v3526
    %v3531 = vpack.c.b16 %v3529, %v3528
    %v3535 = vsel %vm3351, %v3516, 0
    %3537 = vmatprep.subr.bf16.mxu0 0
    %3538 = vmatpush1.bf16.msra.mxu0 0
    %3539 = vmatprep.subr.bf16.mxu0 0
    %3540 = vmatpush1.bf16.msra.mxu0 0
    %3541 = vmatprep.subr.bf16.mxu0 0
    %3542 = vmatpush1.bf16.msra.mxu0 0
    %3543 = vmatprep.subr.bf16.mxu0 0
    %3544 = vmatpush1.bf16.msra.mxu0 0
    %3545 = vmatprep.subr.bf16.mxu0 0
    %3546 = vmatpush1.bf16.msra.mxu0 0
    %3547 = vmatprep.subr.bf16.mxu0 0
    %3548 = vmatpush1.bf16.msra.mxu0 0
    %3549 = vmatprep.subr.bf16.mxu0 0
    %3550 = vmatpush1.bf16.msra.mxu0 %v3531
    %3551 = vmatprep.subr.bf16.mxu0 0
    %3552 = vmatpush1.bf16.msra.mxu0 %v3530
    %3553 = vmatprep.subr.bf16.mxu0 0
    %3554 = vmatpush2.bf16.msra.mxu0 0
    %3555 = vmatprep.subr.bf16.mxu0 0
    %3556 = vmatpush2.bf16.msra.mxu0 0
    %3557 = vmatprep.subr.bf16.mxu0 0
    %3558 = vmatpush2.bf16.msra.mxu0 0
    %3559 = vmatprep.subr.bf16.mxu0 0
    %3560 = vmatpush2.bf16.msra.mxu0 0
    %3561 = vmatprep.subr.bf16.mxu0 0
    %3562 = vmatpush2.bf16.msra.mxu0 0
    %3563 = vmatprep.subr.bf16.mxu0 0
    %3564 = vmatpush2.bf16.msra.mxu0 0
    %3565 = vmatprep.subr.bf16.mxu0 0
    %3566 = vmatpush2.bf16.msra.mxu0 0
    %3567 = vmatprep.subr.bf16.mxu0 0
    %3568 = vmatpush2.bf16.msra.mxu0 0
    %3569 = vmatprep.mubr.bf16.mxu0 0
    %3570 = vmatmul.mubr.bf16.gmra.mxu0 %v3535
    %v3571 = vpop.f32.mrf.mxu0
    %v3572 = vadd.f32 0.0, %v3571
    %v3573 = vpop.f32.mrf.mxu0
    %v3574 = vpop.f32.mrf.mxu0
    %v3575 = vadd.f32 0.0, %v3574
    %v3576 = vpop.f32.mrf.mxu0
    %3577 = vdwg.mxu0
    %v3578 = vadd.f32 %v3514, %v3572
    %v3579 = vadd.f32 %v3515, %v3575
    %v3580 = vpack.c.bf16 %v3293, %v3290
    %s3581 = scalar_lea.vmem %s18, 64
    %v3582 = vld [vmem:[%s3581] sm:$0xf]
    %v3583 = vld [vmem:[%s3581 + $0x4] sm:$0xf]
    %v3584 = vld [vmem:[%s3581 + $0x8] sm:$0xf]
    %v3585 = vld [vmem:[%s3581 + $0xc] sm:$0xf]
    %v3590 = vunpack.c.l.b16 %v3582
    %v3591 = vunpack.c.l.b16 %v3583
    %v3592 = vunpack.c.l.b16 %v3584
    %v3593 = vunpack.c.l.b16 %v3585
    %v3594 = vpack.c.b16 %v3591, %v3590
    %v3595 = vpack.c.b16 %v3593, %v3592
    %v3599 = vsel %vm3351, %v3580, 0
    %3601 = vmatprep.subr.bf16.mxu0 0
    %3602 = vmatpush1.bf16.msra.mxu0 0
    %3603 = vmatprep.subr.bf16.mxu0 0
    %3604 = vmatpush1.bf16.msra.mxu0 0
    %3605 = vmatprep.subr.bf16.mxu0 0
    %3606 = vmatpush1.bf16.msra.mxu0 0
    %3607 = vmatprep.subr.bf16.mxu0 0
    %3608 = vmatpush1.bf16.msra.mxu0 0
    %3609 = vmatprep.subr.bf16.mxu0 0
    %3610 = vmatpush1.bf16.msra.mxu0 0
    %3611 = vmatprep.subr.bf16.mxu0 0
    %3612 = vmatpush1.bf16.msra.mxu0 0
    %3613 = vmatprep.subr.bf16.mxu0 0
    %3614 = vmatpush1.bf16.msra.mxu0 %v3595
    %3615 = vmatprep.subr.bf16.mxu0 0
    %3616 = vmatpush1.bf16.msra.mxu0 %v3594
    %3617 = vmatprep.subr.bf16.mxu0 0
    %3618 = vmatpush2.bf16.msra.mxu0 0
    %3619 = vmatprep.subr.bf16.mxu0 0
    %3620 = vmatpush2.bf16.msra.mxu0 0
    %3621 = vmatprep.subr.bf16.mxu0 0
    %3622 = vmatpush2.bf16.msra.mxu0 0
    %3623 = vmatprep.subr.bf16.mxu0 0
    %3624 = vmatpush2.bf16.msra.mxu0 0
    %3625 = vmatprep.subr.bf16.mxu0 0
    %3626 = vmatpush2.bf16.msra.mxu0 0
    %3627 = vmatprep.subr.bf16.mxu0 0
    %3628 = vmatpush2.bf16.msra.mxu0 0
    %3629 = vmatprep.subr.bf16.mxu0 0
    %3630 = vmatpush2.bf16.msra.mxu0 0
    %3631 = vmatprep.subr.bf16.mxu0 0
    %3632 = vmatpush2.bf16.msra.mxu0 0
    %3633 = vmatprep.mubr.bf16.mxu0 0
    %3634 = vmatmul.mubr.bf16.gmra.mxu0 %v3599
    %v3635 = vpop.f32.mrf.mxu0
    %v3636 = vadd.f32 0.0, %v3635
    %v3637 = vpop.f32.mrf.mxu0
    %v3638 = vpop.f32.mrf.mxu0
    %v3639 = vadd.f32 0.0, %v3638
    %v3640 = vpop.f32.mrf.mxu0
    %3641 = vdwg.mxu0
    %v3642 = vadd.f32 %v3578, %v3636
    %v3643 = vadd.f32 %v3579, %v3639
    %v3644 = vpack.c.bf16 %v3301, %v3298
    %s3645 = scalar_lea.vmem %s18, 80
    %v3646 = vld [vmem:[%s3645] sm:$0xf]
    %v3647 = vld [vmem:[%s3645 + $0x4] sm:$0xf]
    %v3648 = vld [vmem:[%s3645 + $0x8] sm:$0xf]
    %v3649 = vld [vmem:[%s3645 + $0xc] sm:$0xf]
    %v3654 = vunpack.c.l.b16 %v3646
    %v3655 = vunpack.c.l.b16 %v3647
    %v3656 = vunpack.c.l.b16 %v3648
    %v3657 = vunpack.c.l.b16 %v3649
    %v3658 = vpack.c.b16 %v3655, %v3654
    %v3659 = vpack.c.b16 %v3657, %v3656
    %v3663 = vsel %vm3351, %v3644, 0
    %3665 = vmatprep.subr.bf16.mxu0 0
    %3666 = vmatpush1.bf16.msra.mxu0 0
    %3667 = vmatprep.subr.bf16.mxu0 0
    %3668 = vmatpush1.bf16.msra.mxu0 0
    %3669 = vmatprep.subr.bf16.mxu0 0
    %3670 = vmatpush1.bf16.msra.mxu0 0
    %3671 = vmatprep.subr.bf16.mxu0 0
    %3672 = vmatpush1.bf16.msra.mxu0 0
    %3673 = vmatprep.subr.bf16.mxu0 0
    %3674 = vmatpush1.bf16.msra.mxu0 0
    %3675 = vmatprep.subr.bf16.mxu0 0
    %3676 = vmatpush1.bf16.msra.mxu0 0
    %3677 = vmatprep.subr.bf16.mxu0 0
    %3678 = vmatpush1.bf16.msra.mxu0 %v3659
    %3679 = vmatprep.subr.bf16.mxu0 0
    %3680 = vmatpush1.bf16.msra.mxu0 %v3658
    %3681 = vmatprep.subr.bf16.mxu0 0
    %3682 = vmatpush2.bf16.msra.mxu0 0
    %3683 = vmatprep.subr.bf16.mxu0 0
    %3684 = vmatpush2.bf16.msra.mxu0 0
    %3685 = vmatprep.subr.bf16.mxu0 0
    %3686 = vmatpush2.bf16.msra.mxu0 0
    %3687 = vmatprep.subr.bf16.mxu0 0
    %3688 = vmatpush2.bf16.msra.mxu0 0
    %3689 = vmatprep.subr.bf16.mxu0 0
    %3690 = vmatpush2.bf16.msra.mxu0 0
    %3691 = vmatprep.subr.bf16.mxu0 0
    %3692 = vmatpush2.bf16.msra.mxu0 0
    %3693 = vmatprep.subr.bf16.mxu0 0
    %3694 = vmatpush2.bf16.msra.mxu0 0
    %3695 = vmatprep.subr.bf16.mxu0 0
    %3696 = vmatpush2.bf16.msra.mxu0 0
    %3697 = vmatprep.mubr.bf16.mxu0 0
    %3698 = vmatmul.mubr.bf16.gmra.mxu0 %v3663
    %v3699 = vpop.f32.mrf.mxu0
    %v3700 = vadd.f32 0.0, %v3699
    %v3701 = vpop.f32.mrf.mxu0
    %v3702 = vpop.f32.mrf.mxu0
    %v3703 = vadd.f32 0.0, %v3702
    %v3704 = vpop.f32.mrf.mxu0
    %3705 = vdwg.mxu0
    %v3706 = vadd.f32 %v3642, %v3700
    %v3707 = vadd.f32 %v3643, %v3703
    %v3708 = vpack.c.bf16 %v3309, %v3306
    %s3709 = scalar_lea.vmem %s18, 96
    %v3710 = vld [vmem:[%s3709] sm:$0xf]
    %v3711 = vld [vmem:[%s3709 + $0x4] sm:$0xf]
    %v3712 = vld [vmem:[%s3709 + $0x8] sm:$0xf]
    %v3713 = vld [vmem:[%s3709 + $0xc] sm:$0xf]
    %v3718 = vunpack.c.l.b16 %v3710
    %v3719 = vunpack.c.l.b16 %v3711
    %v3720 = vunpack.c.l.b16 %v3712
    %v3721 = vunpack.c.l.b16 %v3713
    %v3722 = vpack.c.b16 %v3719, %v3718
    %v3723 = vpack.c.b16 %v3721, %v3720
    %v3727 = vsel %vm3351, %v3708, 0
    %3729 = vmatprep.subr.bf16.mxu0 0
    %3730 = vmatpush1.bf16.msra.mxu0 0
    %3731 = vmatprep.subr.bf16.mxu0 0
    %3732 = vmatpush1.bf16.msra.mxu0 0
    %3733 = vmatprep.subr.bf16.mxu0 0
    %3734 = vmatpush1.bf16.msra.mxu0 0
    %3735 = vmatprep.subr.bf16.mxu0 0
    %3736 = vmatpush1.bf16.msra.mxu0 0
    %3737 = vmatprep.subr.bf16.mxu0 0
    %3738 = vmatpush1.bf16.msra.mxu0 0
    %3739 = vmatprep.subr.bf16.mxu0 0
    %3740 = vmatpush1.bf16.msra.mxu0 0
    %3741 = vmatprep.subr.bf16.mxu0 0
    %3742 = vmatpush1.bf16.msra.mxu0 %v3723
    %3743 = vmatprep.subr.bf16.mxu0 0
    %3744 = vmatpush1.bf16.msra.mxu0 %v3722
    %3745 = vmatprep.subr.bf16.mxu0 0
    %3746 = vmatpush2.bf16.msra.mxu0 0
    %3747 = vmatprep.subr.bf16.mxu0 0
    %3748 = vmatpush2.bf16.msra.mxu0 0
    %3749 = vmatprep.subr.bf16.mxu0 0
    %3750 = vmatpush2.bf16.msra.mxu0 0
    %3751 = vmatprep.subr.bf16.mxu0 0
    %3752 = vmatpush2.bf16.msra.mxu0 0
    %3753 = vmatprep.subr.bf16.mxu0 0
    %3754 = vmatpush2.bf16.msra.mxu0 0
    %3755 = vmatprep.subr.bf16.mxu0 0
    %3756 = vmatpush2.bf16.msra.mxu0 0
    %3757 = vmatprep.subr.bf16.mxu0 0
    %3758 = vmatpush2.bf16.msra.mxu0 0
    %3759 = vmatprep.subr.bf16.mxu0 0
    %3760 = vmatpush2.bf16.msra.mxu0 0
    %3761 = vmatprep.mubr.bf16.mxu0 0
    %3762 = vmatmul.mubr.bf16.gmra.mxu0 %v3727
    %v3763 = vpop.f32.mrf.mxu0
    %v3764 = vadd.f32 0.0, %v3763
    %v3765 = vpop.f32.mrf.mxu0
    %v3766 = vpop.f32.mrf.mxu0
    %v3767 = vadd.f32 0.0, %v3766
    %v3768 = vpop.f32.mrf.mxu0
    %3769 = vdwg.mxu0
    %v3770 = vadd.f32 %v3706, %v3764
    %v3771 = vadd.f32 %v3707, %v3767
    %v3772 = vpack.c.bf16 %v3317, %v3314
    %s3773 = scalar_lea.vmem %s18, 112
    %v3774 = vld [vmem:[%s3773] sm:$0xf]
    %v3775 = vld [vmem:[%s3773 + $0x4] sm:$0xf]
    %v3776 = vld [vmem:[%s3773 + $0x8] sm:$0xf]
    %v3777 = vld [vmem:[%s3773 + $0xc] sm:$0xf]
    %v3782 = vunpack.c.l.b16 %v3774
    %v3783 = vunpack.c.l.b16 %v3775
    %v3784 = vunpack.c.l.b16 %v3776
    %v3785 = vunpack.c.l.b16 %v3777
    %v3786 = vpack.c.b16 %v3783, %v3782
    %v3787 = vpack.c.b16 %v3785, %v3784
    %v3791 = vsel %vm3351, %v3772, 0
    %3793 = vmatprep.subr.bf16.mxu0 0
    %3794 = vmatpush1.bf16.msra.mxu0 0
    %3795 = vmatprep.subr.bf16.mxu0 0
    %3796 = vmatpush1.bf16.msra.mxu0 0
    %3797 = vmatprep.subr.bf16.mxu0 0
    %3798 = vmatpush1.bf16.msra.mxu0 0
    %3799 = vmatprep.subr.bf16.mxu0 0
    %3800 = vmatpush1.bf16.msra.mxu0 0
    %3801 = vmatprep.subr.bf16.mxu0 0
    %3802 = vmatpush1.bf16.msra.mxu0 0
    %3803 = vmatprep.subr.bf16.mxu0 0
    %3804 = vmatpush1.bf16.msra.mxu0 0
    %3805 = vmatprep.subr.bf16.mxu0 0
    %3806 = vmatpush1.bf16.msra.mxu0 %v3787
    %3807 = vmatprep.subr.bf16.mxu0 0
    %3808 = vmatpush1.bf16.msra.mxu0 %v3786
    %3809 = vmatprep.subr.bf16.mxu0 0
    %3810 = vmatpush2.bf16.msra.mxu0 0
    %3811 = vmatprep.subr.bf16.mxu0 0
    %3812 = vmatpush2.bf16.msra.mxu0 0
    %3813 = vmatprep.subr.bf16.mxu0 0
    %3814 = vmatpush2.bf16.msra.mxu0 0
    %3815 = vmatprep.subr.bf16.mxu0 0
    %3816 = vmatpush2.bf16.msra.mxu0 0
    %3817 = vmatprep.subr.bf16.mxu0 0
    %3818 = vmatpush2.bf16.msra.mxu0 0
    %3819 = vmatprep.subr.bf16.mxu0 0
    %3820 = vmatpush2.bf16.msra.mxu0 0
    %3821 = vmatprep.subr.bf16.mxu0 0
    %3822 = vmatpush2.bf16.msra.mxu0 0
    %3823 = vmatprep.subr.bf16.mxu0 0
    %3824 = vmatpush2.bf16.msra.mxu0 0
    %3825 = vmatprep.mubr.bf16.mxu0 0
    %3826 = vmatmul.mubr.bf16.gmra.mxu0 %v3791
    %v3827 = vpop.f32.mrf.mxu0
    %v3828 = vadd.f32 0.0, %v3827
    %v3829 = vpop.f32.mrf.mxu0
    %v3830 = vpop.f32.mrf.mxu0
    %v3831 = vadd.f32 0.0, %v3830
    %v3832 = vpop.f32.mrf.mxu0
    %3833 = vdwg.mxu0
    %v3834 = vadd.f32 %v3770, %v3828
    %v3835 = vadd.f32 %v3771, %v3831
    %v3836 = vpack.c.bf16 %v3325, %v3322
    %s3837 = scalar_lea.vmem %s18, 128
    %v3838 = vld [vmem:[%s3837] sm:$0xf]
    %v3839 = vld [vmem:[%s3837 + $0x4] sm:$0xf]
    %v3840 = vld [vmem:[%s3837 + $0x8] sm:$0xf]
    %v3841 = vld [vmem:[%s3837 + $0xc] sm:$0xf]
    %v3846 = vunpack.c.l.b16 %v3838
    %v3847 = vunpack.c.l.b16 %v3839
    %v3848 = vunpack.c.l.b16 %v3840
    %v3849 = vunpack.c.l.b16 %v3841
    %v3850 = vpack.c.b16 %v3847, %v3846
    %v3851 = vpack.c.b16 %v3849, %v3848
    %v3855 = vsel %vm3351, %v3836, 0
    %3857 = vmatprep.subr.bf16.mxu0 0
    %3858 = vmatpush1.bf16.msra.mxu0 0
    %3859 = vmatprep.subr.bf16.mxu0 0
    %3860 = vmatpush1.bf16.msra.mxu0 0
    %3861 = vmatprep.subr.bf16.mxu0 0
    %3862 = vmatpush1.bf16.msra.mxu0 0
    %3863 = vmatprep.subr.bf16.mxu0 0
    %3864 = vmatpush1.bf16.msra.mxu0 0
    %3865 = vmatprep.subr.bf16.mxu0 0
    %3866 = vmatpush1.bf16.msra.mxu0 0
    %3867 = vmatprep.subr.bf16.mxu0 0
    %3868 = vmatpush1.bf16.msra.mxu0 0
    %3869 = vmatprep.subr.bf16.mxu0 0
    %3870 = vmatpush1.bf16.msra.mxu0 %v3851
    %3871 = vmatprep.subr.bf16.mxu0 0
    %3872 = vmatpush1.bf16.msra.mxu0 %v3850
    %3873 = vmatprep.subr.bf16.mxu0 0
    %3874 = vmatpush2.bf16.msra.mxu0 0
    %3875 = vmatprep.subr.bf16.mxu0 0
    %3876 = vmatpush2.bf16.msra.mxu0 0
    %3877 = vmatprep.subr.bf16.mxu0 0
    %3878 = vmatpush2.bf16.msra.mxu0 0
    %3879 = vmatprep.subr.bf16.mxu0 0
    %3880 = vmatpush2.bf16.msra.mxu0 0
    %3881 = vmatprep.subr.bf16.mxu0 0
    %3882 = vmatpush2.bf16.msra.mxu0 0
    %3883 = vmatprep.subr.bf16.mxu0 0
    %3884 = vmatpush2.bf16.msra.mxu0 0
    %3885 = vmatprep.subr.bf16.mxu0 0
    %3886 = vmatpush2.bf16.msra.mxu0 0
    %3887 = vmatprep.subr.bf16.mxu0 0
    %3888 = vmatpush2.bf16.msra.mxu0 0
    %3889 = vmatprep.mubr.bf16.mxu0 0
    %3890 = vmatmul.mubr.bf16.gmra.mxu0 %v3855
    %v3891 = vpop.f32.mrf.mxu0
    %v3892 = vadd.f32 0.0, %v3891
    %v3893 = vpop.f32.mrf.mxu0
    %v3894 = vpop.f32.mrf.mxu0
    %v3895 = vadd.f32 0.0, %v3894
    %v3896 = vpop.f32.mrf.mxu0
    %3897 = vdwg.mxu0
    %v3898 = vadd.f32 %v3834, %v3892
    %v3899 = vadd.f32 %v3835, %v3895
    %v3900 = vld [vmem:[%s21] sm:$0xff]
    %v3901 = vld [vmem:[%s21 + $0x8] sm:$0xff]
    %v3902 = vld [vmem:[%s19] sm:$0xff]
    %v3903 = vld [vmem:[%s19 + $0x8] sm:$0x1]
    %vm3904 = vcmask 72704
    %v3906 = vsel %vm3904, %v3900, 0
    %v3909 = vsel %vm3904, %v3901, 0
    %v3912 = vsel %vm124, %v3903, 0
    %3914 = vmatprep.subr.mxu0 0.0
    %3915 = vmatpush1.msra.mxu0 0.0
    %3916 = vmatprep.subr.mxu0 0.0
    %3917 = vmatpush1.msra.mxu0 0.0
    %3918 = vmatprep.subr.mxu0 0.0
    %3919 = vmatpush1.msra.mxu0 0.0
    %3920 = vmatprep.subr.mxu0 0.0
    %3921 = vmatpush1.msra.mxu0 0.0
    %3922 = vmatprep.subr.mxu0 0.0
    %3923 = vmatpush1.msra.mxu0 0.0
    %3924 = vmatprep.subr.mxu0 0.0
    %3925 = vmatpush1.msra.mxu0 0.0
    %3926 = vmatprep.subr.mxu0 0.0
    %3927 = vmatpush1.msra.mxu0 0.0
    %3928 = vmatprep.subr.mxu0 0.0
    %3929 = vmatpush1.msra.mxu0 0.0
    %3930 = vmatprep.subr.mxu0 0.0
    %3931 = vmatpush1.msra.mxu0 0.0
    %3932 = vmatprep.subr.mxu0 0.0
    %3933 = vmatpush1.msra.mxu0 0.0
    %3934 = vmatprep.subr.mxu0 0.0
    %3935 = vmatpush1.msra.mxu0 0.0
    %3936 = vmatprep.subr.mxu0 0.0
    %3937 = vmatpush1.msra.mxu0 0.0
    %3938 = vmatprep.subr.mxu0 0.0
    %3939 = vmatpush1.msra.mxu0 0.0
    %3940 = vmatprep.subr.mxu0 0.0
    %3941 = vmatpush1.msra.mxu0 0.0
    %3942 = vmatprep.subr.mxu0 0.0
    %3943 = vmatpush1.msra.mxu0 %v3912
    %3944 = vmatprep.subr.mxu0 0.0
    %3945 = vmatpush1.msra.mxu0 %v3902
    %3946 = vmatprep.subr.mxu0 0.0
    %3947 = vmatpush2.msra.mxu0 0.0
    %3948 = vmatprep.subr.mxu0 0.0
    %3949 = vmatpush2.msra.mxu0 0.0
    %3950 = vmatprep.subr.mxu0 0.0
    %3951 = vmatpush2.msra.mxu0 0.0
    %3952 = vmatprep.subr.mxu0 0.0
    %3953 = vmatpush2.msra.mxu0 0.0
    %3954 = vmatprep.subr.mxu0 0.0
    %3955 = vmatpush2.msra.mxu0 0.0
    %3956 = vmatprep.subr.mxu0 0.0
    %3957 = vmatpush2.msra.mxu0 0.0
    %3958 = vmatprep.subr.mxu0 0.0
    %3959 = vmatpush2.msra.mxu0 0.0
    %3960 = vmatprep.subr.mxu0 0.0
    %3961 = vmatpush2.msra.mxu0 0.0
    %3962 = vmatprep.subr.mxu0 0.0
    %3963 = vmatpush2.msra.mxu0 0.0
    %3964 = vmatprep.subr.mxu0 0.0
    %3965 = vmatpush2.msra.mxu0 0.0
    %3966 = vmatprep.subr.mxu0 0.0
    %3967 = vmatpush2.msra.mxu0 0.0
    %3968 = vmatprep.subr.mxu0 0.0
    %3969 = vmatpush2.msra.mxu0 0.0
    %3970 = vmatprep.subr.mxu0 0.0
    %3971 = vmatpush2.msra.mxu0 0.0
    %3972 = vmatprep.subr.mxu0 0.0
    %3973 = vmatpush2.msra.mxu0 0.0
    %3974 = vmatprep.subr.mxu0 0.0
    %3975 = vmatpush2.msra.mxu0 0.0
    %3976 = vmatprep.subr.mxu0 0.0
    %3977 = vmatpush2.msra.mxu0 0.0
    %3978 = vmatprep.mubr.f32.mxu0 0.0
    %3979 = vmatmul.mubr.f32.gmra.mxu0 %v3906
    %v3980 = vpop.f32.mrf.mxu0
    %v3981 = vadd.f32 0.0, %v3980
    %v3982 = vpop.f32.mrf.mxu0
    %3983 = vmatprep.mubr.f32.mxu0 0.0
    %3984 = vmatmul.mubr.f32.gmra.mxu0 %v3909
    %v3985 = vpop.f32.mrf.mxu0
    %v3986 = vadd.f32 0.0, %v3985
    %v3987 = vpop.f32.mrf.mxu0
    %3988 = vdwg.mxu0
    %v3989 = vmul.f32 %v3131, %v3981
    %v3990 = vmul.f32 %v3131, %v3986
    %v3991 = vadd.f32 %v3898, %v3989
    %v3992 = vadd.f32 %v3899, %v3990
    %v3993 = vld [vmem:[%s22] sm:$0xff]
    %v3994 = vld [vmem:[%s22 + $0x8] sm:$0xff]
    %3996 = vset.pattern.permute.xlu0 0
    %3997 = vperm.xlu0 %3996, %v3993
    %v3998 = vpop.permute.xlu0 %3997
    %4001 = vset.pattern.permute.xlu0 0
    %4002 = vperm.xlu0 %4001, %v3994
    %v4003 = vpop.permute.xlu0 %4002
    %v4005 = vadd.f32 %v3991, %v3998
    %v4006 = vadd.f32 %v3992, %v4003
    %vm4007 = vcmp.ge.f32.partialorder %v4005, 0.0
    %vm4008 = vcmp.ge.f32.partialorder %v4006, 0.0
    %v4009 = vmul.f32 %v4005, 0.2
    %v4010 = vmul.f32 %v4006, 0.2
    %v4011 = vsel %vm4007, %v4005, %v4009
    %v4012 = vsel %vm4008, %v4006, %v4010
    %v4013 = vld [vmem:[%s23] sm:$0xff]
    %v4014 = vld [vmem:[%s23 + $0x8] sm:$0xff]
    %v4015 = vld [vmem:[%s23 + $0x10] sm:$0xff]
    %v4016 = vld [vmem:[%s23 + $0x18] sm:$0xff]
    %v4017 = vld [vmem:[%s23 + $0x20] sm:$0xff]
    %v4018 = vld [vmem:[%s23 + $0x28] sm:$0xff]
    %v4019 = vld [vmem:[%s23 + $0x30] sm:$0xff]
    %v4020 = vld [vmem:[%s23 + $0x38] sm:$0xff]
    %v4021 = vld [vmem:[%s23 + $0x40] sm:$0xff]
    %v4022 = vld [vmem:[%s23 + $0x48] sm:$0xff]
    %v4023 = vld [vmem:[%s23 + $0x50] sm:$0xff]
    %v4024 = vld [vmem:[%s23 + $0x58] sm:$0xff]
    %v4025 = vld [vmem:[%s23 + $0x60] sm:$0xff]
    %v4026 = vld [vmem:[%s23 + $0x68] sm:$0xff]
    %v4027 = vld [vmem:[%s23 + $0x70] sm:$0xff]
    %v4028 = vld [vmem:[%s23 + $0x78] sm:$0xff]
    %v4029 = vld [vmem:[%s23 + $0x80] sm:$0xff]
    %v4030 = vld [vmem:[%s23 + $0x88] sm:$0xff]
    %v4031 = vld [vmem:[%s23 + $0x90] sm:$0xff]
    %v4032 = vld [vmem:[%s23 + $0x98] sm:$0xff]
    %v4033 = vld [vmem:[%s23 + $0xa0] sm:$0xff]
    %v4034 = vld [vmem:[%s23 + $0xa8] sm:$0xff]
    %v4035 = vld [vmem:[%s23 + $0xb0] sm:$0xff]
    %v4036 = vld [vmem:[%s23 + $0xb8] sm:$0xff]
    %v4037 = vld [vmem:[%s23 + $0xc0] sm:$0xff]
    %v4038 = vld [vmem:[%s23 + $0xc8] sm:$0xff]
    %v4039 = vld [vmem:[%s23 + $0xd0] sm:$0xff]
    %v4040 = vld [vmem:[%s23 + $0xd8] sm:$0xff]
    %v4041 = vld [vmem:[%s23 + $0xe0] sm:$0xff]
    %v4042 = vld [vmem:[%s23 + $0xe8] sm:$0xff]
    %v4043 = vld [vmem:[%s23 + $0xf0] sm:$0xff]
    %v4044 = vld [vmem:[%s23 + $0xf8] sm:$0xff]
    %v4045 = vld [vmem:[%s27] sm:$0x3]
    %v4046 = vmul.f32 %v4013, %v4011
    %v4047 = vmul.f32 %v4014, %v4012
    %v4048 = vmul.f32 %v4015, %v4011
    %v4049 = vmul.f32 %v4016, %v4012
    %v4050 = vmul.f32 %v4017, %v4011
    %v4051 = vmul.f32 %v4018, %v4012
    %v4052 = vmul.f32 %v4019, %v4011
    %v4053 = vmul.f32 %v4020, %v4012
    %v4054 = vmul.f32 %v4021, %v4011
    %v4055 = vmul.f32 %v4022, %v4012
    %v4056 = vmul.f32 %v4023, %v4011
    %v4057 = vmul.f32 %v4024, %v4012
    %v4058 = vmul.f32 %v4025, %v4011
    %v4059 = vmul.f32 %v4026, %v4012
    %v4060 = vmul.f32 %v4027, %v4011
    %v4061 = vmul.f32 %v4028, %v4012
    %v4062 = vmul.f32 %v4029, %v4011
    %v4063 = vmul.f32 %v4030, %v4012
    %v4064 = vmul.f32 %v4031, %v4011
    %v4065 = vmul.f32 %v4032, %v4012
    %v4066 = vmul.f32 %v4033, %v4011
    %v4067 = vmul.f32 %v4034, %v4012
    %v4068 = vmul.f32 %v4035, %v4011
    %v4069 = vmul.f32 %v4036, %v4012
    %v4070 = vmul.f32 %v4037, %v4011
    %v4071 = vmul.f32 %v4038, %v4012
    %v4072 = vmul.f32 %v4039, %v4011
    %v4073 = vmul.f32 %v4040, %v4012
    %v4074 = vmul.f32 %v4041, %v4011
    %v4075 = vmul.f32 %v4042, %v4012
    %v4076 = vmul.f32 %v4043, %v4011
    %v4077 = vmul.f32 %v4044, %v4012
    %v4078 = vsel %vm1212, %v4046, 0.0
    %4079 = vadd.xlane.f32.xlu0 %v4078
    %v4080 = vpop.xlane.xlu0 %4079
    %v4081 = vsel %vm1212, %v4047, 0.0
    %4082 = vadd.xlane.f32.xlu0 %v4081
    %v4083 = vpop.xlane.xlu0 %4082
    %v4084 = vsel %vm1212, %v4048, 0.0
    %4085 = vadd.xlane.f32.xlu0 %v4084
    %v4086 = vpop.xlane.xlu0 %4085
    %v4087 = vsel %vm1212, %v4049, 0.0
    %4088 = vadd.xlane.f32.xlu0 %v4087
    %v4089 = vpop.xlane.xlu0 %4088
    %v4090 = vsel %vm1212, %v4050, 0.0
    %4091 = vadd.xlane.f32.xlu0 %v4090
    %v4092 = vpop.xlane.xlu0 %4091
    %v4093 = vsel %vm1212, %v4051, 0.0
    %4094 = vadd.xlane.f32.xlu0 %v4093
    %v4095 = vpop.xlane.xlu0 %4094
    %v4096 = vsel %vm1212, %v4052, 0.0
    %4097 = vadd.xlane.f32.xlu0 %v4096
    %v4098 = vpop.xlane.xlu0 %4097
    %v4099 = vsel %vm1212, %v4053, 0.0
    %4100 = vadd.xlane.f32.xlu0 %v4099
    %v4101 = vpop.xlane.xlu0 %4100
    %v4102 = vsel %vm1212, %v4054, 0.0
    %4103 = vadd.xlane.f32.xlu0 %v4102
    %v4104 = vpop.xlane.xlu0 %4103
    %v4105 = vsel %vm1212, %v4055, 0.0
    %4106 = vadd.xlane.f32.xlu0 %v4105
    %v4107 = vpop.xlane.xlu0 %4106
    %v4108 = vsel %vm1212, %v4056, 0.0
    %4109 = vadd.xlane.f32.xlu0 %v4108
    %v4110 = vpop.xlane.xlu0 %4109
    %v4111 = vsel %vm1212, %v4057, 0.0
    %4112 = vadd.xlane.f32.xlu0 %v4111
    %v4113 = vpop.xlane.xlu0 %4112
    %v4114 = vsel %vm1212, %v4058, 0.0
    %4115 = vadd.xlane.f32.xlu0 %v4114
    %v4116 = vpop.xlane.xlu0 %4115
    %v4117 = vsel %vm1212, %v4059, 0.0
    %4118 = vadd.xlane.f32.xlu0 %v4117
    %v4119 = vpop.xlane.xlu0 %4118
    %v4120 = vsel %vm1212, %v4060, 0.0
    %4121 = vadd.xlane.f32.xlu0 %v4120
    %v4122 = vpop.xlane.xlu0 %4121
    %v4123 = vsel %vm1212, %v4061, 0.0
    %4124 = vadd.xlane.f32.xlu0 %v4123
    %v4125 = vpop.xlane.xlu0 %4124
    %v4126 = vsel %vm1212, %v4062, 0.0
    %4127 = vadd.xlane.f32.xlu0 %v4126
    %v4128 = vpop.xlane.xlu0 %4127
    %v4129 = vsel %vm1212, %v4063, 0.0
    %4130 = vadd.xlane.f32.xlu0 %v4129
    %v4131 = vpop.xlane.xlu0 %4130
    %v4132 = vsel %vm1212, %v4064, 0.0
    %4133 = vadd.xlane.f32.xlu0 %v4132
    %v4134 = vpop.xlane.xlu0 %4133
    %v4135 = vsel %vm1212, %v4065, 0.0
    %4136 = vadd.xlane.f32.xlu0 %v4135
    %v4137 = vpop.xlane.xlu0 %4136
    %v4138 = vsel %vm1212, %v4066, 0.0
    %4139 = vadd.xlane.f32.xlu0 %v4138
    %v4140 = vpop.xlane.xlu0 %4139
    %v4141 = vsel %vm1212, %v4067, 0.0
    %4142 = vadd.xlane.f32.xlu0 %v4141
    %v4143 = vpop.xlane.xlu0 %4142
    %v4144 = vsel %vm1212, %v4068, 0.0
    %4145 = vadd.xlane.f32.xlu0 %v4144
    %v4146 = vpop.xlane.xlu0 %4145
    %v4147 = vsel %vm1212, %v4069, 0.0
    %4148 = vadd.xlane.f32.xlu0 %v4147
    %v4149 = vpop.xlane.xlu0 %4148
    %v4150 = vsel %vm1212, %v4070, 0.0
    %4151 = vadd.xlane.f32.xlu0 %v4150
    %v4152 = vpop.xlane.xlu0 %4151
    %v4153 = vsel %vm1212, %v4071, 0.0
    %4154 = vadd.xlane.f32.xlu0 %v4153
    %v4155 = vpop.xlane.xlu0 %4154
    %v4156 = vsel %vm1212, %v4072, 0.0
    %4157 = vadd.xlane.f32.xlu0 %v4156
    %v4158 = vpop.xlane.xlu0 %4157
    %v4159 = vsel %vm1212, %v4073, 0.0
    %4160 = vadd.xlane.f32.xlu0 %v4159
    %v4161 = vpop.xlane.xlu0 %4160
    %v4162 = vsel %vm1212, %v4074, 0.0
    %4163 = vadd.xlane.f32.xlu0 %v4162
    %v4164 = vpop.xlane.xlu0 %4163
    %v4165 = vsel %vm1212, %v4075, 0.0
    %4166 = vadd.xlane.f32.xlu0 %v4165
    %v4167 = vpop.xlane.xlu0 %4166
    %v4168 = vsel %vm1212, %v4076, 0.0
    %4169 = vadd.xlane.f32.xlu0 %v4168
    %v4170 = vpop.xlane.xlu0 %4169
    %v4171 = vsel %vm1212, %v4077, 0.0
    %4172 = vadd.xlane.f32.xlu0 %v4171
    %v4173 = vpop.xlane.xlu0 %4172
    %v4206 = vlaneseq
    %v4207 = vshrl.u32 %v4206, 7
    %v4208 = vsub.s32 %v605, %v4207
    %v4209 = vrot.slane %v4080, %v4208
    %v4210 = vadd.s32 %v605, 4294967288
    %v4211 = vlaneseq
    %v4212 = vshrl.u32 %v4211, 7
    %v4213 = vsub.s32 %v4210, %v4212
    %v4214 = vrot.slane %v4083, %v4213
    %vm4215 = vcmask 130112
    %v4216 = vsel %vm4215, %v4214, %v4209
    %v4217 = vlaneseq
    %v4218 = vshrl.u32 %v4217, 7
    %v4219 = vsub.s32 %v605, %v4218
    %v4220 = vrot.slane %v4086, %v4219
    %v4221 = vlaneseq
    %v4222 = vshrl.u32 %v4221, 7
    %v4223 = vsub.s32 %v4210, %v4222
    %v4224 = vrot.slane %v4089, %v4223
    %v4225 = vsel %vm4215, %v4224, %v4220
    %v4226 = vlaneseq
    %v4227 = vshrl.u32 %v4226, 7
    %v4228 = vsub.s32 %v605, %v4227
    %v4229 = vrot.slane %v4092, %v4228
    %v4230 = vlaneseq
    %v4231 = vshrl.u32 %v4230, 7
    %v4232 = vsub.s32 %v4210, %v4231
    %v4233 = vrot.slane %v4095, %v4232
    %v4234 = vsel %vm4215, %v4233, %v4229
    %v4235 = vlaneseq
    %v4236 = vshrl.u32 %v4235, 7
    %v4237 = vsub.s32 %v605, %v4236
    %v4238 = vrot.slane %v4098, %v4237
    %v4239 = vlaneseq
    %v4240 = vshrl.u32 %v4239, 7
    %v4241 = vsub.s32 %v4210, %v4240
    %v4242 = vrot.slane %v4101, %v4241
    %v4243 = vsel %vm4215, %v4242, %v4238
    %v4244 = vlaneseq
    %v4245 = vshrl.u32 %v4244, 7
    %v4246 = vsub.s32 %v605, %v4245
    %v4247 = vrot.slane %v4104, %v4246
    %v4248 = vlaneseq
    %v4249 = vshrl.u32 %v4248, 7
    %v4250 = vsub.s32 %v4210, %v4249
    %v4251 = vrot.slane %v4107, %v4250
    %v4252 = vsel %vm4215, %v4251, %v4247
    %v4253 = vlaneseq
    %v4254 = vshrl.u32 %v4253, 7
    %v4255 = vsub.s32 %v605, %v4254
    %v4256 = vrot.slane %v4110, %v4255
    %v4257 = vlaneseq
    %v4258 = vshrl.u32 %v4257, 7
    %v4259 = vsub.s32 %v4210, %v4258
    %v4260 = vrot.slane %v4113, %v4259
    %v4261 = vsel %vm4215, %v4260, %v4256
    %v4262 = vlaneseq
    %v4263 = vshrl.u32 %v4262, 7
    %v4264 = vsub.s32 %v605, %v4263
    %v4265 = vrot.slane %v4116, %v4264
    %v4266 = vlaneseq
    %v4267 = vshrl.u32 %v4266, 7
    %v4268 = vsub.s32 %v4210, %v4267
    %v4269 = vrot.slane %v4119, %v4268
    %v4270 = vsel %vm4215, %v4269, %v4265
    %v4271 = vlaneseq
    %v4272 = vshrl.u32 %v4271, 7
    %v4273 = vsub.s32 %v605, %v4272
    %v4274 = vrot.slane %v4122, %v4273
    %v4275 = vlaneseq
    %v4276 = vshrl.u32 %v4275, 7
    %v4277 = vsub.s32 %v4210, %v4276
    %v4278 = vrot.slane %v4125, %v4277
    %v4279 = vsel %vm4215, %v4278, %v4274
    %v4280 = vlaneseq
    %v4281 = vshrl.u32 %v4280, 7
    %v4282 = vsub.s32 %v605, %v4281
    %v4283 = vrot.slane %v4128, %v4282
    %v4284 = vlaneseq
    %v4285 = vshrl.u32 %v4284, 7
    %v4286 = vsub.s32 %v4210, %v4285
    %v4287 = vrot.slane %v4131, %v4286
    %v4288 = vsel %vm4215, %v4287, %v4283
    %v4289 = vlaneseq
    %v4290 = vshrl.u32 %v4289, 7
    %v4291 = vsub.s32 %v605, %v4290
    %v4292 = vrot.slane %v4134, %v4291
    %v4293 = vlaneseq
    %v4294 = vshrl.u32 %v4293, 7
    %v4295 = vsub.s32 %v4210, %v4294
    %v4296 = vrot.slane %v4137, %v4295
    %v4297 = vsel %vm4215, %v4296, %v4292
    %v4298 = vlaneseq
    %v4299 = vshrl.u32 %v4298, 7
    %v4300 = vsub.s32 %v605, %v4299
    %v4301 = vrot.slane %v4140, %v4300
    %v4302 = vlaneseq
    %v4303 = vshrl.u32 %v4302, 7
    %v4304 = vsub.s32 %v4210, %v4303
    %v4305 = vrot.slane %v4143, %v4304
    %v4306 = vsel %vm4215, %v4305, %v4301
    %v4307 = vlaneseq
    %v4308 = vshrl.u32 %v4307, 7
    %v4309 = vsub.s32 %v605, %v4308
    %v4310 = vrot.slane %v4146, %v4309
    %v4311 = vlaneseq
    %v4312 = vshrl.u32 %v4311, 7
    %v4313 = vsub.s32 %v4210, %v4312
    %v4314 = vrot.slane %v4149, %v4313
    %v4315 = vsel %vm4215, %v4314, %v4310
    %v4316 = vlaneseq
    %v4317 = vshrl.u32 %v4316, 7
    %v4318 = vsub.s32 %v605, %v4317
    %v4319 = vrot.slane %v4152, %v4318
    %v4320 = vlaneseq
    %v4321 = vshrl.u32 %v4320, 7
    %v4322 = vsub.s32 %v4210, %v4321
    %v4323 = vrot.slane %v4155, %v4322
    %v4324 = vsel %vm4215, %v4323, %v4319
    %v4325 = vlaneseq
    %v4326 = vshrl.u32 %v4325, 7
    %v4327 = vsub.s32 %v605, %v4326
    %v4328 = vrot.slane %v4158, %v4327
    %v4329 = vlaneseq
    %v4330 = vshrl.u32 %v4329, 7
    %v4331 = vsub.s32 %v4210, %v4330
    %v4332 = vrot.slane %v4161, %v4331
    %v4333 = vsel %vm4215, %v4332, %v4328
    %v4334 = vlaneseq
    %v4335 = vshrl.u32 %v4334, 7
    %v4336 = vsub.s32 %v605, %v4335
    %v4337 = vrot.slane %v4164, %v4336
    %v4338 = vlaneseq
    %v4339 = vshrl.u32 %v4338, 7
    %v4340 = vsub.s32 %v4210, %v4339
    %v4341 = vrot.slane %v4167, %v4340
    %v4342 = vsel %vm4215, %v4341, %v4337
    %v4343 = vlaneseq
    %v4344 = vshrl.u32 %v4343, 7
    %v4345 = vsub.s32 %v605, %v4344
    %v4346 = vrot.slane %v4170, %v4345
    %v4347 = vlaneseq
    %v4348 = vshrl.u32 %v4347, 7
    %v4349 = vsub.s32 %v4210, %v4348
    %v4350 = vrot.slane %v4173, %v4349
    %v4351 = vsel %vm4215, %v4350, %v4346
    %vm4352 = vcmask 1041409
    %v4353 = vsel %vm4352, %v4225, %v4216
    %vm4354 = vcmask 1042434
    %v4355 = vsel %vm4354, %v4234, %v4353
    %vm4356 = vcmask 1043459
    %v4357 = vsel %vm4356, %v4243, %v4355
    %vm4358 = vcmask 1044484
    %v4359 = vsel %vm4358, %v4252, %v4357
    %vm4360 = vcmask 1045509
    %v4361 = vsel %vm4360, %v4261, %v4359
    %vm4362 = vcmask 1046534
    %v4363 = vsel %vm4362, %v4270, %v4361
    %vm4364 = vcmask 1047559
    %v4365 = vsel %vm4364, %v4279, %v4363
    %v4366 = vsel %vm4352, %v4297, %v4288
    %v4367 = vsel %vm4354, %v4306, %v4366
    %v4368 = vsel %vm4356, %v4315, %v4367
    %v4369 = vsel %vm4358, %v4324, %v4368
    %v4370 = vsel %vm4360, %v4333, %v4369
    %v4371 = vsel %vm4362, %v4342, %v4370
    %v4372 = vsel %vm4364, %v4351, %v4371
    %v4375 = vsel %vm1212, %v4365, 0.0
    %4376 = vadd.xlane.f32.xlu0 %v4375
    %v4377 = vpop.xlane.xlu0 %4376
    %v4378 = vsel %vm1212, %v4372, 0.0
    %4379 = vadd.xlane.f32.xlu0 %v4378
    %v4380 = vpop.xlane.xlu0 %4379
    %v4381 = vlaneseq
    %v4382 = vshrl.u32 %v4381, 7
    %v4383 = vsub.s32 0, %v4382
    %v4384 = vrot.slane %v4045, %v4383
    %v4385 = vmul.f32 %v4377, %v4384
    %v4386 = vmul.f32 %v4380, %v4384
    %4389 = vrot.lane.b32.xlu0 %v4011, 112
    %v4390 = vpop.permute.xlu0 %4389
    %4391 = vrot.lane.b32.xlu0 %v4012, 112
    %v4392 = vpop.permute.xlu0 %4391
    %v4395 = vmul.f32 %v4013, %v4390
    %v4396 = vmul.f32 %v4014, %v4392
    %v4397 = vmul.f32 %v4015, %v4390
    %v4398 = vmul.f32 %v4016, %v4392
    %v4399 = vmul.f32 %v4017, %v4390
    %v4400 = vmul.f32 %v4018, %v4392
    %v4401 = vmul.f32 %v4019, %v4390
    %v4402 = vmul.f32 %v4020, %v4392
    %v4403 = vmul.f32 %v4021, %v4390
    %v4404 = vmul.f32 %v4022, %v4392
    %v4405 = vmul.f32 %v4023, %v4390
    %v4406 = vmul.f32 %v4024, %v4392
    %v4407 = vmul.f32 %v4025, %v4390
    %v4408 = vmul.f32 %v4026, %v4392
    %v4409 = vmul.f32 %v4027, %v4390
    %v4410 = vmul.f32 %v4028, %v4392
    %v4411 = vmul.f32 %v4029, %v4390
    %v4412 = vmul.f32 %v4030, %v4392
    %v4413 = vmul.f32 %v4031, %v4390
    %v4414 = vmul.f32 %v4032, %v4392
    %v4415 = vmul.f32 %v4033, %v4390
    %v4416 = vmul.f32 %v4034, %v4392
    %v4417 = vmul.f32 %v4035, %v4390
    %v4418 = vmul.f32 %v4036, %v4392
    %v4419 = vmul.f32 %v4037, %v4390
    %v4420 = vmul.f32 %v4038, %v4392
    %v4421 = vmul.f32 %v4039, %v4390
    %v4422 = vmul.f32 %v4040, %v4392
    %v4423 = vmul.f32 %v4041, %v4390
    %v4424 = vmul.f32 %v4042, %v4392
    %v4425 = vmul.f32 %v4043, %v4390
    %v4426 = vmul.f32 %v4044, %v4392
    %v4427 = vsel %vm1212, %v4395, 0.0
    %4428 = vadd.xlane.f32.xlu0 %v4427
    %v4429 = vpop.xlane.xlu0 %4428
    %v4430 = vsel %vm1212, %v4396, 0.0
    %4431 = vadd.xlane.f32.xlu0 %v4430
    %v4432 = vpop.xlane.xlu0 %4431
    %v4433 = vsel %vm1212, %v4397, 0.0
    %4434 = vadd.xlane.f32.xlu0 %v4433
    %v4435 = vpop.xlane.xlu0 %4434
    %v4436 = vsel %vm1212, %v4398, 0.0
    %4437 = vadd.xlane.f32.xlu0 %v4436
    %v4438 = vpop.xlane.xlu0 %4437
    %v4439 = vsel %vm1212, %v4399, 0.0
    %4440 = vadd.xlane.f32.xlu0 %v4439
    %v4441 = vpop.xlane.xlu0 %4440
    %v4442 = vsel %vm1212, %v4400, 0.0
    %4443 = vadd.xlane.f32.xlu0 %v4442
    %v4444 = vpop.xlane.xlu0 %4443
    %v4445 = vsel %vm1212, %v4401, 0.0
    %4446 = vadd.xlane.f32.xlu0 %v4445
    %v4447 = vpop.xlane.xlu0 %4446
    %v4448 = vsel %vm1212, %v4402, 0.0
    %4449 = vadd.xlane.f32.xlu0 %v4448
    %v4450 = vpop.xlane.xlu0 %4449
    %v4451 = vsel %vm1212, %v4403, 0.0
    %4452 = vadd.xlane.f32.xlu0 %v4451
    %v4453 = vpop.xlane.xlu0 %4452
    %v4454 = vsel %vm1212, %v4404, 0.0
    %4455 = vadd.xlane.f32.xlu0 %v4454
    %v4456 = vpop.xlane.xlu0 %4455
    %v4457 = vsel %vm1212, %v4405, 0.0
    %4458 = vadd.xlane.f32.xlu0 %v4457
    %v4459 = vpop.xlane.xlu0 %4458
    %v4460 = vsel %vm1212, %v4406, 0.0
    %4461 = vadd.xlane.f32.xlu0 %v4460
    %v4462 = vpop.xlane.xlu0 %4461
    %v4463 = vsel %vm1212, %v4407, 0.0
    %4464 = vadd.xlane.f32.xlu0 %v4463
    %v4465 = vpop.xlane.xlu0 %4464
    %v4466 = vsel %vm1212, %v4408, 0.0
    %4467 = vadd.xlane.f32.xlu0 %v4466
    %v4468 = vpop.xlane.xlu0 %4467
    %v4469 = vsel %vm1212, %v4409, 0.0
    %4470 = vadd.xlane.f32.xlu0 %v4469
    %v4471 = vpop.xlane.xlu0 %4470
    %v4472 = vsel %vm1212, %v4410, 0.0
    %4473 = vadd.xlane.f32.xlu0 %v4472
    %v4474 = vpop.xlane.xlu0 %4473
    %v4475 = vsel %vm1212, %v4411, 0.0
    %4476 = vadd.xlane.f32.xlu0 %v4475
    %v4477 = vpop.xlane.xlu0 %4476
    %v4478 = vsel %vm1212, %v4412, 0.0
    %4479 = vadd.xlane.f32.xlu0 %v4478
    %v4480 = vpop.xlane.xlu0 %4479
    %v4481 = vsel %vm1212, %v4413, 0.0
    %4482 = vadd.xlane.f32.xlu0 %v4481
    %v4483 = vpop.xlane.xlu0 %4482
    %v4484 = vsel %vm1212, %v4414, 0.0
    %4485 = vadd.xlane.f32.xlu0 %v4484
    %v4486 = vpop.xlane.xlu0 %4485
    %v4487 = vsel %vm1212, %v4415, 0.0
    %4488 = vadd.xlane.f32.xlu0 %v4487
    %v4489 = vpop.xlane.xlu0 %4488
    %v4490 = vsel %vm1212, %v4416, 0.0
    %4491 = vadd.xlane.f32.xlu0 %v4490
    %v4492 = vpop.xlane.xlu0 %4491
    %v4493 = vsel %vm1212, %v4417, 0.0
    %4494 = vadd.xlane.f32.xlu0 %v4493
    %v4495 = vpop.xlane.xlu0 %4494
    %v4496 = vsel %vm1212, %v4418, 0.0
    %4497 = vadd.xlane.f32.xlu0 %v4496
    %v4498 = vpop.xlane.xlu0 %4497
    %v4499 = vsel %vm1212, %v4419, 0.0
    %4500 = vadd.xlane.f32.xlu0 %v4499
    %v4501 = vpop.xlane.xlu0 %4500
    %v4502 = vsel %vm1212, %v4420, 0.0
    %4503 = vadd.xlane.f32.xlu0 %v4502
    %v4504 = vpop.xlane.xlu0 %4503
    %v4505 = vsel %vm1212, %v4421, 0.0
    %4506 = vadd.xlane.f32.xlu0 %v4505
    %v4507 = vpop.xlane.xlu0 %4506
    %v4508 = vsel %vm1212, %v4422, 0.0
    %4509 = vadd.xlane.f32.xlu0 %v4508
    %v4510 = vpop.xlane.xlu0 %4509
    %v4511 = vsel %vm1212, %v4423, 0.0
    %4512 = vadd.xlane.f32.xlu0 %v4511
    %v4513 = vpop.xlane.xlu0 %4512
    %v4514 = vsel %vm1212, %v4424, 0.0
    %4515 = vadd.xlane.f32.xlu0 %v4514
    %v4516 = vpop.xlane.xlu0 %4515
    %v4517 = vsel %vm1212, %v4425, 0.0
    %4518 = vadd.xlane.f32.xlu0 %v4517
    %v4519 = vpop.xlane.xlu0 %4518
    %v4520 = vsel %vm1212, %v4426, 0.0
    %4521 = vadd.xlane.f32.xlu0 %v4520
    %v4522 = vpop.xlane.xlu0 %4521
    %v4555 = vlaneseq
    %v4556 = vshrl.u32 %v4555, 7
    %v4557 = vsub.s32 %v605, %v4556
    %v4558 = vrot.slane %v4429, %v4557
    %v4559 = vlaneseq
    %v4560 = vshrl.u32 %v4559, 7
    %v4561 = vsub.s32 %v4210, %v4560
    %v4562 = vrot.slane %v4432, %v4561
    %v4563 = vsel %vm4215, %v4562, %v4558
    %v4564 = vlaneseq
    %v4565 = vshrl.u32 %v4564, 7
    %v4566 = vsub.s32 %v605, %v4565
    %v4567 = vrot.slane %v4435, %v4566
    %v4568 = vlaneseq
    %v4569 = vshrl.u32 %v4568, 7
    %v4570 = vsub.s32 %v4210, %v4569
    %v4571 = vrot.slane %v4438, %v4570
    %v4572 = vsel %vm4215, %v4571, %v4567
    %v4573 = vlaneseq
    %v4574 = vshrl.u32 %v4573, 7
    %v4575 = vsub.s32 %v605, %v4574
    %v4576 = vrot.slane %v4441, %v4575
    %v4577 = vlaneseq
    %v4578 = vshrl.u32 %v4577, 7
    %v4579 = vsub.s32 %v4210, %v4578
    %v4580 = vrot.slane %v4444, %v4579
    %v4581 = vsel %vm4215, %v4580, %v4576
    %v4582 = vlaneseq
    %v4583 = vshrl.u32 %v4582, 7
    %v4584 = vsub.s32 %v605, %v4583
    %v4585 = vrot.slane %v4447, %v4584
    %v4586 = vlaneseq
    %v4587 = vshrl.u32 %v4586, 7
    %v4588 = vsub.s32 %v4210, %v4587
    %v4589 = vrot.slane %v4450, %v4588
    %v4590 = vsel %vm4215, %v4589, %v4585
    %v4591 = vlaneseq
    %v4592 = vshrl.u32 %v4591, 7
    %v4593 = vsub.s32 %v605, %v4592
    %v4594 = vrot.slane %v4453, %v4593
    %v4595 = vlaneseq
    %v4596 = vshrl.u32 %v4595, 7
    %v4597 = vsub.s32 %v4210, %v4596
    %v4598 = vrot.slane %v4456, %v4597
    %v4599 = vsel %vm4215, %v4598, %v4594
    %v4600 = vlaneseq
    %v4601 = vshrl.u32 %v4600, 7
    %v4602 = vsub.s32 %v605, %v4601
    %v4603 = vrot.slane %v4459, %v4602
    %v4604 = vlaneseq
    %v4605 = vshrl.u32 %v4604, 7
    %v4606 = vsub.s32 %v4210, %v4605
    %v4607 = vrot.slane %v4462, %v4606
    %v4608 = vsel %vm4215, %v4607, %v4603
    %v4609 = vlaneseq
    %v4610 = vshrl.u32 %v4609, 7
    %v4611 = vsub.s32 %v605, %v4610
    %v4612 = vrot.slane %v4465, %v4611
    %v4613 = vlaneseq
    %v4614 = vshrl.u32 %v4613, 7
    %v4615 = vsub.s32 %v4210, %v4614
    %v4616 = vrot.slane %v4468, %v4615
    %v4617 = vsel %vm4215, %v4616, %v4612
    %v4618 = vlaneseq
    %v4619 = vshrl.u32 %v4618, 7
    %v4620 = vsub.s32 %v605, %v4619
    %v4621 = vrot.slane %v4471, %v4620
    %v4622 = vlaneseq
    %v4623 = vshrl.u32 %v4622, 7
    %v4624 = vsub.s32 %v4210, %v4623
    %v4625 = vrot.slane %v4474, %v4624
    %v4626 = vsel %vm4215, %v4625, %v4621
    %v4627 = vlaneseq
    %v4628 = vshrl.u32 %v4627, 7
    %v4629 = vsub.s32 %v605, %v4628
    %v4630 = vrot.slane %v4477, %v4629
    %v4631 = vlaneseq
    %v4632 = vshrl.u32 %v4631, 7
    %v4633 = vsub.s32 %v4210, %v4632
    %v4634 = vrot.slane %v4480, %v4633
    %v4635 = vsel %vm4215, %v4634, %v4630
    %v4636 = vlaneseq
    %v4637 = vshrl.u32 %v4636, 7
    %v4638 = vsub.s32 %v605, %v4637
    %v4639 = vrot.slane %v4483, %v4638
    %v4640 = vlaneseq
    %v4641 = vshrl.u32 %v4640, 7
    %v4642 = vsub.s32 %v4210, %v4641
    %v4643 = vrot.slane %v4486, %v4642
    %v4644 = vsel %vm4215, %v4643, %v4639
    %v4645 = vlaneseq
    %v4646 = vshrl.u32 %v4645, 7
    %v4647 = vsub.s32 %v605, %v4646
    %v4648 = vrot.slane %v4489, %v4647
    %v4649 = vlaneseq
    %v4650 = vshrl.u32 %v4649, 7
    %v4651 = vsub.s32 %v4210, %v4650
    %v4652 = vrot.slane %v4492, %v4651
    %v4653 = vsel %vm4215, %v4652, %v4648
    %v4654 = vlaneseq
    %v4655 = vshrl.u32 %v4654, 7
    %v4656 = vsub.s32 %v605, %v4655
    %v4657 = vrot.slane %v4495, %v4656
    %v4658 = vlaneseq
    %v4659 = vshrl.u32 %v4658, 7
    %v4660 = vsub.s32 %v4210, %v4659
    %v4661 = vrot.slane %v4498, %v4660
    %v4662 = vsel %vm4215, %v4661, %v4657
    %v4663 = vlaneseq
    %v4664 = vshrl.u32 %v4663, 7
    %v4665 = vsub.s32 %v605, %v4664
    %v4666 = vrot.slane %v4501, %v4665
    %v4667 = vlaneseq
    %v4668 = vshrl.u32 %v4667, 7
    %v4669 = vsub.s32 %v4210, %v4668
    %v4670 = vrot.slane %v4504, %v4669
    %v4671 = vsel %vm4215, %v4670, %v4666
    %v4672 = vlaneseq
    %v4673 = vshrl.u32 %v4672, 7
    %v4674 = vsub.s32 %v605, %v4673
    %v4675 = vrot.slane %v4507, %v4674
    %v4676 = vlaneseq
    %v4677 = vshrl.u32 %v4676, 7
    %v4678 = vsub.s32 %v4210, %v4677
    %v4679 = vrot.slane %v4510, %v4678
    %v4680 = vsel %vm4215, %v4679, %v4675
    %v4681 = vlaneseq
    %v4682 = vshrl.u32 %v4681, 7
    %v4683 = vsub.s32 %v605, %v4682
    %v4684 = vrot.slane %v4513, %v4683
    %v4685 = vlaneseq
    %v4686 = vshrl.u32 %v4685, 7
    %v4687 = vsub.s32 %v4210, %v4686
    %v4688 = vrot.slane %v4516, %v4687
    %v4689 = vsel %vm4215, %v4688, %v4684
    %v4690 = vlaneseq
    %v4691 = vshrl.u32 %v4690, 7
    %v4692 = vsub.s32 %v605, %v4691
    %v4693 = vrot.slane %v4519, %v4692
    %v4694 = vlaneseq
    %v4695 = vshrl.u32 %v4694, 7
    %v4696 = vsub.s32 %v4210, %v4695
    %v4697 = vrot.slane %v4522, %v4696
    %v4698 = vsel %vm4215, %v4697, %v4693
    %v4699 = vsel %vm4352, %v4572, %v4563
    %v4700 = vsel %vm4354, %v4581, %v4699
    %v4701 = vsel %vm4356, %v4590, %v4700
    %v4702 = vsel %vm4358, %v4599, %v4701
    %v4703 = vsel %vm4360, %v4608, %v4702
    %v4704 = vsel %vm4362, %v4617, %v4703
    %v4705 = vsel %vm4364, %v4626, %v4704
    %v4706 = vsel %vm4352, %v4644, %v4635
    %v4707 = vsel %vm4354, %v4653, %v4706
    %v4708 = vsel %vm4356, %v4662, %v4707
    %v4709 = vsel %vm4358, %v4671, %v4708
    %v4710 = vsel %vm4360, %v4680, %v4709
    %v4711 = vsel %vm4362, %v4689, %v4710
    %v4712 = vsel %vm4364, %v4698, %v4711
    %v4715 = vsel %vm1212, %v4705, 0.0
    %4716 = vadd.xlane.f32.xlu0 %v4715
    %v4717 = vpop.xlane.xlu0 %4716
    %v4718 = vsel %vm1212, %v4712, 0.0
    %4719 = vadd.xlane.f32.xlu0 %v4718
    %v4720 = vpop.xlane.xlu0 %4719
    %v4721 = vlaneseq
    %v4722 = vshrl.u32 %v4721, 7
    %v4723 = vsub.s32 1, %v4722
    %v4724 = vrot.slane %v4045, %v4723
    %v4725 = vmul.f32 %v4717, %v4724
    %v4726 = vmul.f32 %v4720, %v4724
    %v4727 = vadd.f32 %v4385, %v4725
    %v4728 = vadd.f32 %v4386, %v4726
    %v4729 = vld [vmem:[%s24] sm:$0xff]
    %v4730 = vld [vmem:[%s24 + $0x8] sm:$0xff]
    %4732 = vset.pattern.permute.xlu0 0
    %4733 = vperm.xlu0 %4732, %v4729
    %v4734 = vpop.permute.xlu0 %4733
    %4737 = vset.pattern.permute.xlu0 0
    %4738 = vperm.xlu0 %4737, %v4730
    %v4739 = vpop.permute.xlu0 %4738
    %v4741 = vadd.f32 %v4727, %v4734
    %v4742 = vadd.f32 %v4728, %v4739
    %vm4743 = vcmp.ge.f32.partialorder %v4741, 0.0
    %vm4744 = vcmp.ge.f32.partialorder %v4742, 0.0
    %v4745 = vmul.f32 %v4741, 0.2
    %v4746 = vmul.f32 %v4742, 0.2
    %v4747 = vsel %vm4743, %v4741, %v4745
    %v4748 = vsel %vm4744, %v4742, %v4746
    %v4749 = vld [vmem:[%s25] sm:$0x1]
    %v4750 = vld [vmem:[#allocation3] sm:$0x1]
    %4752 = vset.pattern.permute.xlu0 0
    %4753 = vperm.xlu0 %4752, %v4750
    %v4754 = vpop.permute.xlu0 %4753
    %v4756 = vlaneseq
    %v4757 = vshrl.u32 %v4756, 7
    %v4758 = vsub.s32 0, %v4757
    %v4759 = vrot.slane %v4754, %v4758
    %v4761 = vsel %vm1212, %v4749, 0
    %4763 = vmatprep.subr.mxu0 0.0
    %4764 = vmatpush1.msra.mxu0 0.0
    %4765 = vmatprep.subr.mxu0 0.0
    %4766 = vmatpush1.msra.mxu0 0.0
    %4767 = vmatprep.subr.mxu0 0.0
    %4768 = vmatpush1.msra.mxu0 0.0
    %4769 = vmatprep.subr.mxu0 0.0
    %4770 = vmatpush1.msra.mxu0 0.0
    %4771 = vmatprep.subr.mxu0 0.0
    %4772 = vmatpush1.msra.mxu0 0.0
    %4773 = vmatprep.subr.mxu0 0.0
    %4774 = vmatpush1.msra.mxu0 0.0
    %4775 = vmatprep.subr.mxu0 0.0
    %4776 = vmatpush1.msra.mxu0 0.0
    %4777 = vmatprep.subr.mxu0 0.0
    %4778 = vmatpush1.msra.mxu0 0.0
    %4779 = vmatprep.subr.mxu0 0.0
    %4780 = vmatpush1.msra.mxu0 0.0
    %4781 = vmatprep.subr.mxu0 0.0
    %4782 = vmatpush1.msra.mxu0 0.0
    %4783 = vmatprep.subr.mxu0 0.0
    %4784 = vmatpush1.msra.mxu0 0.0
    %4785 = vmatprep.subr.mxu0 0.0
    %4786 = vmatpush1.msra.mxu0 0.0
    %4787 = vmatprep.subr.mxu0 0.0
    %4788 = vmatpush1.msra.mxu0 0.0
    %4789 = vmatprep.subr.mxu0 0.0
    %4790 = vmatpush1.msra.mxu0 0.0
    %4791 = vmatprep.subr.mxu0 0.0
    %4792 = vmatpush1.msra.mxu0 %v4748
    %4793 = vmatprep.subr.mxu0 0.0
    %4794 = vmatpush1.msra.mxu0 %v4747
    %4795 = vmatprep.subr.mxu0 0.0
    %4796 = vmatpush2.msra.mxu0 0.0
    %4797 = vmatprep.subr.mxu0 0.0
    %4798 = vmatpush2.msra.mxu0 0.0
    %4799 = vmatprep.subr.mxu0 0.0
    %4800 = vmatpush2.msra.mxu0 0.0
    %4801 = vmatprep.subr.mxu0 0.0
    %4802 = vmatpush2.msra.mxu0 0.0
    %4803 = vmatprep.subr.mxu0 0.0
    %4804 = vmatpush2.msra.mxu0 0.0
    %4805 = vmatprep.subr.mxu0 0.0
    %4806 = vmatpush2.msra.mxu0 0.0
    %4807 = vmatprep.subr.mxu0 0.0
    %4808 = vmatpush2.msra.mxu0 0.0
    %4809 = vmatprep.subr.mxu0 0.0
    %4810 = vmatpush2.msra.mxu0 0.0
    %4811 = vmatprep.subr.mxu0 0.0
    %4812 = vmatpush2.msra.mxu0 0.0
    %4813 = vmatprep.subr.mxu0 0.0
    %4814 = vmatpush2.msra.mxu0 0.0
    %4815 = vmatprep.subr.mxu0 0.0
    %4816 = vmatpush2.msra.mxu0 0.0
    %4817 = vmatprep.subr.mxu0 0.0
    %4818 = vmatpush2.msra.mxu0 0.0
    %4819 = vmatprep.subr.mxu0 0.0
    %4820 = vmatpush2.msra.mxu0 0.0
    %4821 = vmatprep.subr.mxu0 0.0
    %4822 = vmatpush2.msra.mxu0 0.0
    %4823 = vmatprep.subr.mxu0 0.0
    %4824 = vmatpush2.msra.mxu0 0.0
    %4825 = vmatprep.subr.mxu0 0.0
    %4826 = vmatpush2.msra.mxu0 0.0
    %4827 = vmatprep.mubr.f32.mxu0 0.0
    %4828 = vmatmul.mubr.f32.gmra.mxu0 %v4761
    %v4829 = vpop.f32.mrf.mxu0
    %v4830 = vadd.f32 %v4759, %v4829
    %v4831 = vpop.f32.mrf.mxu0
    %4832 = vdwg.mxu0
    %vm4833 = vcmask 8192
    %4834 = vst.msk [vmem:[#allocation4] sm:$0x1] %vm4833, %v4830
    // Predicated region
    $region114: #{discriminator_forward.1} parent=1 // pred_check
      _
    $region115: #{discriminator_forward.1} parent=1 // pred_check_branch
      %4836 = sbr.rel (0) target = $region117
    $region116: #{discriminator_forward.1} parent=1 // pred_region
      %s4838 = ssub.s32 16, 16
      %4839 = vsyncadd [#allocation5], %s4838
      %s4841 = sshll.u32 [#allocation4], 4
      %s4842 = int_to_ptr.vmem [resolvable:$true] %s4841
      %4844 = dma.vmem_to_hbm [thread:$0]  %s4842, 16, %s28, [#allocation5]
    $region117: #{discriminator_forward.1} parent=1 // pred_fallthru
      _
    // Predicated region
    $region118: #{discriminator_forward.1} parent=1 // pred_check
      _
    $region119: #{discriminator_forward.1} parent=1 // pred_check_branch
      %4846 = sbr.rel (0) target = $region121
    $region120: #{discriminator_forward.1} parent=1 // pred_region
      %4847 = dma.done [#allocation5], 16
    $region121: #{discriminator_forward.1} parent=1 // pred_fallthru
      _
    %4848 = vsyncpa [#allocation5], 1

</llo_original>
